<compile_context>
chip_gen: v7x
topology: tpu7x:2x2x1
jax: 0.10.0
libtpu: 0.0.40
codegen_flags: <defaults>
</compile_context>

<pallas_src>
import functools

import jax
import jax.numpy as jnp
from jax.experimental import pallas as pl
from jax.experimental.pallas import tpu as pltpu


def _round_up(n, m):
    return ((n + m - 1) // m) * m


def _mlp_kernel(x_ref, w1_ref, s1_ref, b1_ref, w2_ref, s2_ref, b2_ref, o_ref):
    # fc1: int8 weights enter the MXU as bf16 (integers <= 127 are exact in
    # bf16); per-output-column scale is applied to the (B, H) result, which is
    # much cheaper than dequantizing the (D_in, H) weight tile.
    w1 = w1_ref[...].astype(jnp.bfloat16)
    h = jnp.dot(x_ref[...], w1, preferred_element_type=jnp.float32)
    h = jnp.maximum(h * s1_ref[...] + b1_ref[...], 0.0)
    # fc2: same trick; bias/scale added in f32, store lane-dense f32 output.
    w2 = w2_ref[...].astype(jnp.bfloat16)
    y = jnp.dot(h.astype(jnp.bfloat16), w2, preferred_element_type=jnp.float32)
    o_ref[...] = (y * s2_ref[...] + b2_ref[...]).astype(o_ref.dtype)


def _quantize_cols(w):
    """Symmetric per-output-column int8 quantization. w: (in, out) float32."""
    amax = jnp.max(jnp.abs(w), axis=0, keepdims=True)                 # (1, out)
    scale = jnp.where(amax > 0, amax / 127.0, jnp.float32(1.0))       # (1, out)
    q = jnp.clip(jnp.round(w / scale), -127.0, 127.0).astype(jnp.int8)
    return q, scale.astype(jnp.float32)


def pack_params(w1_t, b1, w2_t, b2):
    """Quantize weights to int8 (per-col scales), pad lane dims to 128 multiples.

    w1_t: (D_in, H)   already transposed from PyTorch's (H, D_in)
    w2_t: (H, D_out)  already transposed from PyTorch's (D_out, H)
    """
    d_in, h = w1_t.shape
    d_out = w2_t.shape[1]
    d_in_p = _round_up(d_in, 128)
    h_p = _round_up(h, 128)
    d_out_p = _round_up(d_out, 128)

    q1, s1 = _quantize_cols(w1_t.astype(jnp.float32))
    q2, s2 = _quantize_cols(w2_t.astype(jnp.float32))

    w1_p = jnp.zeros((d_in_p, h_p), jnp.int8).at[:d_in, :h].set(q1)
    s1_p = jnp.ones((1, h_p), jnp.float32).at[:, :h].set(s1)
    b1_p = jnp.zeros((1, h_p), jnp.float32).at[0, :h].set(b1.astype(jnp.float32))
    w2_p = jnp.zeros((h_p, d_out_p), jnp.int8).at[:h, :d_out].set(q2)
    s2_p = jnp.ones((1, d_out_p), jnp.float32).at[:, :d_out].set(s2)
    b2_p = jnp.zeros((1, d_out_p), jnp.float32).at[0, :d_out].set(b2.astype(jnp.float32))

    return {"w1": w1_p, "s1": s1_p, "b1": b1_p,
            "w2": w2_p, "s2": s2_p, "b2": b2_p,
            "input_dim": d_in, "output_dim": d_out}


@functools.partial(jax.jit, static_argnames=("d_in", "d_out"))
def _forward_impl(x, w1, s1, b1, w2, s2, b2, *, d_in, d_out):
    B = x.shape[0]
    D_in_p, H_p = w1.shape
    D_out_p = w2.shape[1]

    # bf16 packs 16 rows per sublane group -> pad batch to 16 so the MXU lhs
    # tile is full and unmasked. Extra rows are discarded by the final slice.
    B_p = _round_up(max(B, 16), 16)
    x_p = jnp.zeros((B_p, D_in_p), jnp.bfloat16)
    x_p = x_p.at[:B, :d_in].set(x.astype(jnp.bfloat16))

    out_p = pl.pallas_call(
        _mlp_kernel,
        out_shape=jax.ShapeDtypeStruct((B_p, D_out_p), jnp.float32),
        grid=(1,),
        in_specs=[
            pl.BlockSpec((B_p, D_in_p), lambda i: (0, 0)),
            pl.BlockSpec((D_in_p, H_p), lambda i: (0, 0)),
            pl.BlockSpec((1, H_p), lambda i: (0, 0)),
            pl.BlockSpec((1, H_p), lambda i: (0, 0)),
            pl.BlockSpec((H_p, D_out_p), lambda i: (0, 0)),
            pl.BlockSpec((1, D_out_p), lambda i: (0, 0)),
            pl.BlockSpec((1, D_out_p), lambda i: (0, 0)),
        ],
        out_specs=pl.BlockSpec((B_p, D_out_p), lambda i: (0, 0)),
        compiler_params=pltpu.CompilerParams(
            dimension_semantics=("arbitrary",),
            vmem_limit_bytes=32 << 20,   # footprint ~3 MiB; safe on v5e/v6e/v7x
        ),
    )(x_p, w1, s1, b1, w2, s2, b2)

    # Padded rows compute garbage (ReLU(b1) @ w2 * s2 + b2); sliced off here
    # (inside the same jit, so no extra dispatch).
    return out_p[:B, :d_out]


def simple_denoising_forward(x, params):
    """x: (B, input_dim) float32 -> (B, output_dim) float32."""
    return _forward_impl(
        x, params["w1"], params["s1"], params["b1"],
        params["w2"], params["s2"], params["b2"],
        d_in=params["input_dim"], d_out=params["output_dim"])


def init_params(key, input_dim=2000, hidden_dim=512, output_dim=2000):
    """nn.Linear-style U(-1/sqrt(fan_in), 1/sqrt(fan_in)) init.

    Returns (kernel_params, f32_reference_params).
    """
    k1, k2, k3, k4 = jax.random.split(key, 4)
    bound1 = 1.0 / jnp.sqrt(jnp.float32(input_dim))
    bound2 = 1.0 / jnp.sqrt(jnp.float32(hidden_dim))
    # Stored already transposed to (in, out) so the kernel computes x @ W.
    w1_t = jax.random.uniform(k1, (input_dim, hidden_dim), jnp.float32,
                              minval=-bound1, maxval=bound1)
    b1 = jax.random.uniform(k2, (hidden_dim,), jnp.float32,
                            minval=-bound1, maxval=bound1)
    w2_t = jax.random.uniform(k3, (hidden_dim, output_dim), jnp.float32,
                              minval=-bound2, maxval=bound2)
    b2 = jax.random.uniform(k4, (output_dim,), jnp.float32,
                            minval=-bound2, maxval=bound2)
    return pack_params(w1_t, b1, w2_t, b2), (w1_t, b1, w2_t, b2)


if __name__ == "__main__":
    # Module-consistent shapes: input_dim = output_dim = 2000 (defaults),
    # hidden = 512, small batch = 4.
    INPUT_DIM, HIDDEN_DIM, OUTPUT_DIM, BATCH = 2000, 512, 2000, 4

    key = jax.random.PRNGKey(0)
    kx, kp = jax.random.split(key)
    x = jax.random.normal(kx, (BATCH, INPUT_DIM), dtype=jnp.float32)
    params, (w1_t, b1, w2_t, b2) = init_params(kp, INPUT_DIM, HIDDEN_DIM, OUTPUT_DIM)

    out = simple_denoising_forward(x, params)
    out = jax.block_until_ready(out)
    assert out.shape == (BATCH, OUTPUT_DIM)

    # Reference matching the kernel's quantized-weight / bf16-activation /
    # f32-accumulate numerics (only accumulation order differs).
    f32 = jnp.float32
    HI = jax.lax.Precision.HIGHEST
    xb = x.astype(jnp.bfloat16).astype(f32)
    q1f = params["w1"][:INPUT_DIM, :HIDDEN_DIM].astype(f32)
    q2f = params["w2"][:HIDDEN_DIM, :OUTPUT_DIM].astype(f32)
    s1 = params["s1"][:, :HIDDEN_DIM]
    s2 = params["s2"][:, :OUTPUT_DIM]
    h_ref = jnp.maximum(jnp.dot(xb, q1f, precision=HI) * s1 + b1, 0.0)
    h_ref = h_ref.astype(jnp.bfloat16).astype(f32)
    ref_q = jnp.dot(h_ref, q2f, precision=HI) * s2 + b2
    assert jnp.allclose(out, ref_q, atol=5e-3, rtol=5e-3)

    # Loose sanity check against the exact f32 PyTorch-equivalent forward
    # (looser because weights are int8-quantized and activations are bf16).
    ref_f32 = jnp.dot(jnp.maximum(jnp.dot(x, w1_t, precision=HI) + b1, 0.0),
                      w2_t, precision=HI) + b2
    assert jnp.max(jnp.abs(out - ref_f32)) < 5e-2

    print("KERNEL_OK")
</pallas_src>

<mosaic_0001>
module attributes {stable_mosaic.version = 11 : i64} {
  func.func @_mlp_kernel(%arg0: i32, %arg1: memref<16x2048xbf16, #tpu.memory_space<vmem>>, %arg2: memref<2048x512xi8, #tpu.memory_space<vmem>>, %arg3: memref<1x512xf32, #tpu.memory_space<vmem>>, %arg4: memref<1x512xf32, #tpu.memory_space<vmem>>, %arg5: memref<512x2048xi8, #tpu.memory_space<vmem>>, %arg6: memref<1x2048xf32, #tpu.memory_space<vmem>>, %arg7: memref<1x2048xf32, #tpu.memory_space<vmem>>, %arg8: memref<16x2048xf32, #tpu.memory_space<vmem>>) attributes {dimension_semantics = [#tpu.dimension_semantics<arbitrary>], iteration_bounds = array<i64: 1>, scalar_prefetch = 0 : i64, scratch_operands = 0 : i64, tpu.core_type = #tpu.core_type<tc>, window_params = [{pipeline_mode = #tpu.pipeline_mode<synchronous>, transform_indices = @transform_0, window_bounds = array<i64: 16, 2048>}, {pipeline_mode = #tpu.pipeline_mode<synchronous>, transform_indices = @transform_1, window_bounds = array<i64: 2048, 512>}, {pipeline_mode = #tpu.pipeline_mode<synchronous>, transform_indices = @transform_2, window_bounds = array<i64: 1, 512>}, {pipeline_mode = #tpu.pipeline_mode<synchronous>, transform_indices = @transform_3, window_bounds = array<i64: 1, 512>}, {pipeline_mode = #tpu.pipeline_mode<synchronous>, transform_indices = @transform_4, window_bounds = array<i64: 512, 2048>}, {pipeline_mode = #tpu.pipeline_mode<synchronous>, transform_indices = @transform_5, window_bounds = array<i64: 1, 2048>}, {pipeline_mode = #tpu.pipeline_mode<synchronous>, transform_indices = @transform_6, window_bounds = array<i64: 1, 2048>}, {pipeline_mode = #tpu.pipeline_mode<synchronous>, transform_indices = @transform_7, window_bounds = array<i64: 16, 2048>}]} {
    %c0 = arith.constant 0 : index
    %c0_0 = arith.constant 0 : index
    %0 = vector.load %arg2[%c0, %c0_0] : memref<2048x512xi8, #tpu.memory_space<vmem>>, vector<2048x512xi8>
    %1 = arith.sitofp %0 : vector<2048x512xi8> to vector<2048x512xbf16>
    %c0_1 = arith.constant 0 : index
    %c0_2 = arith.constant 0 : index
    %2 = vector.load %arg1[%c0_1, %c0_2] : memref<16x2048xbf16, #tpu.memory_space<vmem>>, vector<16x2048xbf16>
    %cst = arith.constant dense<0.000000e+00> : vector<16x512xf32>
    %3 = tpu.matmul %2, %1, %cst {dimension_numbers = #tpu.dot_dimension_numbers<[1], [0], [0], [1], [0, 0, 1, 1], [], []>} : vector<16x2048xbf16>, vector<2048x512xbf16>, vector<16x512xf32> -> vector<16x512xf32>
    %c0_3 = arith.constant 0 : index
    %c0_4 = arith.constant 0 : index
    %4 = vector.load %arg3[%c0_3, %c0_4] : memref<1x512xf32, #tpu.memory_space<vmem>>, vector<1x512xf32>
    %5 = vector.broadcast %4 : vector<1x512xf32> to vector<16x512xf32>
    %6 = arith.mulf %3, %5 : vector<16x512xf32>
    %c0_5 = arith.constant 0 : index
    %c0_6 = arith.constant 0 : index
    %7 = vector.load %arg4[%c0_5, %c0_6] : memref<1x512xf32, #tpu.memory_space<vmem>>, vector<1x512xf32>
    %8 = vector.broadcast %7 : vector<1x512xf32> to vector<16x512xf32>
    %9 = arith.addf %6, %8 : vector<16x512xf32>
    %cst_7 = arith.constant 0.000000e+00 : f32
    %10 = vector.broadcast %cst_7 : f32 to vector<16x512xf32>
    %11 = arith.maximumf %9, %10 : vector<16x512xf32>
    %c0_8 = arith.constant 0 : index
    %c0_9 = arith.constant 0 : index
    %12 = vector.load %arg5[%c0_8, %c0_9] : memref<512x2048xi8, #tpu.memory_space<vmem>>, vector<512x2048xi8>
    %13 = arith.sitofp %12 : vector<512x2048xi8> to vector<512x2048xbf16>
    %14 = arith.truncf %11 : vector<16x512xf32> to vector<16x512xbf16>
    %cst_10 = arith.constant dense<0.000000e+00> : vector<16x2048xf32>
    %15 = tpu.matmul %14, %13, %cst_10 {dimension_numbers = #tpu.dot_dimension_numbers<[1], [0], [0], [1], [0, 0, 1, 1], [], []>} : vector<16x512xbf16>, vector<512x2048xbf16>, vector<16x2048xf32> -> vector<16x2048xf32>
    %c0_11 = arith.constant 0 : index
    %c0_12 = arith.constant 0 : index
    %16 = vector.load %arg6[%c0_11, %c0_12] : memref<1x2048xf32, #tpu.memory_space<vmem>>, vector<1x2048xf32>
    %17 = vector.broadcast %16 : vector<1x2048xf32> to vector<16x2048xf32>
    %18 = arith.mulf %15, %17 : vector<16x2048xf32>
    %c0_13 = arith.constant 0 : index
    %c0_14 = arith.constant 0 : index
    %19 = vector.load %arg7[%c0_13, %c0_14] : memref<1x2048xf32, #tpu.memory_space<vmem>>, vector<1x2048xf32>
    %20 = vector.broadcast %19 : vector<1x2048xf32> to vector<16x2048xf32>
    %21 = arith.addf %18, %20 : vector<16x2048xf32>
    %c0_15 = arith.constant 0 : index
    %c0_16 = arith.constant 0 : index
    %22 = vector.load %arg8[%c0_15, %c0_16] : memref<16x2048xf32, #tpu.memory_space<vmem>>, vector<16x2048xf32>
    tpu.vector_store %arg8[%c0_15, %c0_16], %21 {strides = array<i32>} : memref<16x2048xf32, #tpu.memory_space<vmem>>, vector<16x2048xf32>,
    return
  }
  func.func @transform_0(%arg0: i32) -> (i32, i32) {
    %c0_i32 = arith.constant 0 : i32
    %c0_i32_0 = arith.constant 0 : i32
    %c0_i32_1 = arith.constant 0 : i32
    return %c0_i32, %c0_i32_0 : i32, i32
  }
  func.func @transform_1(%arg0: i32) -> (i32, i32) {
    %c0_i32 = arith.constant 0 : i32
    %c0_i32_0 = arith.constant 0 : i32
    %c0_i32_1 = arith.constant 0 : i32
    return %c0_i32, %c0_i32_0 : i32, i32
  }
  func.func @transform_2(%arg0: i32) -> (i32, i32) {
    %c0_i32 = arith.constant 0 : i32
    %c0_i32_0 = arith.constant 0 : i32
    %c0_i32_1 = arith.constant 0 : i32
    return %c0_i32, %c0_i32_0 : i32, i32
  }
  func.func @transform_3(%arg0: i32) -> (i32, i32) {
    %c0_i32 = arith.constant 0 : i32
    %c0_i32_0 = arith.constant 0 : i32
    %c0_i32_1 = arith.constant 0 : i32
    return %c0_i32, %c0_i32_0 : i32, i32
  }
  func.func @transform_4(%arg0: i32) -> (i32, i32) {
    %c0_i32 = arith.constant 0 : i32
    %c0_i32_0 = arith.constant 0 : i32
    %c0_i32_1 = arith.constant 0 : i32
    return %c0_i32, %c0_i32_0 : i32, i32
  }
  func.func @transform_5(%arg0: i32) -> (i32, i32) {
    %c0_i32 = arith.constant 0 : i32
    %c0_i32_0 = arith.constant 0 : i32
    %c0_i32_1 = arith.constant 0 : i32
    return %c0_i32, %c0_i32_0 : i32, i32
  }
  func.func @transform_6(%arg0: i32) -> (i32, i32) {
    %c0_i32 = arith.constant 0 : i32
    %c0_i32_0 = arith.constant 0 : i32
    %c0_i32_1 = arith.constant 0 : i32
    return %c0_i32, %c0_i32_0 : i32, i32
  }
  func.func @transform_7(%arg0: i32) -> (i32, i32) {
    %c0_i32 = arith.constant 0 : i32
    %c0_i32_0 = arith.constant 0 : i32
    %c0_i32_1 = arith.constant 0 : i32
    return %c0_i32, %c0_i32_0 : i32, i32
  }
}

</mosaic_0001>

<llo_original>
// kernel: _forward_impl.1
$region0: #{_forward_impl.1}
  #allocation0 [shape = 'u32[]', space=smem, size = 0x4, offset = 0x4, fixed_abs, tag = 'smem constant byte address 0x4 - core index']
  #allocation1 [shape = 'u32[144,128]{1,0:T(1,128)}', space=vmem, size = 0x12000, scoped, tag = 'internal scratch']
  %s0 = inlined_call_operand.vmem [shape: bf16[16,2048], index: 0, kind: input, shape index: {}]
  %s1 = inlined_call_operand.hbm [shape: s8[2048,512], index: 1, kind: input, shape index: {}]
  %s2 = inlined_call_operand.vmem [shape: f32[1,512], index: 2, kind: input, shape index: {}]
  %s3 = inlined_call_operand.vmem [shape: f32[1,512], index: 3, kind: input, shape index: {}]
  %s4 = inlined_call_operand.hbm [shape: s8[512,2048], index: 4, kind: input, shape index: {}]
  %s5 = inlined_call_operand.vmem [shape: f32[1,2048], index: 5, kind: input, shape index: {}]
  %s6 = inlined_call_operand.vmem [shape: f32[1,2048], index: 6, kind: input, shape index: {}]
  %s7 = inlined_call_operand.vmem [shape: f32[16,2048], index: 7, kind: output, shape index: {}]
  %s8 = sld [smem:[#allocation0]]
  $region46: #{_forward_impl.1} parent=0
    _
  %s10 = ssub.s32 1, %s8
  %s11 = scalar_select 0, %s10, %s8
  $region1: #{_forward_impl.1} parent=0
    #allocation2 [shape = 'u8[1048576]{0}', space=vmem, size = 0x100000, scoped, tag = 'input window, operand 1, single buffered']
    #allocation3 [shape = 's32[1]{0}', space=sflag, size = 0x4, scoped, tag = 'scoped memory for _forward_impl.1']
    #allocation4 [shape = 'u8[1048576]{0}', space=vmem, size = 0x100000, scoped, tag = 'input window, operand 4, single buffered']
    #allocation5 [shape = 's32[1]{0}', space=sflag, size = 0x4, scoped, tag = 'scoped memory for _forward_impl.1']
    %12 = vsyncpa [#allocation3], 0
    %13 = vsyncpa [#allocation5], 0
    // Predicated region
    $region2: #{_forward_impl.1} parent=1 // pred_check
      _
    $region3: #{_forward_impl.1} parent=1 // pred_check_branch
      %15 = sbr.rel (0) target = $region5
    $region4: #{_forward_impl.1} parent=1 // pred_region
      _
    $region5: #{_forward_impl.1} parent=1 // pred_fallthru
      _
    // Predicated region
    $region6: #{_forward_impl.1} parent=1 // pred_check
      _
    $region7: #{_forward_impl.1} parent=1 // pred_check_branch
      %17 = sbr.rel (0) target = $region9
    $region8: #{_forward_impl.1} parent=1 // pred_region
      %s19 = ssub.s32 32768, 32768
      %20 = vsyncadd [#allocation3], %s19
      %s21 = sshll.u32 [#allocation2], 4
      %s22 = int_to_ptr.vmem [resolvable:$true] %s21
      %27 = dma.hbm_to_vmem [thread:$0]  %s1, 32768, %s22, [#allocation3], 512, 512, 32
    $region9: #{_forward_impl.1} parent=1 // pred_fallthru
      _
    // Predicated region
    $region10: #{_forward_impl.1} parent=1 // pred_check
      _
    $region11: #{_forward_impl.1} parent=1 // pred_check_branch
      %29 = sbr.rel (0) target = $region13
    $region12: #{_forward_impl.1} parent=1 // pred_region
      _
    $region13: #{_forward_impl.1} parent=1 // pred_fallthru
      _
    // Predicated region
    $region14: #{_forward_impl.1} parent=1 // pred_check
      _
    $region15: #{_forward_impl.1} parent=1 // pred_check_branch
      %31 = sbr.rel (0) target = $region17
    $region16: #{_forward_impl.1} parent=1 // pred_region
      _
    $region17: #{_forward_impl.1} parent=1 // pred_fallthru
      _
    // Predicated region
    $region18: #{_forward_impl.1} parent=1 // pred_check
      _
    $region19: #{_forward_impl.1} parent=1 // pred_check_branch
      %33 = sbr.rel (0) target = $region21
    $region20: #{_forward_impl.1} parent=1 // pred_region
      %s35 = ssub.s32 32768, 32768
      %36 = vsyncadd [#allocation5], %s35
      %s37 = sshll.u32 [#allocation4], 4
      %s38 = int_to_ptr.vmem [resolvable:$true] %s37
      %43 = dma.hbm_to_vmem [thread:$0]  %s4, 32768, %s38, [#allocation5], 2048, 2048, 128
    $region21: #{_forward_impl.1} parent=1 // pred_fallthru
      _
    // Predicated region
    $region22: #{_forward_impl.1} parent=1 // pred_check
      _
    $region23: #{_forward_impl.1} parent=1 // pred_check_branch
      %45 = sbr.rel (0) target = $region25
    $region24: #{_forward_impl.1} parent=1 // pred_region
      _
    $region25: #{_forward_impl.1} parent=1 // pred_fallthru
      _
    // Predicated region
    $region26: #{_forward_impl.1} parent=1 // pred_check
      _
    $region27: #{_forward_impl.1} parent=1 // pred_check_branch
      %47 = sbr.rel (0) target = $region29
    $region28: #{_forward_impl.1} parent=1 // pred_region
      _
    $region29: #{_forward_impl.1} parent=1 // pred_fallthru
      _
    // Predicated region
    $region30: #{_forward_impl.1} parent=1 // pred_check
      _
    $region31: #{_forward_impl.1} parent=1 // pred_check_branch
      %49 = sbr.rel (0) target = $region33
    $region32: #{_forward_impl.1} parent=1 // pred_region
      %50 = dma.done [#allocation3], 32768
    $region33: #{_forward_impl.1} parent=1 // pred_fallthru
      _
    // Predicated region
    $region34: #{_forward_impl.1} parent=1 // pred_check
      _
    $region35: #{_forward_impl.1} parent=1 // pred_check_branch
      %52 = sbr.rel (0) target = $region37
    $region36: #{_forward_impl.1} parent=1 // pred_region
      %53 = dma.done [#allocation5], 32768
    $region37: #{_forward_impl.1} parent=1 // pred_fallthru
      _
    %v54 = vld [vmem:[#allocation2] sm:$0xff]
    %v55 = vld [vmem:[#allocation2 + $0x8] sm:$0xff]
    %v56 = vld [vmem:[#allocation2 + $0x10] sm:$0xff]
    %v57 = vld [vmem:[#allocation2 + $0x18] sm:$0xff]
    %v58 = vld [vmem:[#allocation2 + $0x20] sm:$0xff]
    %v59 = vld [vmem:[#allocation2 + $0x28] sm:$0xff]
    %v60 = vld [vmem:[#allocation2 + $0x30] sm:$0xff]
    %v61 = vld [vmem:[#allocation2 + $0x38] sm:$0xff]
    %v62 = vld [vmem:[#allocation2 + $0x40] sm:$0xff]
    %v63 = vld [vmem:[#allocation2 + $0x48] sm:$0xff]
    %v64 = vld [vmem:[#allocation2 + $0x50] sm:$0xff]
    %v65 = vld [vmem:[#allocation2 + $0x58] sm:$0xff]
    %v66 = vld [vmem:[#allocation2 + $0x60] sm:$0xff]
    %v67 = vld [vmem:[#allocation2 + $0x68] sm:$0xff]
    %v68 = vld [vmem:[#allocation2 + $0x70] sm:$0xff]
    %v69 = vld [vmem:[#allocation2 + $0x78] sm:$0xff]
    %v70 = vld [vmem:[#allocation2 + $0x80] sm:$0xff]
    %v71 = vld [vmem:[#allocation2 + $0x88] sm:$0xff]
    %v72 = vld [vmem:[#allocation2 + $0x90] sm:$0xff]
    %v73 = vld [vmem:[#allocation2 + $0x98] sm:$0xff]
    %v74 = vld [vmem:[#allocation2 + $0xa0] sm:$0xff]
    %v75 = vld [vmem:[#allocation2 + $0xa8] sm:$0xff]
    %v76 = vld [vmem:[#allocation2 + $0xb0] sm:$0xff]
    %v77 = vld [vmem:[#allocation2 + $0xb8] sm:$0xff]
    %v78 = vld [vmem:[#allocation2 + $0xc0] sm:$0xff]
    %v79 = vld [vmem:[#allocation2 + $0xc8] sm:$0xff]
    %v80 = vld [vmem:[#allocation2 + $0xd0] sm:$0xff]
    %v81 = vld [vmem:[#allocation2 + $0xd8] sm:$0xff]
    %v82 = vld [vmem:[#allocation2 + $0xe0] sm:$0xff]
    %v83 = vld [vmem:[#allocation2 + $0xe8] sm:$0xff]
    %v84 = vld [vmem:[#allocation2 + $0xf0] sm:$0xff]
    %v85 = vld [vmem:[#allocation2 + $0xf8] sm:$0xff]
    %v86 = vld [vmem:[#allocation2 + $0x100] sm:$0xff]
    %v87 = vld [vmem:[#allocation2 + $0x108] sm:$0xff]
    %v88 = vld [vmem:[#allocation2 + $0x110] sm:$0xff]
    %v89 = vld [vmem:[#allocation2 + $0x118] sm:$0xff]
    %v90 = vld [vmem:[#allocation2 + $0x120] sm:$0xff]
    %v91 = vld [vmem:[#allocation2 + $0x128] sm:$0xff]
    %v92 = vld [vmem:[#allocation2 + $0x130] sm:$0xff]
    %v93 = vld [vmem:[#allocation2 + $0x138] sm:$0xff]
    %v94 = vld [vmem:[#allocation2 + $0x140] sm:$0xff]
    %v95 = vld [vmem:[#allocation2 + $0x148] sm:$0xff]
    %v96 = vld [vmem:[#allocation2 + $0x150] sm:$0xff]
    %v97 = vld [vmem:[#allocation2 + $0x158] sm:$0xff]
    %v98 = vld [vmem:[#allocation2 + $0x160] sm:$0xff]
    %v99 = vld [vmem:[#allocation2 + $0x168] sm:$0xff]
    %v100 = vld [vmem:[#allocation2 + $0x170] sm:$0xff]
    %v101 = vld [vmem:[#allocation2 + $0x178] sm:$0xff]
    %v102 = vld [vmem:[#allocation2 + $0x180] sm:$0xff]
    %v103 = vld [vmem:[#allocation2 + $0x188] sm:$0xff]
    %v104 = vld [vmem:[#allocation2 + $0x190] sm:$0xff]
    %v105 = vld [vmem:[#allocation2 + $0x198] sm:$0xff]
    %v106 = vld [vmem:[#allocation2 + $0x1a0] sm:$0xff]
    %v107 = vld [vmem:[#allocation2 + $0x1a8] sm:$0xff]
    %v108 = vld [vmem:[#allocation2 + $0x1b0] sm:$0xff]
    %v109 = vld [vmem:[#allocation2 + $0x1b8] sm:$0xff]
    %v110 = vld [vmem:[#allocation2 + $0x1c0] sm:$0xff]
    %v111 = vld [vmem:[#allocation2 + $0x1c8] sm:$0xff]
    %v112 = vld [vmem:[#allocation2 + $0x1d0] sm:$0xff]
    %v113 = vld [vmem:[#allocation2 + $0x1d8] sm:$0xff]
    %v114 = vld [vmem:[#allocation2 + $0x1e0] sm:$0xff]
    %v115 = vld [vmem:[#allocation2 + $0x1e8] sm:$0xff]
    %v116 = vld [vmem:[#allocation2 + $0x1f0] sm:$0xff]
    %v117 = vld [vmem:[#allocation2 + $0x1f8] sm:$0xff]
    %v118 = vld [vmem:[#allocation2 + $0x200] sm:$0xff]
    %v119 = vld [vmem:[#allocation2 + $0x208] sm:$0xff]
    %v120 = vld [vmem:[#allocation2 + $0x210] sm:$0xff]
    %v121 = vld [vmem:[#allocation2 + $0x218] sm:$0xff]
    %v122 = vld [vmem:[#allocation2 + $0x220] sm:$0xff]
    %v123 = vld [vmem:[#allocation2 + $0x228] sm:$0xff]
    %v124 = vld [vmem:[#allocation2 + $0x230] sm:$0xff]
    %v125 = vld [vmem:[#allocation2 + $0x238] sm:$0xff]
    %v126 = vld [vmem:[#allocation2 + $0x240] sm:$0xff]
    %v127 = vld [vmem:[#allocation2 + $0x248] sm:$0xff]
    %v128 = vld [vmem:[#allocation2 + $0x250] sm:$0xff]
    %v129 = vld [vmem:[#allocation2 + $0x258] sm:$0xff]
    %v130 = vld [vmem:[#allocation2 + $0x260] sm:$0xff]
    %v131 = vld [vmem:[#allocation2 + $0x268] sm:$0xff]
    %v132 = vld [vmem:[#allocation2 + $0x270] sm:$0xff]
    %v133 = vld [vmem:[#allocation2 + $0x278] sm:$0xff]
    %v134 = vld [vmem:[#allocation2 + $0x280] sm:$0xff]
    %v135 = vld [vmem:[#allocation2 + $0x288] sm:$0xff]
    %v136 = vld [vmem:[#allocation2 + $0x290] sm:$0xff]
    %v137 = vld [vmem:[#allocation2 + $0x298] sm:$0xff]
    %v138 = vld [vmem:[#allocation2 + $0x2a0] sm:$0xff]
    %v139 = vld [vmem:[#allocation2 + $0x2a8] sm:$0xff]
    %v140 = vld [vmem:[#allocation2 + $0x2b0] sm:$0xff]
    %v141 = vld [vmem:[#allocation2 + $0x2b8] sm:$0xff]
    %v142 = vld [vmem:[#allocation2 + $0x2c0] sm:$0xff]
    %v143 = vld [vmem:[#allocation2 + $0x2c8] sm:$0xff]
    %v144 = vld [vmem:[#allocation2 + $0x2d0] sm:$0xff]
    %v145 = vld [vmem:[#allocation2 + $0x2d8] sm:$0xff]
    %v146 = vld [vmem:[#allocation2 + $0x2e0] sm:$0xff]
    %v147 = vld [vmem:[#allocation2 + $0x2e8] sm:$0xff]
    %v148 = vld [vmem:[#allocation2 + $0x2f0] sm:$0xff]
    %v149 = vld [vmem:[#allocation2 + $0x2f8] sm:$0xff]
    %v150 = vld [vmem:[#allocation2 + $0x300] sm:$0xff]
    %v151 = vld [vmem:[#allocation2 + $0x308] sm:$0xff]
    %v152 = vld [vmem:[#allocation2 + $0x310] sm:$0xff]
    %v153 = vld [vmem:[#allocation2 + $0x318] sm:$0xff]
    %v154 = vld [vmem:[#allocation2 + $0x320] sm:$0xff]
    %v155 = vld [vmem:[#allocation2 + $0x328] sm:$0xff]
    %v156 = vld [vmem:[#allocation2 + $0x330] sm:$0xff]
    %v157 = vld [vmem:[#allocation2 + $0x338] sm:$0xff]
    %v158 = vld [vmem:[#allocation2 + $0x340] sm:$0xff]
    %v159 = vld [vmem:[#allocation2 + $0x348] sm:$0xff]
    %v160 = vld [vmem:[#allocation2 + $0x350] sm:$0xff]
    %v161 = vld [vmem:[#allocation2 + $0x358] sm:$0xff]
    %v162 = vld [vmem:[#allocation2 + $0x360] sm:$0xff]
    %v163 = vld [vmem:[#allocation2 + $0x368] sm:$0xff]
    %v164 = vld [vmem:[#allocation2 + $0x370] sm:$0xff]
    %v165 = vld [vmem:[#allocation2 + $0x378] sm:$0xff]
    %v166 = vld [vmem:[#allocation2 + $0x380] sm:$0xff]
    %v167 = vld [vmem:[#allocation2 + $0x388] sm:$0xff]
    %v168 = vld [vmem:[#allocation2 + $0x390] sm:$0xff]
    %v169 = vld [vmem:[#allocation2 + $0x398] sm:$0xff]
    %v170 = vld [vmem:[#allocation2 + $0x3a0] sm:$0xff]
    %v171 = vld [vmem:[#allocation2 + $0x3a8] sm:$0xff]
    %v172 = vld [vmem:[#allocation2 + $0x3b0] sm:$0xff]
    %v173 = vld [vmem:[#allocation2 + $0x3b8] sm:$0xff]
    %v174 = vld [vmem:[#allocation2 + $0x3c0] sm:$0xff]
    %v175 = vld [vmem:[#allocation2 + $0x3c8] sm:$0xff]
    %v176 = vld [vmem:[#allocation2 + $0x3d0] sm:$0xff]
    %v177 = vld [vmem:[#allocation2 + $0x3d8] sm:$0xff]
    %v178 = vld [vmem:[#allocation2 + $0x3e0] sm:$0xff]
    %v179 = vld [vmem:[#allocation2 + $0x3e8] sm:$0xff]
    %v180 = vld [vmem:[#allocation2 + $0x3f0] sm:$0xff]
    %v181 = vld [vmem:[#allocation2 + $0x3f8] sm:$0xff]
    %v182 = vld [vmem:[#allocation2 + $0x400] sm:$0xff]
    %v183 = vld [vmem:[#allocation2 + $0x408] sm:$0xff]
    %v184 = vld [vmem:[#allocation2 + $0x410] sm:$0xff]
    %v185 = vld [vmem:[#allocation2 + $0x418] sm:$0xff]
    %v186 = vld [vmem:[#allocation2 + $0x420] sm:$0xff]
    %v187 = vld [vmem:[#allocation2 + $0x428] sm:$0xff]
    %v188 = vld [vmem:[#allocation2 + $0x430] sm:$0xff]
    %v189 = vld [vmem:[#allocation2 + $0x438] sm:$0xff]
    %v190 = vld [vmem:[#allocation2 + $0x440] sm:$0xff]
    %v191 = vld [vmem:[#allocation2 + $0x448] sm:$0xff]
    %v192 = vld [vmem:[#allocation2 + $0x450] sm:$0xff]
    %v193 = vld [vmem:[#allocation2 + $0x458] sm:$0xff]
    %v194 = vld [vmem:[#allocation2 + $0x460] sm:$0xff]
    %v195 = vld [vmem:[#allocation2 + $0x468] sm:$0xff]
    %v196 = vld [vmem:[#allocation2 + $0x470] sm:$0xff]
    %v197 = vld [vmem:[#allocation2 + $0x478] sm:$0xff]
    %v198 = vld [vmem:[#allocation2 + $0x480] sm:$0xff]
    %v199 = vld [vmem:[#allocation2 + $0x488] sm:$0xff]
    %v200 = vld [vmem:[#allocation2 + $0x490] sm:$0xff]
    %v201 = vld [vmem:[#allocation2 + $0x498] sm:$0xff]
    %v202 = vld [vmem:[#allocation2 + $0x4a0] sm:$0xff]
    %v203 = vld [vmem:[#allocation2 + $0x4a8] sm:$0xff]
    %v204 = vld [vmem:[#allocation2 + $0x4b0] sm:$0xff]
    %v205 = vld [vmem:[#allocation2 + $0x4b8] sm:$0xff]
    %v206 = vld [vmem:[#allocation2 + $0x4c0] sm:$0xff]
    %v207 = vld [vmem:[#allocation2 + $0x4c8] sm:$0xff]
    %v208 = vld [vmem:[#allocation2 + $0x4d0] sm:$0xff]
    %v209 = vld [vmem:[#allocation2 + $0x4d8] sm:$0xff]
    %v210 = vld [vmem:[#allocation2 + $0x4e0] sm:$0xff]
    %v211 = vld [vmem:[#allocation2 + $0x4e8] sm:$0xff]
    %v212 = vld [vmem:[#allocation2 + $0x4f0] sm:$0xff]
    %v213 = vld [vmem:[#allocation2 + $0x4f8] sm:$0xff]
    %v214 = vld [vmem:[#allocation2 + $0x500] sm:$0xff]
    %v215 = vld [vmem:[#allocation2 + $0x508] sm:$0xff]
    %v216 = vld [vmem:[#allocation2 + $0x510] sm:$0xff]
    %v217 = vld [vmem:[#allocation2 + $0x518] sm:$0xff]
    %v218 = vld [vmem:[#allocation2 + $0x520] sm:$0xff]
    %v219 = vld [vmem:[#allocation2 + $0x528] sm:$0xff]
    %v220 = vld [vmem:[#allocation2 + $0x530] sm:$0xff]
    %v221 = vld [vmem:[#allocation2 + $0x538] sm:$0xff]
    %v222 = vld [vmem:[#allocation2 + $0x540] sm:$0xff]
    %v223 = vld [vmem:[#allocation2 + $0x548] sm:$0xff]
    %v224 = vld [vmem:[#allocation2 + $0x550] sm:$0xff]
    %v225 = vld [vmem:[#allocation2 + $0x558] sm:$0xff]
    %v226 = vld [vmem:[#allocation2 + $0x560] sm:$0xff]
    %v227 = vld [vmem:[#allocation2 + $0x568] sm:$0xff]
    %v228 = vld [vmem:[#allocation2 + $0x570] sm:$0xff]
    %v229 = vld [vmem:[#allocation2 + $0x578] sm:$0xff]
    %v230 = vld [vmem:[#allocation2 + $0x580] sm:$0xff]
    %v231 = vld [vmem:[#allocation2 + $0x588] sm:$0xff]
    %v232 = vld [vmem:[#allocation2 + $0x590] sm:$0xff]
    %v233 = vld [vmem:[#allocation2 + $0x598] sm:$0xff]
    %v234 = vld [vmem:[#allocation2 + $0x5a0] sm:$0xff]
    %v235 = vld [vmem:[#allocation2 + $0x5a8] sm:$0xff]
    %v236 = vld [vmem:[#allocation2 + $0x5b0] sm:$0xff]
    %v237 = vld [vmem:[#allocation2 + $0x5b8] sm:$0xff]
    %v238 = vld [vmem:[#allocation2 + $0x5c0] sm:$0xff]
    %v239 = vld [vmem:[#allocation2 + $0x5c8] sm:$0xff]
    %v240 = vld [vmem:[#allocation2 + $0x5d0] sm:$0xff]
    %v241 = vld [vmem:[#allocation2 + $0x5d8] sm:$0xff]
    %v242 = vld [vmem:[#allocation2 + $0x5e0] sm:$0xff]
    %v243 = vld [vmem:[#allocation2 + $0x5e8] sm:$0xff]
    %v244 = vld [vmem:[#allocation2 + $0x5f0] sm:$0xff]
    %v245 = vld [vmem:[#allocation2 + $0x5f8] sm:$0xff]
    %v246 = vld [vmem:[#allocation2 + $0x600] sm:$0xff]
    %v247 = vld [vmem:[#allocation2 + $0x608] sm:$0xff]
    %v248 = vld [vmem:[#allocation2 + $0x610] sm:$0xff]
    %v249 = vld [vmem:[#allocation2 + $0x618] sm:$0xff]
    %v250 = vld [vmem:[#allocation2 + $0x620] sm:$0xff]
    %v251 = vld [vmem:[#allocation2 + $0x628] sm:$0xff]
    %v252 = vld [vmem:[#allocation2 + $0x630] sm:$0xff]
    %v253 = vld [vmem:[#allocation2 + $0x638] sm:$0xff]
    %v254 = vld [vmem:[#allocation2 + $0x640] sm:$0xff]
    %v255 = vld [vmem:[#allocation2 + $0x648] sm:$0xff]
    %v256 = vld [vmem:[#allocation2 + $0x650] sm:$0xff]
    %v257 = vld [vmem:[#allocation2 + $0x658] sm:$0xff]
    %v258 = vld [vmem:[#allocation2 + $0x660] sm:$0xff]
    %v259 = vld [vmem:[#allocation2 + $0x668] sm:$0xff]
    %v260 = vld [vmem:[#allocation2 + $0x670] sm:$0xff]
    %v261 = vld [vmem:[#allocation2 + $0x678] sm:$0xff]
    %v262 = vld [vmem:[#allocation2 + $0x680] sm:$0xff]
    %v263 = vld [vmem:[#allocation2 + $0x688] sm:$0xff]
    %v264 = vld [vmem:[#allocation2 + $0x690] sm:$0xff]
    %v265 = vld [vmem:[#allocation2 + $0x698] sm:$0xff]
    %v266 = vld [vmem:[#allocation2 + $0x6a0] sm:$0xff]
    %v267 = vld [vmem:[#allocation2 + $0x6a8] sm:$0xff]
    %v268 = vld [vmem:[#allocation2 + $0x6b0] sm:$0xff]
    %v269 = vld [vmem:[#allocation2 + $0x6b8] sm:$0xff]
    %v270 = vld [vmem:[#allocation2 + $0x6c0] sm:$0xff]
    %v271 = vld [vmem:[#allocation2 + $0x6c8] sm:$0xff]
    %v272 = vld [vmem:[#allocation2 + $0x6d0] sm:$0xff]
    %v273 = vld [vmem:[#allocation2 + $0x6d8] sm:$0xff]
    %v274 = vld [vmem:[#allocation2 + $0x6e0] sm:$0xff]
    %v275 = vld [vmem:[#allocation2 + $0x6e8] sm:$0xff]
    %v276 = vld [vmem:[#allocation2 + $0x6f0] sm:$0xff]
    %v277 = vld [vmem:[#allocation2 + $0x6f8] sm:$0xff]
    %v278 = vld [vmem:[#allocation2 + $0x700] sm:$0xff]
    %v279 = vld [vmem:[#allocation2 + $0x708] sm:$0xff]
    %v280 = vld [vmem:[#allocation2 + $0x710] sm:$0xff]
    %v281 = vld [vmem:[#allocation2 + $0x718] sm:$0xff]
    %v282 = vld [vmem:[#allocation2 + $0x720] sm:$0xff]
    %v283 = vld [vmem:[#allocation2 + $0x728] sm:$0xff]
    %v284 = vld [vmem:[#allocation2 + $0x730] sm:$0xff]
    %v285 = vld [vmem:[#allocation2 + $0x738] sm:$0xff]
    %v286 = vld [vmem:[#allocation2 + $0x740] sm:$0xff]
    %v287 = vld [vmem:[#allocation2 + $0x748] sm:$0xff]
    %v288 = vld [vmem:[#allocation2 + $0x750] sm:$0xff]
    %v289 = vld [vmem:[#allocation2 + $0x758] sm:$0xff]
    %v290 = vld [vmem:[#allocation2 + $0x760] sm:$0xff]
    %v291 = vld [vmem:[#allocation2 + $0x768] sm:$0xff]
    %v292 = vld [vmem:[#allocation2 + $0x770] sm:$0xff]
    %v293 = vld [vmem:[#allocation2 + $0x778] sm:$0xff]
    %v294 = vld [vmem:[#allocation2 + $0x780] sm:$0xff]
    %v295 = vld [vmem:[#allocation2 + $0x788] sm:$0xff]
    %v296 = vld [vmem:[#allocation2 + $0x790] sm:$0xff]
    %v297 = vld [vmem:[#allocation2 + $0x798] sm:$0xff]
    %v298 = vld [vmem:[#allocation2 + $0x7a0] sm:$0xff]
    %v299 = vld [vmem:[#allocation2 + $0x7a8] sm:$0xff]
    %v300 = vld [vmem:[#allocation2 + $0x7b0] sm:$0xff]
    %v301 = vld [vmem:[#allocation2 + $0x7b8] sm:$0xff]
    %v302 = vld [vmem:[#allocation2 + $0x7c0] sm:$0xff]
    %v303 = vld [vmem:[#allocation2 + $0x7c8] sm:$0xff]
    %v304 = vld [vmem:[#allocation2 + $0x7d0] sm:$0xff]
    %v305 = vld [vmem:[#allocation2 + $0x7d8] sm:$0xff]
    %v306 = vld [vmem:[#allocation2 + $0x7e0] sm:$0xff]
    %v307 = vld [vmem:[#allocation2 + $0x7e8] sm:$0xff]
    %v308 = vld [vmem:[#allocation2 + $0x7f0] sm:$0xff]
    %v309 = vld [vmem:[#allocation2 + $0x7f8] sm:$0xff]
    %v310 = vunpack.c.l.s8.bf16 %v54
    %v311 = vunpack.c.l.s8.bf16 %v55
    %v312 = vunpack.c.l.s8.bf16 %v56
    %v313 = vunpack.c.l.s8.bf16 %v57
    %v314 = vunpack.c.h.s8.bf16 %v54
    %v315 = vunpack.c.h.s8.bf16 %v55
    %v316 = vunpack.c.h.s8.bf16 %v56
    %v317 = vunpack.c.h.s8.bf16 %v57
    %v318 = vunpack.c.l.s8.bf16 %v58
    %v319 = vunpack.c.l.s8.bf16 %v59
    %v320 = vunpack.c.l.s8.bf16 %v60
    %v321 = vunpack.c.l.s8.bf16 %v61
    %v322 = vunpack.c.h.s8.bf16 %v58
    %v323 = vunpack.c.h.s8.bf16 %v59
    %v324 = vunpack.c.h.s8.bf16 %v60
    %v325 = vunpack.c.h.s8.bf16 %v61
    %v326 = vunpack.c.l.s8.bf16 %v62
    %v327 = vunpack.c.l.s8.bf16 %v63
    %v328 = vunpack.c.l.s8.bf16 %v64
    %v329 = vunpack.c.l.s8.bf16 %v65
    %v330 = vunpack.c.h.s8.bf16 %v62
    %v331 = vunpack.c.h.s8.bf16 %v63
    %v332 = vunpack.c.h.s8.bf16 %v64
    %v333 = vunpack.c.h.s8.bf16 %v65
    %v334 = vunpack.c.l.s8.bf16 %v66
    %v335 = vunpack.c.l.s8.bf16 %v67
    %v336 = vunpack.c.l.s8.bf16 %v68
    %v337 = vunpack.c.l.s8.bf16 %v69
    %v338 = vunpack.c.h.s8.bf16 %v66
    %v339 = vunpack.c.h.s8.bf16 %v67
    %v340 = vunpack.c.h.s8.bf16 %v68
    %v341 = vunpack.c.h.s8.bf16 %v69
    %v342 = vunpack.c.l.s8.bf16 %v70
    %v343 = vunpack.c.l.s8.bf16 %v71
    %v344 = vunpack.c.l.s8.bf16 %v72
    %v345 = vunpack.c.l.s8.bf16 %v73
    %v346 = vunpack.c.h.s8.bf16 %v70
    %v347 = vunpack.c.h.s8.bf16 %v71
    %v348 = vunpack.c.h.s8.bf16 %v72
    %v349 = vunpack.c.h.s8.bf16 %v73
    %v350 = vunpack.c.l.s8.bf16 %v74
    %v351 = vunpack.c.l.s8.bf16 %v75
    %v352 = vunpack.c.l.s8.bf16 %v76
    %v353 = vunpack.c.l.s8.bf16 %v77
    %v354 = vunpack.c.h.s8.bf16 %v74
    %v355 = vunpack.c.h.s8.bf16 %v75
    %v356 = vunpack.c.h.s8.bf16 %v76
    %v357 = vunpack.c.h.s8.bf16 %v77
    %v358 = vunpack.c.l.s8.bf16 %v78
    %v359 = vunpack.c.l.s8.bf16 %v79
    %v360 = vunpack.c.l.s8.bf16 %v80
    %v361 = vunpack.c.l.s8.bf16 %v81
    %v362 = vunpack.c.h.s8.bf16 %v78
    %v363 = vunpack.c.h.s8.bf16 %v79
    %v364 = vunpack.c.h.s8.bf16 %v80
    %v365 = vunpack.c.h.s8.bf16 %v81
    %v366 = vunpack.c.l.s8.bf16 %v82
    %v367 = vunpack.c.l.s8.bf16 %v83
    %v368 = vunpack.c.l.s8.bf16 %v84
    %v369 = vunpack.c.l.s8.bf16 %v85
    %v370 = vunpack.c.h.s8.bf16 %v82
    %v371 = vunpack.c.h.s8.bf16 %v83
    %v372 = vunpack.c.h.s8.bf16 %v84
    %v373 = vunpack.c.h.s8.bf16 %v85
    %v374 = vunpack.c.l.s8.bf16 %v86
    %v375 = vunpack.c.l.s8.bf16 %v87
    %v376 = vunpack.c.l.s8.bf16 %v88
    %v377 = vunpack.c.l.s8.bf16 %v89
    %v378 = vunpack.c.h.s8.bf16 %v86
    %v379 = vunpack.c.h.s8.bf16 %v87
    %v380 = vunpack.c.h.s8.bf16 %v88
    %v381 = vunpack.c.h.s8.bf16 %v89
    %v382 = vunpack.c.l.s8.bf16 %v90
    %v383 = vunpack.c.l.s8.bf16 %v91
    %v384 = vunpack.c.l.s8.bf16 %v92
    %v385 = vunpack.c.l.s8.bf16 %v93
    %v386 = vunpack.c.h.s8.bf16 %v90
    %v387 = vunpack.c.h.s8.bf16 %v91
    %v388 = vunpack.c.h.s8.bf16 %v92
    %v389 = vunpack.c.h.s8.bf16 %v93
    %v390 = vunpack.c.l.s8.bf16 %v94
    %v391 = vunpack.c.l.s8.bf16 %v95
    %v392 = vunpack.c.l.s8.bf16 %v96
    %v393 = vunpack.c.l.s8.bf16 %v97
    %v394 = vunpack.c.h.s8.bf16 %v94
    %v395 = vunpack.c.h.s8.bf16 %v95
    %v396 = vunpack.c.h.s8.bf16 %v96
    %v397 = vunpack.c.h.s8.bf16 %v97
    %v398 = vunpack.c.l.s8.bf16 %v98
    %v399 = vunpack.c.l.s8.bf16 %v99
    %v400 = vunpack.c.l.s8.bf16 %v100
    %v401 = vunpack.c.l.s8.bf16 %v101
    %v402 = vunpack.c.h.s8.bf16 %v98
    %v403 = vunpack.c.h.s8.bf16 %v99
    %v404 = vunpack.c.h.s8.bf16 %v100
    %v405 = vunpack.c.h.s8.bf16 %v101
    %v406 = vunpack.c.l.s8.bf16 %v102
    %v407 = vunpack.c.l.s8.bf16 %v103
    %v408 = vunpack.c.l.s8.bf16 %v104
    %v409 = vunpack.c.l.s8.bf16 %v105
    %v410 = vunpack.c.h.s8.bf16 %v102
    %v411 = vunpack.c.h.s8.bf16 %v103
    %v412 = vunpack.c.h.s8.bf16 %v104
    %v413 = vunpack.c.h.s8.bf16 %v105
    %v414 = vunpack.c.l.s8.bf16 %v106
    %v415 = vunpack.c.l.s8.bf16 %v107
    %v416 = vunpack.c.l.s8.bf16 %v108
    %v417 = vunpack.c.l.s8.bf16 %v109
    %v418 = vunpack.c.h.s8.bf16 %v106
    %v419 = vunpack.c.h.s8.bf16 %v107
    %v420 = vunpack.c.h.s8.bf16 %v108
    %v421 = vunpack.c.h.s8.bf16 %v109
    %v422 = vunpack.c.l.s8.bf16 %v110
    %v423 = vunpack.c.l.s8.bf16 %v111
    %v424 = vunpack.c.l.s8.bf16 %v112
    %v425 = vunpack.c.l.s8.bf16 %v113
    %v426 = vunpack.c.h.s8.bf16 %v110
    %v427 = vunpack.c.h.s8.bf16 %v111
    %v428 = vunpack.c.h.s8.bf16 %v112
    %v429 = vunpack.c.h.s8.bf16 %v113
    %v430 = vunpack.c.l.s8.bf16 %v114
    %v431 = vunpack.c.l.s8.bf16 %v115
    %v432 = vunpack.c.l.s8.bf16 %v116
    %v433 = vunpack.c.l.s8.bf16 %v117
    %v434 = vunpack.c.h.s8.bf16 %v114
    %v435 = vunpack.c.h.s8.bf16 %v115
    %v436 = vunpack.c.h.s8.bf16 %v116
    %v437 = vunpack.c.h.s8.bf16 %v117
    %v438 = vunpack.c.l.s8.bf16 %v118
    %v439 = vunpack.c.l.s8.bf16 %v119
    %v440 = vunpack.c.l.s8.bf16 %v120
    %v441 = vunpack.c.l.s8.bf16 %v121
    %v442 = vunpack.c.h.s8.bf16 %v118
    %v443 = vunpack.c.h.s8.bf16 %v119
    %v444 = vunpack.c.h.s8.bf16 %v120
    %v445 = vunpack.c.h.s8.bf16 %v121
    %v446 = vunpack.c.l.s8.bf16 %v122
    %v447 = vunpack.c.l.s8.bf16 %v123
    %v448 = vunpack.c.l.s8.bf16 %v124
    %v449 = vunpack.c.l.s8.bf16 %v125
    %v450 = vunpack.c.h.s8.bf16 %v122
    %v451 = vunpack.c.h.s8.bf16 %v123
    %v452 = vunpack.c.h.s8.bf16 %v124
    %v453 = vunpack.c.h.s8.bf16 %v125
    %v454 = vunpack.c.l.s8.bf16 %v126
    %v455 = vunpack.c.l.s8.bf16 %v127
    %v456 = vunpack.c.l.s8.bf16 %v128
    %v457 = vunpack.c.l.s8.bf16 %v129
    %v458 = vunpack.c.h.s8.bf16 %v126
    %v459 = vunpack.c.h.s8.bf16 %v127
    %v460 = vunpack.c.h.s8.bf16 %v128
    %v461 = vunpack.c.h.s8.bf16 %v129
    %v462 = vunpack.c.l.s8.bf16 %v130
    %v463 = vunpack.c.l.s8.bf16 %v131
    %v464 = vunpack.c.l.s8.bf16 %v132
    %v465 = vunpack.c.l.s8.bf16 %v133
    %v466 = vunpack.c.h.s8.bf16 %v130
    %v467 = vunpack.c.h.s8.bf16 %v131
    %v468 = vunpack.c.h.s8.bf16 %v132
    %v469 = vunpack.c.h.s8.bf16 %v133
    %v470 = vunpack.c.l.s8.bf16 %v134
    %v471 = vunpack.c.l.s8.bf16 %v135
    %v472 = vunpack.c.l.s8.bf16 %v136
    %v473 = vunpack.c.l.s8.bf16 %v137
    %v474 = vunpack.c.h.s8.bf16 %v134
    %v475 = vunpack.c.h.s8.bf16 %v135
    %v476 = vunpack.c.h.s8.bf16 %v136
    %v477 = vunpack.c.h.s8.bf16 %v137
    %v478 = vunpack.c.l.s8.bf16 %v138
    %v479 = vunpack.c.l.s8.bf16 %v139
    %v480 = vunpack.c.l.s8.bf16 %v140
    %v481 = vunpack.c.l.s8.bf16 %v141
    %v482 = vunpack.c.h.s8.bf16 %v138
    %v483 = vunpack.c.h.s8.bf16 %v139
    %v484 = vunpack.c.h.s8.bf16 %v140
    %v485 = vunpack.c.h.s8.bf16 %v141
    %v486 = vunpack.c.l.s8.bf16 %v142
    %v487 = vunpack.c.l.s8.bf16 %v143
    %v488 = vunpack.c.l.s8.bf16 %v144
    %v489 = vunpack.c.l.s8.bf16 %v145
    %v490 = vunpack.c.h.s8.bf16 %v142
    %v491 = vunpack.c.h.s8.bf16 %v143
    %v492 = vunpack.c.h.s8.bf16 %v144
    %v493 = vunpack.c.h.s8.bf16 %v145
    %v494 = vunpack.c.l.s8.bf16 %v146
    %v495 = vunpack.c.l.s8.bf16 %v147
    %v496 = vunpack.c.l.s8.bf16 %v148
    %v497 = vunpack.c.l.s8.bf16 %v149
    %v498 = vunpack.c.h.s8.bf16 %v146
    %v499 = vunpack.c.h.s8.bf16 %v147
    %v500 = vunpack.c.h.s8.bf16 %v148
    %v501 = vunpack.c.h.s8.bf16 %v149
    %v502 = vunpack.c.l.s8.bf16 %v150
    %v503 = vunpack.c.l.s8.bf16 %v151
    %v504 = vunpack.c.l.s8.bf16 %v152
    %v505 = vunpack.c.l.s8.bf16 %v153
    %v506 = vunpack.c.h.s8.bf16 %v150
    %v507 = vunpack.c.h.s8.bf16 %v151
    %v508 = vunpack.c.h.s8.bf16 %v152
    %v509 = vunpack.c.h.s8.bf16 %v153
    %v510 = vunpack.c.l.s8.bf16 %v154
    %v511 = vunpack.c.l.s8.bf16 %v155
    %v512 = vunpack.c.l.s8.bf16 %v156
    %v513 = vunpack.c.l.s8.bf16 %v157
    %v514 = vunpack.c.h.s8.bf16 %v154
    %v515 = vunpack.c.h.s8.bf16 %v155
    %v516 = vunpack.c.h.s8.bf16 %v156
    %v517 = vunpack.c.h.s8.bf16 %v157
    %v518 = vunpack.c.l.s8.bf16 %v158
    %v519 = vunpack.c.l.s8.bf16 %v159
    %v520 = vunpack.c.l.s8.bf16 %v160
    %v521 = vunpack.c.l.s8.bf16 %v161
    %v522 = vunpack.c.h.s8.bf16 %v158
    %v523 = vunpack.c.h.s8.bf16 %v159
    %v524 = vunpack.c.h.s8.bf16 %v160
    %v525 = vunpack.c.h.s8.bf16 %v161
    %v526 = vunpack.c.l.s8.bf16 %v162
    %v527 = vunpack.c.l.s8.bf16 %v163
    %v528 = vunpack.c.l.s8.bf16 %v164
    %v529 = vunpack.c.l.s8.bf16 %v165
    %v530 = vunpack.c.h.s8.bf16 %v162
    %v531 = vunpack.c.h.s8.bf16 %v163
    %v532 = vunpack.c.h.s8.bf16 %v164
    %v533 = vunpack.c.h.s8.bf16 %v165
    %v534 = vunpack.c.l.s8.bf16 %v166
    %v535 = vunpack.c.l.s8.bf16 %v167
    %v536 = vunpack.c.l.s8.bf16 %v168
    %v537 = vunpack.c.l.s8.bf16 %v169
    %v538 = vunpack.c.h.s8.bf16 %v166
    %v539 = vunpack.c.h.s8.bf16 %v167
    %v540 = vunpack.c.h.s8.bf16 %v168
    %v541 = vunpack.c.h.s8.bf16 %v169
    %v542 = vunpack.c.l.s8.bf16 %v170
    %v543 = vunpack.c.l.s8.bf16 %v171
    %v544 = vunpack.c.l.s8.bf16 %v172
    %v545 = vunpack.c.l.s8.bf16 %v173
    %v546 = vunpack.c.h.s8.bf16 %v170
    %v547 = vunpack.c.h.s8.bf16 %v171
    %v548 = vunpack.c.h.s8.bf16 %v172
    %v549 = vunpack.c.h.s8.bf16 %v173
    %v550 = vunpack.c.l.s8.bf16 %v174
    %v551 = vunpack.c.l.s8.bf16 %v175
    %v552 = vunpack.c.l.s8.bf16 %v176
    %v553 = vunpack.c.l.s8.bf16 %v177
    %v554 = vunpack.c.h.s8.bf16 %v174
    %v555 = vunpack.c.h.s8.bf16 %v175
    %v556 = vunpack.c.h.s8.bf16 %v176
    %v557 = vunpack.c.h.s8.bf16 %v177
    %v558 = vunpack.c.l.s8.bf16 %v178
    %v559 = vunpack.c.l.s8.bf16 %v179
    %v560 = vunpack.c.l.s8.bf16 %v180
    %v561 = vunpack.c.l.s8.bf16 %v181
    %v562 = vunpack.c.h.s8.bf16 %v178
    %v563 = vunpack.c.h.s8.bf16 %v179
    %v564 = vunpack.c.h.s8.bf16 %v180
    %v565 = vunpack.c.h.s8.bf16 %v181
    %v566 = vunpack.c.l.s8.bf16 %v182
    %v567 = vunpack.c.l.s8.bf16 %v183
    %v568 = vunpack.c.l.s8.bf16 %v184
    %v569 = vunpack.c.l.s8.bf16 %v185
    %v570 = vunpack.c.h.s8.bf16 %v182
    %v571 = vunpack.c.h.s8.bf16 %v183
    %v572 = vunpack.c.h.s8.bf16 %v184
    %v573 = vunpack.c.h.s8.bf16 %v185
    %v574 = vunpack.c.l.s8.bf16 %v186
    %v575 = vunpack.c.l.s8.bf16 %v187
    %v576 = vunpack.c.l.s8.bf16 %v188
    %v577 = vunpack.c.l.s8.bf16 %v189
    %v578 = vunpack.c.h.s8.bf16 %v186
    %v579 = vunpack.c.h.s8.bf16 %v187
    %v580 = vunpack.c.h.s8.bf16 %v188
    %v581 = vunpack.c.h.s8.bf16 %v189
    %v582 = vunpack.c.l.s8.bf16 %v190
    %v583 = vunpack.c.l.s8.bf16 %v191
    %v584 = vunpack.c.l.s8.bf16 %v192
    %v585 = vunpack.c.l.s8.bf16 %v193
    %v586 = vunpack.c.h.s8.bf16 %v190
    %v587 = vunpack.c.h.s8.bf16 %v191
    %v588 = vunpack.c.h.s8.bf16 %v192
    %v589 = vunpack.c.h.s8.bf16 %v193
    %v590 = vunpack.c.l.s8.bf16 %v194
    %v591 = vunpack.c.l.s8.bf16 %v195
    %v592 = vunpack.c.l.s8.bf16 %v196
    %v593 = vunpack.c.l.s8.bf16 %v197
    %v594 = vunpack.c.h.s8.bf16 %v194
    %v595 = vunpack.c.h.s8.bf16 %v195
    %v596 = vunpack.c.h.s8.bf16 %v196
    %v597 = vunpack.c.h.s8.bf16 %v197
    %v598 = vunpack.c.l.s8.bf16 %v198
    %v599 = vunpack.c.l.s8.bf16 %v199
    %v600 = vunpack.c.l.s8.bf16 %v200
    %v601 = vunpack.c.l.s8.bf16 %v201
    %v602 = vunpack.c.h.s8.bf16 %v198
    %v603 = vunpack.c.h.s8.bf16 %v199
    %v604 = vunpack.c.h.s8.bf16 %v200
    %v605 = vunpack.c.h.s8.bf16 %v201
    %v606 = vunpack.c.l.s8.bf16 %v202
    %v607 = vunpack.c.l.s8.bf16 %v203
    %v608 = vunpack.c.l.s8.bf16 %v204
    %v609 = vunpack.c.l.s8.bf16 %v205
    %v610 = vunpack.c.h.s8.bf16 %v202
    %v611 = vunpack.c.h.s8.bf16 %v203
    %v612 = vunpack.c.h.s8.bf16 %v204
    %v613 = vunpack.c.h.s8.bf16 %v205
    %v614 = vunpack.c.l.s8.bf16 %v206
    %v615 = vunpack.c.l.s8.bf16 %v207
    %v616 = vunpack.c.l.s8.bf16 %v208
    %v617 = vunpack.c.l.s8.bf16 %v209
    %v618 = vunpack.c.h.s8.bf16 %v206
    %v619 = vunpack.c.h.s8.bf16 %v207
    %v620 = vunpack.c.h.s8.bf16 %v208
    %v621 = vunpack.c.h.s8.bf16 %v209
    %v622 = vunpack.c.l.s8.bf16 %v210
    %v623 = vunpack.c.l.s8.bf16 %v211
    %v624 = vunpack.c.l.s8.bf16 %v212
    %v625 = vunpack.c.l.s8.bf16 %v213
    %v626 = vunpack.c.h.s8.bf16 %v210
    %v627 = vunpack.c.h.s8.bf16 %v211
    %v628 = vunpack.c.h.s8.bf16 %v212
    %v629 = vunpack.c.h.s8.bf16 %v213
    %v630 = vunpack.c.l.s8.bf16 %v214
    %v631 = vunpack.c.l.s8.bf16 %v215
    %v632 = vunpack.c.l.s8.bf16 %v216
    %v633 = vunpack.c.l.s8.bf16 %v217
    %v634 = vunpack.c.h.s8.bf16 %v214
    %v635 = vunpack.c.h.s8.bf16 %v215
    %v636 = vunpack.c.h.s8.bf16 %v216
    %v637 = vunpack.c.h.s8.bf16 %v217
    %v638 = vunpack.c.l.s8.bf16 %v218
    %v639 = vunpack.c.l.s8.bf16 %v219
    %v640 = vunpack.c.l.s8.bf16 %v220
    %v641 = vunpack.c.l.s8.bf16 %v221
    %v642 = vunpack.c.h.s8.bf16 %v218
    %v643 = vunpack.c.h.s8.bf16 %v219
    %v644 = vunpack.c.h.s8.bf16 %v220
    %v645 = vunpack.c.h.s8.bf16 %v221
    %v646 = vunpack.c.l.s8.bf16 %v222
    %v647 = vunpack.c.l.s8.bf16 %v223
    %v648 = vunpack.c.l.s8.bf16 %v224
    %v649 = vunpack.c.l.s8.bf16 %v225
    %v650 = vunpack.c.h.s8.bf16 %v222
    %v651 = vunpack.c.h.s8.bf16 %v223
    %v652 = vunpack.c.h.s8.bf16 %v224
    %v653 = vunpack.c.h.s8.bf16 %v225
    %v654 = vunpack.c.l.s8.bf16 %v226
    %v655 = vunpack.c.l.s8.bf16 %v227
    %v656 = vunpack.c.l.s8.bf16 %v228
    %v657 = vunpack.c.l.s8.bf16 %v229
    %v658 = vunpack.c.h.s8.bf16 %v226
    %v659 = vunpack.c.h.s8.bf16 %v227
    %v660 = vunpack.c.h.s8.bf16 %v228
    %v661 = vunpack.c.h.s8.bf16 %v229
    %v662 = vunpack.c.l.s8.bf16 %v230
    %v663 = vunpack.c.l.s8.bf16 %v231
    %v664 = vunpack.c.l.s8.bf16 %v232
    %v665 = vunpack.c.l.s8.bf16 %v233
    %v666 = vunpack.c.h.s8.bf16 %v230
    %v667 = vunpack.c.h.s8.bf16 %v231
    %v668 = vunpack.c.h.s8.bf16 %v232
    %v669 = vunpack.c.h.s8.bf16 %v233
    %v670 = vunpack.c.l.s8.bf16 %v234
    %v671 = vunpack.c.l.s8.bf16 %v235
    %v672 = vunpack.c.l.s8.bf16 %v236
    %v673 = vunpack.c.l.s8.bf16 %v237
    %v674 = vunpack.c.h.s8.bf16 %v234
    %v675 = vunpack.c.h.s8.bf16 %v235
    %v676 = vunpack.c.h.s8.bf16 %v236
    %v677 = vunpack.c.h.s8.bf16 %v237
    %v678 = vunpack.c.l.s8.bf16 %v238
    %v679 = vunpack.c.l.s8.bf16 %v239
    %v680 = vunpack.c.l.s8.bf16 %v240
    %v681 = vunpack.c.l.s8.bf16 %v241
    %v682 = vunpack.c.h.s8.bf16 %v238
    %v683 = vunpack.c.h.s8.bf16 %v239
    %v684 = vunpack.c.h.s8.bf16 %v240
    %v685 = vunpack.c.h.s8.bf16 %v241
    %v686 = vunpack.c.l.s8.bf16 %v242
    %v687 = vunpack.c.l.s8.bf16 %v243
    %v688 = vunpack.c.l.s8.bf16 %v244
    %v689 = vunpack.c.l.s8.bf16 %v245
    %v690 = vunpack.c.h.s8.bf16 %v242
    %v691 = vunpack.c.h.s8.bf16 %v243
    %v692 = vunpack.c.h.s8.bf16 %v244
    %v693 = vunpack.c.h.s8.bf16 %v245
    %v694 = vunpack.c.l.s8.bf16 %v246
    %v695 = vunpack.c.l.s8.bf16 %v247
    %v696 = vunpack.c.l.s8.bf16 %v248
    %v697 = vunpack.c.l.s8.bf16 %v249
    %v698 = vunpack.c.h.s8.bf16 %v246
    %v699 = vunpack.c.h.s8.bf16 %v247
    %v700 = vunpack.c.h.s8.bf16 %v248
    %v701 = vunpack.c.h.s8.bf16 %v249
    %v702 = vunpack.c.l.s8.bf16 %v250
    %v703 = vunpack.c.l.s8.bf16 %v251
    %v704 = vunpack.c.l.s8.bf16 %v252
    %v705 = vunpack.c.l.s8.bf16 %v253
    %v706 = vunpack.c.h.s8.bf16 %v250
    %v707 = vunpack.c.h.s8.bf16 %v251
    %v708 = vunpack.c.h.s8.bf16 %v252
    %v709 = vunpack.c.h.s8.bf16 %v253
    %v710 = vunpack.c.l.s8.bf16 %v254
    %v711 = vunpack.c.l.s8.bf16 %v255
    %v712 = vunpack.c.l.s8.bf16 %v256
    %v713 = vunpack.c.l.s8.bf16 %v257
    %v714 = vunpack.c.h.s8.bf16 %v254
    %v715 = vunpack.c.h.s8.bf16 %v255
    %v716 = vunpack.c.h.s8.bf16 %v256
    %v717 = vunpack.c.h.s8.bf16 %v257
    %v718 = vunpack.c.l.s8.bf16 %v258
    %v719 = vunpack.c.l.s8.bf16 %v259
    %v720 = vunpack.c.l.s8.bf16 %v260
    %v721 = vunpack.c.l.s8.bf16 %v261
    %v722 = vunpack.c.h.s8.bf16 %v258
    %v723 = vunpack.c.h.s8.bf16 %v259
    %v724 = vunpack.c.h.s8.bf16 %v260
    %v725 = vunpack.c.h.s8.bf16 %v261
    %v726 = vunpack.c.l.s8.bf16 %v262
    %v727 = vunpack.c.l.s8.bf16 %v263
    %v728 = vunpack.c.l.s8.bf16 %v264
    %v729 = vunpack.c.l.s8.bf16 %v265
    %v730 = vunpack.c.h.s8.bf16 %v262
    %v731 = vunpack.c.h.s8.bf16 %v263
    %v732 = vunpack.c.h.s8.bf16 %v264
    %v733 = vunpack.c.h.s8.bf16 %v265
    %v734 = vunpack.c.l.s8.bf16 %v266
    %v735 = vunpack.c.l.s8.bf16 %v267
    %v736 = vunpack.c.l.s8.bf16 %v268
    %v737 = vunpack.c.l.s8.bf16 %v269
    %v738 = vunpack.c.h.s8.bf16 %v266
    %v739 = vunpack.c.h.s8.bf16 %v267
    %v740 = vunpack.c.h.s8.bf16 %v268
    %v741 = vunpack.c.h.s8.bf16 %v269
    %v742 = vunpack.c.l.s8.bf16 %v270
    %v743 = vunpack.c.l.s8.bf16 %v271
    %v744 = vunpack.c.l.s8.bf16 %v272
    %v745 = vunpack.c.l.s8.bf16 %v273
    %v746 = vunpack.c.h.s8.bf16 %v270
    %v747 = vunpack.c.h.s8.bf16 %v271
    %v748 = vunpack.c.h.s8.bf16 %v272
    %v749 = vunpack.c.h.s8.bf16 %v273
    %v750 = vunpack.c.l.s8.bf16 %v274
    %v751 = vunpack.c.l.s8.bf16 %v275
    %v752 = vunpack.c.l.s8.bf16 %v276
    %v753 = vunpack.c.l.s8.bf16 %v277
    %v754 = vunpack.c.h.s8.bf16 %v274
    %v755 = vunpack.c.h.s8.bf16 %v275
    %v756 = vunpack.c.h.s8.bf16 %v276
    %v757 = vunpack.c.h.s8.bf16 %v277
    %v758 = vunpack.c.l.s8.bf16 %v278
    %v759 = vunpack.c.l.s8.bf16 %v279
    %v760 = vunpack.c.l.s8.bf16 %v280
    %v761 = vunpack.c.l.s8.bf16 %v281
    %v762 = vunpack.c.h.s8.bf16 %v278
    %v763 = vunpack.c.h.s8.bf16 %v279
    %v764 = vunpack.c.h.s8.bf16 %v280
    %v765 = vunpack.c.h.s8.bf16 %v281
    %v766 = vunpack.c.l.s8.bf16 %v282
    %v767 = vunpack.c.l.s8.bf16 %v283
    %v768 = vunpack.c.l.s8.bf16 %v284
    %v769 = vunpack.c.l.s8.bf16 %v285
    %v770 = vunpack.c.h.s8.bf16 %v282
    %v771 = vunpack.c.h.s8.bf16 %v283
    %v772 = vunpack.c.h.s8.bf16 %v284
    %v773 = vunpack.c.h.s8.bf16 %v285
    %v774 = vunpack.c.l.s8.bf16 %v286
    %v775 = vunpack.c.l.s8.bf16 %v287
    %v776 = vunpack.c.l.s8.bf16 %v288
    %v777 = vunpack.c.l.s8.bf16 %v289
    %v778 = vunpack.c.h.s8.bf16 %v286
    %v779 = vunpack.c.h.s8.bf16 %v287
    %v780 = vunpack.c.h.s8.bf16 %v288
    %v781 = vunpack.c.h.s8.bf16 %v289
    %v782 = vunpack.c.l.s8.bf16 %v290
    %v783 = vunpack.c.l.s8.bf16 %v291
    %v784 = vunpack.c.l.s8.bf16 %v292
    %v785 = vunpack.c.l.s8.bf16 %v293
    %v786 = vunpack.c.h.s8.bf16 %v290
    %v787 = vunpack.c.h.s8.bf16 %v291
    %v788 = vunpack.c.h.s8.bf16 %v292
    %v789 = vunpack.c.h.s8.bf16 %v293
    %v790 = vunpack.c.l.s8.bf16 %v294
    %v791 = vunpack.c.l.s8.bf16 %v295
    %v792 = vunpack.c.l.s8.bf16 %v296
    %v793 = vunpack.c.l.s8.bf16 %v297
    %v794 = vunpack.c.h.s8.bf16 %v294
    %v795 = vunpack.c.h.s8.bf16 %v295
    %v796 = vunpack.c.h.s8.bf16 %v296
    %v797 = vunpack.c.h.s8.bf16 %v297
    %v798 = vunpack.c.l.s8.bf16 %v298
    %v799 = vunpack.c.l.s8.bf16 %v299
    %v800 = vunpack.c.l.s8.bf16 %v300
    %v801 = vunpack.c.l.s8.bf16 %v301
    %v802 = vunpack.c.h.s8.bf16 %v298
    %v803 = vunpack.c.h.s8.bf16 %v299
    %v804 = vunpack.c.h.s8.bf16 %v300
    %v805 = vunpack.c.h.s8.bf16 %v301
    %v806 = vunpack.c.l.s8.bf16 %v302
    %v807 = vunpack.c.l.s8.bf16 %v303
    %v808 = vunpack.c.l.s8.bf16 %v304
    %v809 = vunpack.c.l.s8.bf16 %v305
    %v810 = vunpack.c.h.s8.bf16 %v302
    %v811 = vunpack.c.h.s8.bf16 %v303
    %v812 = vunpack.c.h.s8.bf16 %v304
    %v813 = vunpack.c.h.s8.bf16 %v305
    %v814 = vunpack.c.l.s8.bf16 %v306
    %v815 = vunpack.c.l.s8.bf16 %v307
    %v816 = vunpack.c.l.s8.bf16 %v308
    %v817 = vunpack.c.l.s8.bf16 %v309
    %v818 = vunpack.c.h.s8.bf16 %v306
    %v819 = vunpack.c.h.s8.bf16 %v307
    %v820 = vunpack.c.h.s8.bf16 %v308
    %v821 = vunpack.c.h.s8.bf16 %v309
    %v822 = vld [vmem:[%s0] sm:$0xff]
    %v823 = vld [vmem:[%s0 + $0x8] sm:$0xff]
    %v824 = vld [vmem:[%s0 + $0x10] sm:$0xff]
    %v825 = vld [vmem:[%s0 + $0x18] sm:$0xff]
    %v826 = vld [vmem:[%s0 + $0x20] sm:$0xff]
    %v827 = vld [vmem:[%s0 + $0x28] sm:$0xff]
    %v828 = vld [vmem:[%s0 + $0x30] sm:$0xff]
    %v829 = vld [vmem:[%s0 + $0x38] sm:$0xff]
    %v830 = vld [vmem:[%s0 + $0x40] sm:$0xff]
    %v831 = vld [vmem:[%s0 + $0x48] sm:$0xff]
    %v832 = vld [vmem:[%s0 + $0x50] sm:$0xff]
    %v833 = vld [vmem:[%s0 + $0x58] sm:$0xff]
    %v834 = vld [vmem:[%s0 + $0x60] sm:$0xff]
    %v835 = vld [vmem:[%s0 + $0x68] sm:$0xff]
    %v836 = vld [vmem:[%s0 + $0x70] sm:$0xff]
    %v837 = vld [vmem:[%s0 + $0x78] sm:$0xff]
    %v854 = vunpack.c.l.b16 %v822
    %v855 = vunpack.c.h.b16 %v822
    %v856 = vunpack.c.l.b16 %v823
    %v857 = vunpack.c.h.b16 %v823
    %v858 = vunpack.c.l.b16 %v824
    %v859 = vunpack.c.h.b16 %v824
    %v860 = vunpack.c.l.b16 %v825
    %v861 = vunpack.c.h.b16 %v825
    %v862 = vunpack.c.l.b16 %v826
    %v863 = vunpack.c.h.b16 %v826
    %v864 = vunpack.c.l.b16 %v827
    %v865 = vunpack.c.h.b16 %v827
    %v866 = vunpack.c.l.b16 %v828
    %v867 = vunpack.c.h.b16 %v828
    %v868 = vunpack.c.l.b16 %v829
    %v869 = vunpack.c.h.b16 %v829
    %v870 = vunpack.c.l.b16 %v830
    %v871 = vunpack.c.h.b16 %v830
    %v872 = vunpack.c.l.b16 %v831
    %v873 = vunpack.c.h.b16 %v831
    %v874 = vunpack.c.l.b16 %v832
    %v875 = vunpack.c.h.b16 %v832
    %v876 = vunpack.c.l.b16 %v833
    %v877 = vunpack.c.h.b16 %v833
    %v878 = vunpack.c.l.b16 %v834
    %v879 = vunpack.c.h.b16 %v834
    %v880 = vunpack.c.l.b16 %v835
    %v881 = vunpack.c.h.b16 %v835
    %v882 = vunpack.c.l.b16 %v836
    %v883 = vunpack.c.h.b16 %v836
    %v884 = vunpack.c.l.b16 %v837
    %v885 = vunpack.c.h.b16 %v837
    %v886 = vpack.c.b16 %v870, %v854
    %v887 = vpack.c.b16 %v871, %v855
    %v888 = vpack.c.b16 %v872, %v856
    %v889 = vpack.c.b16 %v873, %v857
    %v890 = vpack.c.b16 %v874, %v858
    %v891 = vpack.c.b16 %v875, %v859
    %v892 = vpack.c.b16 %v876, %v860
    %v893 = vpack.c.b16 %v877, %v861
    %v894 = vpack.c.b16 %v878, %v862
    %v895 = vpack.c.b16 %v879, %v863
    %v896 = vpack.c.b16 %v880, %v864
    %v897 = vpack.c.b16 %v881, %v865
    %v898 = vpack.c.b16 %v882, %v866
    %v899 = vpack.c.b16 %v883, %v867
    %v900 = vpack.c.b16 %v884, %v868
    %v901 = vpack.c.b16 %v885, %v869
    %918 = vmatprep.subr.bf16.mxu0 %v311
    %919 = vmatpush1.bf16.msra.mxu0 %v310
    %920 = vmatprep.subr.bf16.mxu0 %v315
    %921 = vmatpush1.bf16.msra.mxu0 %v314
    %922 = vmatprep.subr.bf16.mxu0 %v319
    %923 = vmatpush1.bf16.msra.mxu0 %v318
    %924 = vmatprep.subr.bf16.mxu0 %v323
    %925 = vmatpush1.bf16.msra.mxu0 %v322
    %926 = vmatprep.subr.bf16.mxu0 %v327
    %927 = vmatpush1.bf16.msra.mxu0 %v326
    %928 = vmatprep.subr.bf16.mxu0 %v331
    %929 = vmatpush1.bf16.msra.mxu0 %v330
    %930 = vmatprep.subr.bf16.mxu0 %v335
    %931 = vmatpush1.bf16.msra.mxu0 %v334
    %932 = vmatprep.subr.bf16.mxu0 %v339
    %933 = vmatpush1.bf16.msra.mxu0 %v338
    %934 = vmatprep.subr.bf16.mxu0 %v343
    %935 = vmatpush1.bf16.msra.mxu0 %v342
    %936 = vmatprep.subr.bf16.mxu0 %v347
    %937 = vmatpush1.bf16.msra.mxu0 %v346
    %938 = vmatprep.subr.bf16.mxu0 %v351
    %939 = vmatpush1.bf16.msra.mxu0 %v350
    %940 = vmatprep.subr.bf16.mxu0 %v355
    %941 = vmatpush1.bf16.msra.mxu0 %v354
    %942 = vmatprep.subr.bf16.mxu0 %v359
    %943 = vmatpush1.bf16.msra.mxu0 %v358
    %944 = vmatprep.subr.bf16.mxu0 %v363
    %945 = vmatpush1.bf16.msra.mxu0 %v362
    %946 = vmatprep.subr.bf16.mxu0 %v367
    %947 = vmatpush1.bf16.msra.mxu0 %v366
    %948 = vmatprep.subr.bf16.mxu0 %v371
    %949 = vmatpush1.bf16.msra.mxu0 %v370
    %950 = vmatprep.mubr.bf16.mxu0 %v887
    %951 = vmatmul.mubr.bf16.gmra.mrb[0].mxu0 %v886
    %v952 = vpop.f32.mrb[0].mxu0
    %v953 = vadd.f32 0.0, %v952
    %v954 = vpop.f32.mrb[0].mxu0
    %v955 = vadd.f32 0.0, %v954
    %v956 = vpop.f32.mrb[0].mxu0
    %v957 = vadd.f32 0.0, %v956
    %v958 = vpop.f32.mrb[0].mxu0
    %v959 = vadd.f32 0.0, %v958
    %960 = vdwg.mxu0
    %961 = vmatprep.subr.bf16.mxu0 %v375
    %962 = vmatpush1.bf16.msra.mxu0 %v374
    %963 = vmatprep.subr.bf16.mxu0 %v379
    %964 = vmatpush1.bf16.msra.mxu0 %v378
    %965 = vmatprep.subr.bf16.mxu0 %v383
    %966 = vmatpush1.bf16.msra.mxu0 %v382
    %967 = vmatprep.subr.bf16.mxu0 %v387
    %968 = vmatpush1.bf16.msra.mxu0 %v386
    %969 = vmatprep.subr.bf16.mxu0 %v391
    %970 = vmatpush1.bf16.msra.mxu0 %v390
    %971 = vmatprep.subr.bf16.mxu0 %v395
    %972 = vmatpush1.bf16.msra.mxu0 %v394
    %973 = vmatprep.subr.bf16.mxu0 %v399
    %974 = vmatpush1.bf16.msra.mxu0 %v398
    %975 = vmatprep.subr.bf16.mxu0 %v403
    %976 = vmatpush1.bf16.msra.mxu0 %v402
    %977 = vmatprep.subr.bf16.mxu0 %v407
    %978 = vmatpush1.bf16.msra.mxu0 %v406
    %979 = vmatprep.subr.bf16.mxu0 %v411
    %980 = vmatpush1.bf16.msra.mxu0 %v410
    %981 = vmatprep.subr.bf16.mxu0 %v415
    %982 = vmatpush1.bf16.msra.mxu0 %v414
    %983 = vmatprep.subr.bf16.mxu0 %v419
    %984 = vmatpush1.bf16.msra.mxu0 %v418
    %985 = vmatprep.subr.bf16.mxu0 %v423
    %986 = vmatpush1.bf16.msra.mxu0 %v422
    %987 = vmatprep.subr.bf16.mxu0 %v427
    %988 = vmatpush1.bf16.msra.mxu0 %v426
    %989 = vmatprep.subr.bf16.mxu0 %v431
    %990 = vmatpush1.bf16.msra.mxu0 %v430
    %991 = vmatprep.subr.bf16.mxu0 %v435
    %992 = vmatpush1.bf16.msra.mxu0 %v434
    %993 = vmatprep.mubr.bf16.mxu0 %v889
    %994 = vmatmul.mubr.bf16.gmra.mrb[0].mxu0 %v888
    %v995 = vpop.f32.mrb[0].mxu0
    %v996 = vadd.f32 %v953, %v995
    %v997 = vpop.f32.mrb[0].mxu0
    %v998 = vadd.f32 %v955, %v997
    %v999 = vpop.f32.mrb[0].mxu0
    %v1000 = vadd.f32 %v957, %v999
    %v1001 = vpop.f32.mrb[0].mxu0
    %v1002 = vadd.f32 %v959, %v1001
    %1003 = vdwg.mxu0
    %1004 = vmatprep.subr.bf16.mxu0 %v439
    %1005 = vmatpush1.bf16.msra.mxu0 %v438
    %1006 = vmatprep.subr.bf16.mxu0 %v443
    %1007 = vmatpush1.bf16.msra.mxu0 %v442
    %1008 = vmatprep.subr.bf16.mxu0 %v447
    %1009 = vmatpush1.bf16.msra.mxu0 %v446
    %1010 = vmatprep.subr.bf16.mxu0 %v451
    %1011 = vmatpush1.bf16.msra.mxu0 %v450
    %1012 = vmatprep.subr.bf16.mxu0 %v455
    %1013 = vmatpush1.bf16.msra.mxu0 %v454
    %1014 = vmatprep.subr.bf16.mxu0 %v459
    %1015 = vmatpush1.bf16.msra.mxu0 %v458
    %1016 = vmatprep.subr.bf16.mxu0 %v463
    %1017 = vmatpush1.bf16.msra.mxu0 %v462
    %1018 = vmatprep.subr.bf16.mxu0 %v467
    %1019 = vmatpush1.bf16.msra.mxu0 %v466
    %1020 = vmatprep.subr.bf16.mxu0 %v471
    %1021 = vmatpush1.bf16.msra.mxu0 %v470
    %1022 = vmatprep.subr.bf16.mxu0 %v475
    %1023 = vmatpush1.bf16.msra.mxu0 %v474
    %1024 = vmatprep.subr.bf16.mxu0 %v479
    %1025 = vmatpush1.bf16.msra.mxu0 %v478
    %1026 = vmatprep.subr.bf16.mxu0 %v483
    %1027 = vmatpush1.bf16.msra.mxu0 %v482
    %1028 = vmatprep.subr.bf16.mxu0 %v487
    %1029 = vmatpush1.bf16.msra.mxu0 %v486
    %1030 = vmatprep.subr.bf16.mxu0 %v491
    %1031 = vmatpush1.bf16.msra.mxu0 %v490
    %1032 = vmatprep.subr.bf16.mxu0 %v495
    %1033 = vmatpush1.bf16.msra.mxu0 %v494
    %1034 = vmatprep.subr.bf16.mxu0 %v499
    %1035 = vmatpush1.bf16.msra.mxu0 %v498
    %1036 = vmatprep.mubr.bf16.mxu0 %v891
    %1037 = vmatmul.mubr.bf16.gmra.mrb[0].mxu0 %v890
    %v1038 = vpop.f32.mrb[0].mxu0
    %v1039 = vadd.f32 %v996, %v1038
    %v1040 = vpop.f32.mrb[0].mxu0
    %v1041 = vadd.f32 %v998, %v1040
    %v1042 = vpop.f32.mrb[0].mxu0
    %v1043 = vadd.f32 %v1000, %v1042
    %v1044 = vpop.f32.mrb[0].mxu0
    %v1045 = vadd.f32 %v1002, %v1044
    %1046 = vdwg.mxu0
    %1047 = vmatprep.subr.bf16.mxu0 %v503
    %1048 = vmatpush1.bf16.msra.mxu0 %v502
    %1049 = vmatprep.subr.bf16.mxu0 %v507
    %1050 = vmatpush1.bf16.msra.mxu0 %v506
    %1051 = vmatprep.subr.bf16.mxu0 %v511
    %1052 = vmatpush1.bf16.msra.mxu0 %v510
    %1053 = vmatprep.subr.bf16.mxu0 %v515
    %1054 = vmatpush1.bf16.msra.mxu0 %v514
    %1055 = vmatprep.subr.bf16.mxu0 %v519
    %1056 = vmatpush1.bf16.msra.mxu0 %v518
    %1057 = vmatprep.subr.bf16.mxu0 %v523
    %1058 = vmatpush1.bf16.msra.mxu0 %v522
    %1059 = vmatprep.subr.bf16.mxu0 %v527
    %1060 = vmatpush1.bf16.msra.mxu0 %v526
    %1061 = vmatprep.subr.bf16.mxu0 %v531
    %1062 = vmatpush1.bf16.msra.mxu0 %v530
    %1063 = vmatprep.subr.bf16.mxu0 %v535
    %1064 = vmatpush1.bf16.msra.mxu0 %v534
    %1065 = vmatprep.subr.bf16.mxu0 %v539
    %1066 = vmatpush1.bf16.msra.mxu0 %v538
    %1067 = vmatprep.subr.bf16.mxu0 %v543
    %1068 = vmatpush1.bf16.msra.mxu0 %v542
    %1069 = vmatprep.subr.bf16.mxu0 %v547
    %1070 = vmatpush1.bf16.msra.mxu0 %v546
    %1071 = vmatprep.subr.bf16.mxu0 %v551
    %1072 = vmatpush1.bf16.msra.mxu0 %v550
    %1073 = vmatprep.subr.bf16.mxu0 %v555
    %1074 = vmatpush1.bf16.msra.mxu0 %v554
    %1075 = vmatprep.subr.bf16.mxu0 %v559
    %1076 = vmatpush1.bf16.msra.mxu0 %v558
    %1077 = vmatprep.subr.bf16.mxu0 %v563
    %1078 = vmatpush1.bf16.msra.mxu0 %v562
    %1079 = vmatprep.mubr.bf16.mxu0 %v893
    %1080 = vmatmul.mubr.bf16.gmra.mrb[0].mxu0 %v892
    %v1081 = vpop.f32.mrb[0].mxu0
    %v1082 = vadd.f32 %v1039, %v1081
    %v1083 = vpop.f32.mrb[0].mxu0
    %v1084 = vadd.f32 %v1041, %v1083
    %v1085 = vpop.f32.mrb[0].mxu0
    %v1086 = vadd.f32 %v1043, %v1085
    %v1087 = vpop.f32.mrb[0].mxu0
    %v1088 = vadd.f32 %v1045, %v1087
    %1089 = vdwg.mxu0
    %1090 = vmatprep.subr.bf16.mxu0 %v567
    %1091 = vmatpush1.bf16.msra.mxu0 %v566
    %1092 = vmatprep.subr.bf16.mxu0 %v571
    %1093 = vmatpush1.bf16.msra.mxu0 %v570
    %1094 = vmatprep.subr.bf16.mxu0 %v575
    %1095 = vmatpush1.bf16.msra.mxu0 %v574
    %1096 = vmatprep.subr.bf16.mxu0 %v579
    %1097 = vmatpush1.bf16.msra.mxu0 %v578
    %1098 = vmatprep.subr.bf16.mxu0 %v583
    %1099 = vmatpush1.bf16.msra.mxu0 %v582
    %1100 = vmatprep.subr.bf16.mxu0 %v587
    %1101 = vmatpush1.bf16.msra.mxu0 %v586
    %1102 = vmatprep.subr.bf16.mxu0 %v591
    %1103 = vmatpush1.bf16.msra.mxu0 %v590
    %1104 = vmatprep.subr.bf16.mxu0 %v595
    %1105 = vmatpush1.bf16.msra.mxu0 %v594
    %1106 = vmatprep.subr.bf16.mxu0 %v599
    %1107 = vmatpush1.bf16.msra.mxu0 %v598
    %1108 = vmatprep.subr.bf16.mxu0 %v603
    %1109 = vmatpush1.bf16.msra.mxu0 %v602
    %1110 = vmatprep.subr.bf16.mxu0 %v607
    %1111 = vmatpush1.bf16.msra.mxu0 %v606
    %1112 = vmatprep.subr.bf16.mxu0 %v611
    %1113 = vmatpush1.bf16.msra.mxu0 %v610
    %1114 = vmatprep.subr.bf16.mxu0 %v615
    %1115 = vmatpush1.bf16.msra.mxu0 %v614
    %1116 = vmatprep.subr.bf16.mxu0 %v619
    %1117 = vmatpush1.bf16.msra.mxu0 %v618
    %1118 = vmatprep.subr.bf16.mxu0 %v623
    %1119 = vmatpush1.bf16.msra.mxu0 %v622
    %1120 = vmatprep.subr.bf16.mxu0 %v627
    %1121 = vmatpush1.bf16.msra.mxu0 %v626
    %1122 = vmatprep.mubr.bf16.mxu0 %v895
    %1123 = vmatmul.mubr.bf16.gmra.mrb[0].mxu0 %v894
    %v1124 = vpop.f32.mrb[0].mxu0
    %v1125 = vadd.f32 %v1082, %v1124
    %v1126 = vpop.f32.mrb[0].mxu0
    %v1127 = vadd.f32 %v1084, %v1126
    %v1128 = vpop.f32.mrb[0].mxu0
    %v1129 = vadd.f32 %v1086, %v1128
    %v1130 = vpop.f32.mrb[0].mxu0
    %v1131 = vadd.f32 %v1088, %v1130
    %1132 = vdwg.mxu0
    %1133 = vmatprep.subr.bf16.mxu0 %v631
    %1134 = vmatpush1.bf16.msra.mxu0 %v630
    %1135 = vmatprep.subr.bf16.mxu0 %v635
    %1136 = vmatpush1.bf16.msra.mxu0 %v634
    %1137 = vmatprep.subr.bf16.mxu0 %v639
    %1138 = vmatpush1.bf16.msra.mxu0 %v638
    %1139 = vmatprep.subr.bf16.mxu0 %v643
    %1140 = vmatpush1.bf16.msra.mxu0 %v642
    %1141 = vmatprep.subr.bf16.mxu0 %v647
    %1142 = vmatpush1.bf16.msra.mxu0 %v646
    %1143 = vmatprep.subr.bf16.mxu0 %v651
    %1144 = vmatpush1.bf16.msra.mxu0 %v650
    %1145 = vmatprep.subr.bf16.mxu0 %v655
    %1146 = vmatpush1.bf16.msra.mxu0 %v654
    %1147 = vmatprep.subr.bf16.mxu0 %v659
    %1148 = vmatpush1.bf16.msra.mxu0 %v658
    %1149 = vmatprep.subr.bf16.mxu0 %v663
    %1150 = vmatpush1.bf16.msra.mxu0 %v662
    %1151 = vmatprep.subr.bf16.mxu0 %v667
    %1152 = vmatpush1.bf16.msra.mxu0 %v666
    %1153 = vmatprep.subr.bf16.mxu0 %v671
    %1154 = vmatpush1.bf16.msra.mxu0 %v670
    %1155 = vmatprep.subr.bf16.mxu0 %v675
    %1156 = vmatpush1.bf16.msra.mxu0 %v674
    %1157 = vmatprep.subr.bf16.mxu0 %v679
    %1158 = vmatpush1.bf16.msra.mxu0 %v678
    %1159 = vmatprep.subr.bf16.mxu0 %v683
    %1160 = vmatpush1.bf16.msra.mxu0 %v682
    %1161 = vmatprep.subr.bf16.mxu0 %v687
    %1162 = vmatpush1.bf16.msra.mxu0 %v686
    %1163 = vmatprep.subr.bf16.mxu0 %v691
    %1164 = vmatpush1.bf16.msra.mxu0 %v690
    %1165 = vmatprep.mubr.bf16.mxu0 %v897
    %1166 = vmatmul.mubr.bf16.gmra.mrb[0].mxu0 %v896
    %v1167 = vpop.f32.mrb[0].mxu0
    %v1168 = vadd.f32 %v1125, %v1167
    %v1169 = vpop.f32.mrb[0].mxu0
    %v1170 = vadd.f32 %v1127, %v1169
    %v1171 = vpop.f32.mrb[0].mxu0
    %v1172 = vadd.f32 %v1129, %v1171
    %v1173 = vpop.f32.mrb[0].mxu0
    %v1174 = vadd.f32 %v1131, %v1173
    %1175 = vdwg.mxu0
    %1176 = vmatprep.subr.bf16.mxu0 %v695
    %1177 = vmatpush1.bf16.msra.mxu0 %v694
    %1178 = vmatprep.subr.bf16.mxu0 %v699
    %1179 = vmatpush1.bf16.msra.mxu0 %v698
    %1180 = vmatprep.subr.bf16.mxu0 %v703
    %1181 = vmatpush1.bf16.msra.mxu0 %v702
    %1182 = vmatprep.subr.bf16.mxu0 %v707
    %1183 = vmatpush1.bf16.msra.mxu0 %v706
    %1184 = vmatprep.subr.bf16.mxu0 %v711
    %1185 = vmatpush1.bf16.msra.mxu0 %v710
    %1186 = vmatprep.subr.bf16.mxu0 %v715
    %1187 = vmatpush1.bf16.msra.mxu0 %v714
    %1188 = vmatprep.subr.bf16.mxu0 %v719
    %1189 = vmatpush1.bf16.msra.mxu0 %v718
    %1190 = vmatprep.subr.bf16.mxu0 %v723
    %1191 = vmatpush1.bf16.msra.mxu0 %v722
    %1192 = vmatprep.subr.bf16.mxu0 %v727
    %1193 = vmatpush1.bf16.msra.mxu0 %v726
    %1194 = vmatprep.subr.bf16.mxu0 %v731
    %1195 = vmatpush1.bf16.msra.mxu0 %v730
    %1196 = vmatprep.subr.bf16.mxu0 %v735
    %1197 = vmatpush1.bf16.msra.mxu0 %v734
    %1198 = vmatprep.subr.bf16.mxu0 %v739
    %1199 = vmatpush1.bf16.msra.mxu0 %v738
    %1200 = vmatprep.subr.bf16.mxu0 %v743
    %1201 = vmatpush1.bf16.msra.mxu0 %v742
    %1202 = vmatprep.subr.bf16.mxu0 %v747
    %1203 = vmatpush1.bf16.msra.mxu0 %v746
    %1204 = vmatprep.subr.bf16.mxu0 %v751
    %1205 = vmatpush1.bf16.msra.mxu0 %v750
    %1206 = vmatprep.subr.bf16.mxu0 %v755
    %1207 = vmatpush1.bf16.msra.mxu0 %v754
    %1208 = vmatprep.mubr.bf16.mxu0 %v899
    %1209 = vmatmul.mubr.bf16.gmra.mrb[0].mxu0 %v898
    %v1210 = vpop.f32.mrb[0].mxu0
    %v1211 = vadd.f32 %v1168, %v1210
    %v1212 = vpop.f32.mrb[0].mxu0
    %v1213 = vadd.f32 %v1170, %v1212
    %v1214 = vpop.f32.mrb[0].mxu0
    %v1215 = vadd.f32 %v1172, %v1214
    %v1216 = vpop.f32.mrb[0].mxu0
    %v1217 = vadd.f32 %v1174, %v1216
    %1218 = vdwg.mxu0
    %1219 = vmatprep.subr.bf16.mxu0 %v759
    %1220 = vmatpush1.bf16.msra.mxu0 %v758
    %1221 = vmatprep.subr.bf16.mxu0 %v763
    %1222 = vmatpush1.bf16.msra.mxu0 %v762
    %1223 = vmatprep.subr.bf16.mxu0 %v767
    %1224 = vmatpush1.bf16.msra.mxu0 %v766
    %1225 = vmatprep.subr.bf16.mxu0 %v771
    %1226 = vmatpush1.bf16.msra.mxu0 %v770
    %1227 = vmatprep.subr.bf16.mxu0 %v775
    %1228 = vmatpush1.bf16.msra.mxu0 %v774
    %1229 = vmatprep.subr.bf16.mxu0 %v779
    %1230 = vmatpush1.bf16.msra.mxu0 %v778
    %1231 = vmatprep.subr.bf16.mxu0 %v783
    %1232 = vmatpush1.bf16.msra.mxu0 %v782
    %1233 = vmatprep.subr.bf16.mxu0 %v787
    %1234 = vmatpush1.bf16.msra.mxu0 %v786
    %1235 = vmatprep.subr.bf16.mxu0 %v791
    %1236 = vmatpush1.bf16.msra.mxu0 %v790
    %1237 = vmatprep.subr.bf16.mxu0 %v795
    %1238 = vmatpush1.bf16.msra.mxu0 %v794
    %1239 = vmatprep.subr.bf16.mxu0 %v799
    %1240 = vmatpush1.bf16.msra.mxu0 %v798
    %1241 = vmatprep.subr.bf16.mxu0 %v803
    %1242 = vmatpush1.bf16.msra.mxu0 %v802
    %1243 = vmatprep.subr.bf16.mxu0 %v807
    %1244 = vmatpush1.bf16.msra.mxu0 %v806
    %1245 = vmatprep.subr.bf16.mxu0 %v811
    %1246 = vmatpush1.bf16.msra.mxu0 %v810
    %1247 = vmatprep.subr.bf16.mxu0 %v815
    %1248 = vmatpush1.bf16.msra.mxu0 %v814
    %1249 = vmatprep.subr.bf16.mxu0 %v819
    %1250 = vmatpush1.bf16.msra.mxu0 %v818
    %1251 = vmatprep.mubr.bf16.mxu0 %v901
    %1252 = vmatmul.mubr.bf16.gmra.mrb[0].mxu0 %v900
    %v1253 = vpop.f32.mrb[0].mxu0
    %v1254 = vadd.f32 %v1211, %v1253
    %v1255 = vpop.f32.mrb[0].mxu0
    %v1256 = vadd.f32 %v1213, %v1255
    %v1257 = vpop.f32.mrb[0].mxu0
    %v1258 = vadd.f32 %v1215, %v1257
    %v1259 = vpop.f32.mrb[0].mxu0
    %v1260 = vadd.f32 %v1217, %v1259
    %1261 = vdwg.mxu0
    %1262 = vmatprep.subr.bf16.mxu0 %v313
    %1263 = vmatpush1.bf16.msra.mxu0 %v312
    %1264 = vmatprep.subr.bf16.mxu0 %v317
    %1265 = vmatpush1.bf16.msra.mxu0 %v316
    %1266 = vmatprep.subr.bf16.mxu0 %v321
    %1267 = vmatpush1.bf16.msra.mxu0 %v320
    %1268 = vmatprep.subr.bf16.mxu0 %v325
    %1269 = vmatpush1.bf16.msra.mxu0 %v324
    %1270 = vmatprep.subr.bf16.mxu0 %v329
    %1271 = vmatpush1.bf16.msra.mxu0 %v328
    %1272 = vmatprep.subr.bf16.mxu0 %v333
    %1273 = vmatpush1.bf16.msra.mxu0 %v332
    %1274 = vmatprep.subr.bf16.mxu0 %v337
    %1275 = vmatpush1.bf16.msra.mxu0 %v336
    %1276 = vmatprep.subr.bf16.mxu0 %v341
    %1277 = vmatpush1.bf16.msra.mxu0 %v340
    %1278 = vmatprep.subr.bf16.mxu0 %v345
    %1279 = vmatpush1.bf16.msra.mxu0 %v344
    %1280 = vmatprep.subr.bf16.mxu0 %v349
    %1281 = vmatpush1.bf16.msra.mxu0 %v348
    %1282 = vmatprep.subr.bf16.mxu0 %v353
    %1283 = vmatpush1.bf16.msra.mxu0 %v352
    %1284 = vmatprep.subr.bf16.mxu0 %v357
    %1285 = vmatpush1.bf16.msra.mxu0 %v356
    %1286 = vmatprep.subr.bf16.mxu0 %v361
    %1287 = vmatpush1.bf16.msra.mxu0 %v360
    %1288 = vmatprep.subr.bf16.mxu0 %v365
    %1289 = vmatpush1.bf16.msra.mxu0 %v364
    %1290 = vmatprep.subr.bf16.mxu0 %v369
    %1291 = vmatpush1.bf16.msra.mxu0 %v368
    %1292 = vmatprep.subr.bf16.mxu0 %v373
    %1293 = vmatpush1.bf16.msra.mxu0 %v372
    %1294 = vmatprep.mubr.bf16.mxu0 %v887
    %1295 = vmatmul.mubr.bf16.gmra.mrb[0].mxu0 %v886
    %v1296 = vpop.f32.mrb[0].mxu0
    %v1297 = vadd.f32 0.0, %v1296
    %v1298 = vpop.f32.mrb[0].mxu0
    %v1299 = vadd.f32 0.0, %v1298
    %v1300 = vpop.f32.mrb[0].mxu0
    %v1301 = vadd.f32 0.0, %v1300
    %v1302 = vpop.f32.mrb[0].mxu0
    %v1303 = vadd.f32 0.0, %v1302
    %1304 = vdwg.mxu0
    %1305 = vmatprep.subr.bf16.mxu0 %v377
    %1306 = vmatpush1.bf16.msra.mxu0 %v376
    %1307 = vmatprep.subr.bf16.mxu0 %v381
    %1308 = vmatpush1.bf16.msra.mxu0 %v380
    %1309 = vmatprep.subr.bf16.mxu0 %v385
    %1310 = vmatpush1.bf16.msra.mxu0 %v384
    %1311 = vmatprep.subr.bf16.mxu0 %v389
    %1312 = vmatpush1.bf16.msra.mxu0 %v388
    %1313 = vmatprep.subr.bf16.mxu0 %v393
    %1314 = vmatpush1.bf16.msra.mxu0 %v392
    %1315 = vmatprep.subr.bf16.mxu0 %v397
    %1316 = vmatpush1.bf16.msra.mxu0 %v396
    %1317 = vmatprep.subr.bf16.mxu0 %v401
    %1318 = vmatpush1.bf16.msra.mxu0 %v400
    %1319 = vmatprep.subr.bf16.mxu0 %v405
    %1320 = vmatpush1.bf16.msra.mxu0 %v404
    %1321 = vmatprep.subr.bf16.mxu0 %v409
    %1322 = vmatpush1.bf16.msra.mxu0 %v408
    %1323 = vmatprep.subr.bf16.mxu0 %v413
    %1324 = vmatpush1.bf16.msra.mxu0 %v412
    %1325 = vmatprep.subr.bf16.mxu0 %v417
    %1326 = vmatpush1.bf16.msra.mxu0 %v416
    %1327 = vmatprep.subr.bf16.mxu0 %v421
    %1328 = vmatpush1.bf16.msra.mxu0 %v420
    %1329 = vmatprep.subr.bf16.mxu0 %v425
    %1330 = vmatpush1.bf16.msra.mxu0 %v424
    %1331 = vmatprep.subr.bf16.mxu0 %v429
    %1332 = vmatpush1.bf16.msra.mxu0 %v428
    %1333 = vmatprep.subr.bf16.mxu0 %v433
    %1334 = vmatpush1.bf16.msra.mxu0 %v432
    %1335 = vmatprep.subr.bf16.mxu0 %v437
    %1336 = vmatpush1.bf16.msra.mxu0 %v436
    %1337 = vmatprep.mubr.bf16.mxu0 %v889
    %1338 = vmatmul.mubr.bf16.gmra.mrb[0].mxu0 %v888
    %v1339 = vpop.f32.mrb[0].mxu0
    %v1340 = vadd.f32 %v1297, %v1339
    %v1341 = vpop.f32.mrb[0].mxu0
    %v1342 = vadd.f32 %v1299, %v1341
    %v1343 = vpop.f32.mrb[0].mxu0
    %v1344 = vadd.f32 %v1301, %v1343
    %v1345 = vpop.f32.mrb[0].mxu0
    %v1346 = vadd.f32 %v1303, %v1345
    %1347 = vdwg.mxu0
    %1348 = vmatprep.subr.bf16.mxu0 %v441
    %1349 = vmatpush1.bf16.msra.mxu0 %v440
    %1350 = vmatprep.subr.bf16.mxu0 %v445
    %1351 = vmatpush1.bf16.msra.mxu0 %v444
    %1352 = vmatprep.subr.bf16.mxu0 %v449
    %1353 = vmatpush1.bf16.msra.mxu0 %v448
    %1354 = vmatprep.subr.bf16.mxu0 %v453
    %1355 = vmatpush1.bf16.msra.mxu0 %v452
    %1356 = vmatprep.subr.bf16.mxu0 %v457
    %1357 = vmatpush1.bf16.msra.mxu0 %v456
    %1358 = vmatprep.subr.bf16.mxu0 %v461
    %1359 = vmatpush1.bf16.msra.mxu0 %v460
    %1360 = vmatprep.subr.bf16.mxu0 %v465
    %1361 = vmatpush1.bf16.msra.mxu0 %v464
    %1362 = vmatprep.subr.bf16.mxu0 %v469
    %1363 = vmatpush1.bf16.msra.mxu0 %v468
    %1364 = vmatprep.subr.bf16.mxu0 %v473
    %1365 = vmatpush1.bf16.msra.mxu0 %v472
    %1366 = vmatprep.subr.bf16.mxu0 %v477
    %1367 = vmatpush1.bf16.msra.mxu0 %v476
    %1368 = vmatprep.subr.bf16.mxu0 %v481
    %1369 = vmatpush1.bf16.msra.mxu0 %v480
    %1370 = vmatprep.subr.bf16.mxu0 %v485
    %1371 = vmatpush1.bf16.msra.mxu0 %v484
    %1372 = vmatprep.subr.bf16.mxu0 %v489
    %1373 = vmatpush1.bf16.msra.mxu0 %v488
    %1374 = vmatprep.subr.bf16.mxu0 %v493
    %1375 = vmatpush1.bf16.msra.mxu0 %v492
    %1376 = vmatprep.subr.bf16.mxu0 %v497
    %1377 = vmatpush1.bf16.msra.mxu0 %v496
    %1378 = vmatprep.subr.bf16.mxu0 %v501
    %1379 = vmatpush1.bf16.msra.mxu0 %v500
    %1380 = vmatprep.mubr.bf16.mxu0 %v891
    %1381 = vmatmul.mubr.bf16.gmra.mrb[0].mxu0 %v890
    %v1382 = vpop.f32.mrb[0].mxu0
    %v1383 = vadd.f32 %v1340, %v1382
    %v1384 = vpop.f32.mrb[0].mxu0
    %v1385 = vadd.f32 %v1342, %v1384
    %v1386 = vpop.f32.mrb[0].mxu0
    %v1387 = vadd.f32 %v1344, %v1386
    %v1388 = vpop.f32.mrb[0].mxu0
    %v1389 = vadd.f32 %v1346, %v1388
    %1390 = vdwg.mxu0
    %1391 = vmatprep.subr.bf16.mxu0 %v505
    %1392 = vmatpush1.bf16.msra.mxu0 %v504
    %1393 = vmatprep.subr.bf16.mxu0 %v509
    %1394 = vmatpush1.bf16.msra.mxu0 %v508
    %1395 = vmatprep.subr.bf16.mxu0 %v513
    %1396 = vmatpush1.bf16.msra.mxu0 %v512
    %1397 = vmatprep.subr.bf16.mxu0 %v517
    %1398 = vmatpush1.bf16.msra.mxu0 %v516
    %1399 = vmatprep.subr.bf16.mxu0 %v521
    %1400 = vmatpush1.bf16.msra.mxu0 %v520
    %1401 = vmatprep.subr.bf16.mxu0 %v525
    %1402 = vmatpush1.bf16.msra.mxu0 %v524
    %1403 = vmatprep.subr.bf16.mxu0 %v529
    %1404 = vmatpush1.bf16.msra.mxu0 %v528
    %1405 = vmatprep.subr.bf16.mxu0 %v533
    %1406 = vmatpush1.bf16.msra.mxu0 %v532
    %1407 = vmatprep.subr.bf16.mxu0 %v537
    %1408 = vmatpush1.bf16.msra.mxu0 %v536
    %1409 = vmatprep.subr.bf16.mxu0 %v541
    %1410 = vmatpush1.bf16.msra.mxu0 %v540
    %1411 = vmatprep.subr.bf16.mxu0 %v545
    %1412 = vmatpush1.bf16.msra.mxu0 %v544
    %1413 = vmatprep.subr.bf16.mxu0 %v549
    %1414 = vmatpush1.bf16.msra.mxu0 %v548
    %1415 = vmatprep.subr.bf16.mxu0 %v553
    %1416 = vmatpush1.bf16.msra.mxu0 %v552
    %1417 = vmatprep.subr.bf16.mxu0 %v557
    %1418 = vmatpush1.bf16.msra.mxu0 %v556
    %1419 = vmatprep.subr.bf16.mxu0 %v561
    %1420 = vmatpush1.bf16.msra.mxu0 %v560
    %1421 = vmatprep.subr.bf16.mxu0 %v565
    %1422 = vmatpush1.bf16.msra.mxu0 %v564
    %1423 = vmatprep.mubr.bf16.mxu0 %v893
    %1424 = vmatmul.mubr.bf16.gmra.mrb[0].mxu0 %v892
    %v1425 = vpop.f32.mrb[0].mxu0
    %v1426 = vadd.f32 %v1383, %v1425
    %v1427 = vpop.f32.mrb[0].mxu0
    %v1428 = vadd.f32 %v1385, %v1427
    %v1429 = vpop.f32.mrb[0].mxu0
    %v1430 = vadd.f32 %v1387, %v1429
    %v1431 = vpop.f32.mrb[0].mxu0
    %v1432 = vadd.f32 %v1389, %v1431
    %1433 = vdwg.mxu0
    %1434 = vmatprep.subr.bf16.mxu0 %v569
    %1435 = vmatpush1.bf16.msra.mxu0 %v568
    %1436 = vmatprep.subr.bf16.mxu0 %v573
    %1437 = vmatpush1.bf16.msra.mxu0 %v572
    %1438 = vmatprep.subr.bf16.mxu0 %v577
    %1439 = vmatpush1.bf16.msra.mxu0 %v576
    %1440 = vmatprep.subr.bf16.mxu0 %v581
    %1441 = vmatpush1.bf16.msra.mxu0 %v580
    %1442 = vmatprep.subr.bf16.mxu0 %v585
    %1443 = vmatpush1.bf16.msra.mxu0 %v584
    %1444 = vmatprep.subr.bf16.mxu0 %v589
    %1445 = vmatpush1.bf16.msra.mxu0 %v588
    %1446 = vmatprep.subr.bf16.mxu0 %v593
    %1447 = vmatpush1.bf16.msra.mxu0 %v592
    %1448 = vmatprep.subr.bf16.mxu0 %v597
    %1449 = vmatpush1.bf16.msra.mxu0 %v596
    %1450 = vmatprep.subr.bf16.mxu0 %v601
    %1451 = vmatpush1.bf16.msra.mxu0 %v600
    %1452 = vmatprep.subr.bf16.mxu0 %v605
    %1453 = vmatpush1.bf16.msra.mxu0 %v604
    %1454 = vmatprep.subr.bf16.mxu0 %v609
    %1455 = vmatpush1.bf16.msra.mxu0 %v608
    %1456 = vmatprep.subr.bf16.mxu0 %v613
    %1457 = vmatpush1.bf16.msra.mxu0 %v612
    %1458 = vmatprep.subr.bf16.mxu0 %v617
    %1459 = vmatpush1.bf16.msra.mxu0 %v616
    %1460 = vmatprep.subr.bf16.mxu0 %v621
    %1461 = vmatpush1.bf16.msra.mxu0 %v620
    %1462 = vmatprep.subr.bf16.mxu0 %v625
    %1463 = vmatpush1.bf16.msra.mxu0 %v624
    %1464 = vmatprep.subr.bf16.mxu0 %v629
    %1465 = vmatpush1.bf16.msra.mxu0 %v628
    %1466 = vmatprep.mubr.bf16.mxu0 %v895
    %1467 = vmatmul.mubr.bf16.gmra.mrb[0].mxu0 %v894
    %v1468 = vpop.f32.mrb[0].mxu0
    %v1469 = vadd.f32 %v1426, %v1468
    %v1470 = vpop.f32.mrb[0].mxu0
    %v1471 = vadd.f32 %v1428, %v1470
    %v1472 = vpop.f32.mrb[0].mxu0
    %v1473 = vadd.f32 %v1430, %v1472
    %v1474 = vpop.f32.mrb[0].mxu0
    %v1475 = vadd.f32 %v1432, %v1474
    %1476 = vdwg.mxu0
    %1477 = vmatprep.subr.bf16.mxu0 %v633
    %1478 = vmatpush1.bf16.msra.mxu0 %v632
    %1479 = vmatprep.subr.bf16.mxu0 %v637
    %1480 = vmatpush1.bf16.msra.mxu0 %v636
    %1481 = vmatprep.subr.bf16.mxu0 %v641
    %1482 = vmatpush1.bf16.msra.mxu0 %v640
    %1483 = vmatprep.subr.bf16.mxu0 %v645
    %1484 = vmatpush1.bf16.msra.mxu0 %v644
    %1485 = vmatprep.subr.bf16.mxu0 %v649
    %1486 = vmatpush1.bf16.msra.mxu0 %v648
    %1487 = vmatprep.subr.bf16.mxu0 %v653
    %1488 = vmatpush1.bf16.msra.mxu0 %v652
    %1489 = vmatprep.subr.bf16.mxu0 %v657
    %1490 = vmatpush1.bf16.msra.mxu0 %v656
    %1491 = vmatprep.subr.bf16.mxu0 %v661
    %1492 = vmatpush1.bf16.msra.mxu0 %v660
    %1493 = vmatprep.subr.bf16.mxu0 %v665
    %1494 = vmatpush1.bf16.msra.mxu0 %v664
    %1495 = vmatprep.subr.bf16.mxu0 %v669
    %1496 = vmatpush1.bf16.msra.mxu0 %v668
    %1497 = vmatprep.subr.bf16.mxu0 %v673
    %1498 = vmatpush1.bf16.msra.mxu0 %v672
    %1499 = vmatprep.subr.bf16.mxu0 %v677
    %1500 = vmatpush1.bf16.msra.mxu0 %v676
    %1501 = vmatprep.subr.bf16.mxu0 %v681
    %1502 = vmatpush1.bf16.msra.mxu0 %v680
    %1503 = vmatprep.subr.bf16.mxu0 %v685
    %1504 = vmatpush1.bf16.msra.mxu0 %v684
    %1505 = vmatprep.subr.bf16.mxu0 %v689
    %1506 = vmatpush1.bf16.msra.mxu0 %v688
    %1507 = vmatprep.subr.bf16.mxu0 %v693
    %1508 = vmatpush1.bf16.msra.mxu0 %v692
    %1509 = vmatprep.mubr.bf16.mxu0 %v897
    %1510 = vmatmul.mubr.bf16.gmra.mrb[0].mxu0 %v896
    %v1511 = vpop.f32.mrb[0].mxu0
    %v1512 = vadd.f32 %v1469, %v1511
    %v1513 = vpop.f32.mrb[0].mxu0
    %v1514 = vadd.f32 %v1471, %v1513
    %v1515 = vpop.f32.mrb[0].mxu0
    %v1516 = vadd.f32 %v1473, %v1515
    %v1517 = vpop.f32.mrb[0].mxu0
    %v1518 = vadd.f32 %v1475, %v1517
    %1519 = vdwg.mxu0
    %1520 = vmatprep.subr.bf16.mxu0 %v697
    %1521 = vmatpush1.bf16.msra.mxu0 %v696
    %1522 = vmatprep.subr.bf16.mxu0 %v701
    %1523 = vmatpush1.bf16.msra.mxu0 %v700
    %1524 = vmatprep.subr.bf16.mxu0 %v705
    %1525 = vmatpush1.bf16.msra.mxu0 %v704
    %1526 = vmatprep.subr.bf16.mxu0 %v709
    %1527 = vmatpush1.bf16.msra.mxu0 %v708
    %1528 = vmatprep.subr.bf16.mxu0 %v713
    %1529 = vmatpush1.bf16.msra.mxu0 %v712
    %1530 = vmatprep.subr.bf16.mxu0 %v717
    %1531 = vmatpush1.bf16.msra.mxu0 %v716
    %1532 = vmatprep.subr.bf16.mxu0 %v721
    %1533 = vmatpush1.bf16.msra.mxu0 %v720
    %1534 = vmatprep.subr.bf16.mxu0 %v725
    %1535 = vmatpush1.bf16.msra.mxu0 %v724
    %1536 = vmatprep.subr.bf16.mxu0 %v729
    %1537 = vmatpush1.bf16.msra.mxu0 %v728
    %1538 = vmatprep.subr.bf16.mxu0 %v733
    %1539 = vmatpush1.bf16.msra.mxu0 %v732
    %1540 = vmatprep.subr.bf16.mxu0 %v737
    %1541 = vmatpush1.bf16.msra.mxu0 %v736
    %1542 = vmatprep.subr.bf16.mxu0 %v741
    %1543 = vmatpush1.bf16.msra.mxu0 %v740
    %1544 = vmatprep.subr.bf16.mxu0 %v745
    %1545 = vmatpush1.bf16.msra.mxu0 %v744
    %1546 = vmatprep.subr.bf16.mxu0 %v749
    %1547 = vmatpush1.bf16.msra.mxu0 %v748
    %1548 = vmatprep.subr.bf16.mxu0 %v753
    %1549 = vmatpush1.bf16.msra.mxu0 %v752
    %1550 = vmatprep.subr.bf16.mxu0 %v757
    %1551 = vmatpush1.bf16.msra.mxu0 %v756
    %1552 = vmatprep.mubr.bf16.mxu0 %v899
    %1553 = vmatmul.mubr.bf16.gmra.mrb[0].mxu0 %v898
    %v1554 = vpop.f32.mrb[0].mxu0
    %v1555 = vadd.f32 %v1512, %v1554
    %v1556 = vpop.f32.mrb[0].mxu0
    %v1557 = vadd.f32 %v1514, %v1556
    %v1558 = vpop.f32.mrb[0].mxu0
    %v1559 = vadd.f32 %v1516, %v1558
    %v1560 = vpop.f32.mrb[0].mxu0
    %v1561 = vadd.f32 %v1518, %v1560
    %1562 = vdwg.mxu0
    %1563 = vmatprep.subr.bf16.mxu0 %v761
    %1564 = vmatpush1.bf16.msra.mxu0 %v760
    %1565 = vmatprep.subr.bf16.mxu0 %v765
    %1566 = vmatpush1.bf16.msra.mxu0 %v764
    %1567 = vmatprep.subr.bf16.mxu0 %v769
    %1568 = vmatpush1.bf16.msra.mxu0 %v768
    %1569 = vmatprep.subr.bf16.mxu0 %v773
    %1570 = vmatpush1.bf16.msra.mxu0 %v772
    %1571 = vmatprep.subr.bf16.mxu0 %v777
    %1572 = vmatpush1.bf16.msra.mxu0 %v776
    %1573 = vmatprep.subr.bf16.mxu0 %v781
    %1574 = vmatpush1.bf16.msra.mxu0 %v780
    %1575 = vmatprep.subr.bf16.mxu0 %v785
    %1576 = vmatpush1.bf16.msra.mxu0 %v784
    %1577 = vmatprep.subr.bf16.mxu0 %v789
    %1578 = vmatpush1.bf16.msra.mxu0 %v788
    %1579 = vmatprep.subr.bf16.mxu0 %v793
    %1580 = vmatpush1.bf16.msra.mxu0 %v792
    %1581 = vmatprep.subr.bf16.mxu0 %v797
    %1582 = vmatpush1.bf16.msra.mxu0 %v796
    %1583 = vmatprep.subr.bf16.mxu0 %v801
    %1584 = vmatpush1.bf16.msra.mxu0 %v800
    %1585 = vmatprep.subr.bf16.mxu0 %v805
    %1586 = vmatpush1.bf16.msra.mxu0 %v804
    %1587 = vmatprep.subr.bf16.mxu0 %v809
    %1588 = vmatpush1.bf16.msra.mxu0 %v808
    %1589 = vmatprep.subr.bf16.mxu0 %v813
    %1590 = vmatpush1.bf16.msra.mxu0 %v812
    %1591 = vmatprep.subr.bf16.mxu0 %v817
    %1592 = vmatpush1.bf16.msra.mxu0 %v816
    %1593 = vmatprep.subr.bf16.mxu0 %v821
    %1594 = vmatpush1.bf16.msra.mxu0 %v820
    %1595 = vmatprep.mubr.bf16.mxu0 %v901
    %1596 = vmatmul.mubr.bf16.gmra.mrb[0].mxu0 %v900
    %v1597 = vpop.f32.mrb[0].mxu0
    %v1598 = vadd.f32 %v1555, %v1597
    %v1599 = vpop.f32.mrb[0].mxu0
    %v1600 = vadd.f32 %v1557, %v1599
    %v1601 = vpop.f32.mrb[0].mxu0
    %v1602 = vadd.f32 %v1559, %v1601
    %v1603 = vpop.f32.mrb[0].mxu0
    %v1604 = vadd.f32 %v1561, %v1603
    %1605 = vdwg.mxu0
    %v1606 = vld [vmem:[%s2] sm:$0xf]
    %v1608 = vlaneseq
    %v1609 = vshrl.u32 %v1608, 7
    %v1610 = vsub.s32 0, %v1609
    %v1611 = vrot.slane %v1606, %v1610
    %v1612 = vlaneseq
    %v1613 = vshrl.u32 %v1612, 7
    %v1614 = vsub.s32 1, %v1613
    %v1615 = vrot.slane %v1606, %v1614
    %v1616 = vlaneseq
    %v1617 = vshrl.u32 %v1616, 7
    %v1618 = vsub.s32 2, %v1617
    %v1619 = vrot.slane %v1606, %v1618
    %v1620 = vlaneseq
    %v1621 = vshrl.u32 %v1620, 7
    %v1622 = vsub.s32 3, %v1621
    %v1623 = vrot.slane %v1606, %v1622
    %v1628 = vmul.f32 %v1254, %v1611
    %v1629 = vmul.f32 %v1256, %v1615
    %v1630 = vmul.f32 %v1598, %v1619
    %v1631 = vmul.f32 %v1600, %v1623
    %v1632 = vmul.f32 %v1258, %v1611
    %v1633 = vmul.f32 %v1260, %v1615
    %v1634 = vmul.f32 %v1602, %v1619
    %v1635 = vmul.f32 %v1604, %v1623
    %v1636 = vld [vmem:[%s3] sm:$0xf]
    %v1638 = vlaneseq
    %v1639 = vshrl.u32 %v1638, 7
    %v1640 = vsub.s32 0, %v1639
    %v1641 = vrot.slane %v1636, %v1640
    %v1642 = vlaneseq
    %v1643 = vshrl.u32 %v1642, 7
    %v1644 = vsub.s32 1, %v1643
    %v1645 = vrot.slane %v1636, %v1644
    %v1646 = vlaneseq
    %v1647 = vshrl.u32 %v1646, 7
    %v1648 = vsub.s32 2, %v1647
    %v1649 = vrot.slane %v1636, %v1648
    %v1650 = vlaneseq
    %v1651 = vshrl.u32 %v1650, 7
    %v1652 = vsub.s32 3, %v1651
    %v1653 = vrot.slane %v1636, %v1652
    %v1658 = vadd.f32 %v1628, %v1641
    %v1659 = vadd.f32 %v1629, %v1645
    %v1660 = vadd.f32 %v1630, %v1649
    %v1661 = vadd.f32 %v1631, %v1653
    %v1662 = vadd.f32 %v1632, %v1641
    %v1663 = vadd.f32 %v1633, %v1645
    %v1664 = vadd.f32 %v1634, %v1649
    %v1665 = vadd.f32 %v1635, %v1653
    %v1666 = vmax.f32 %v1658, 0.0
    %v1667 = vmax.f32 %v1659, 0.0
    %v1668 = vmax.f32 %v1660, 0.0
    %v1669 = vmax.f32 %v1661, 0.0
    %v1670 = vmax.f32 %v1662, 0.0
    %v1671 = vmax.f32 %v1663, 0.0
    %v1672 = vmax.f32 %v1664, 0.0
    %v1673 = vmax.f32 %v1665, 0.0
    %v1674 = vld [vmem:[#allocation4] sm:$0xff]
    %v1675 = vld [vmem:[#allocation4 + $0x8] sm:$0xff]
    %v1676 = vld [vmem:[#allocation4 + $0x10] sm:$0xff]
    %v1677 = vld [vmem:[#allocation4 + $0x18] sm:$0xff]
    %v1678 = vld [vmem:[#allocation4 + $0x20] sm:$0xff]
    %v1679 = vld [vmem:[#allocation4 + $0x28] sm:$0xff]
    %v1680 = vld [vmem:[#allocation4 + $0x30] sm:$0xff]
    %v1681 = vld [vmem:[#allocation4 + $0x38] sm:$0xff]
    %v1682 = vld [vmem:[#allocation4 + $0x40] sm:$0xff]
    %v1683 = vld [vmem:[#allocation4 + $0x48] sm:$0xff]
    %v1684 = vld [vmem:[#allocation4 + $0x50] sm:$0xff]
    %v1685 = vld [vmem:[#allocation4 + $0x58] sm:$0xff]
    %v1686 = vld [vmem:[#allocation4 + $0x60] sm:$0xff]
    %v1687 = vld [vmem:[#allocation4 + $0x68] sm:$0xff]
    %v1688 = vld [vmem:[#allocation4 + $0x70] sm:$0xff]
    %v1689 = vld [vmem:[#allocation4 + $0x78] sm:$0xff]
    %v1690 = vld [vmem:[#allocation4 + $0x80] sm:$0xff]
    %v1691 = vld [vmem:[#allocation4 + $0x88] sm:$0xff]
    %v1692 = vld [vmem:[#allocation4 + $0x90] sm:$0xff]
    %v1693 = vld [vmem:[#allocation4 + $0x98] sm:$0xff]
    %v1694 = vld [vmem:[#allocation4 + $0xa0] sm:$0xff]
    %v1695 = vld [vmem:[#allocation4 + $0xa8] sm:$0xff]
    %v1696 = vld [vmem:[#allocation4 + $0xb0] sm:$0xff]
    %v1697 = vld [vmem:[#allocation4 + $0xb8] sm:$0xff]
    %v1698 = vld [vmem:[#allocation4 + $0xc0] sm:$0xff]
    %v1699 = vld [vmem:[#allocation4 + $0xc8] sm:$0xff]
    %v1700 = vld [vmem:[#allocation4 + $0xd0] sm:$0xff]
    %v1701 = vld [vmem:[#allocation4 + $0xd8] sm:$0xff]
    %v1702 = vld [vmem:[#allocation4 + $0xe0] sm:$0xff]
    %v1703 = vld [vmem:[#allocation4 + $0xe8] sm:$0xff]
    %v1704 = vld [vmem:[#allocation4 + $0xf0] sm:$0xff]
    %v1705 = vld [vmem:[#allocation4 + $0xf8] sm:$0xff]
    %v1706 = vld [vmem:[#allocation4 + $0x100] sm:$0xff]
    %v1707 = vld [vmem:[#allocation4 + $0x108] sm:$0xff]
    %v1708 = vld [vmem:[#allocation4 + $0x110] sm:$0xff]
    %v1709 = vld [vmem:[#allocation4 + $0x118] sm:$0xff]
    %v1710 = vld [vmem:[#allocation4 + $0x120] sm:$0xff]
    %v1711 = vld [vmem:[#allocation4 + $0x128] sm:$0xff]
    %v1712 = vld [vmem:[#allocation4 + $0x130] sm:$0xff]
    %v1713 = vld [vmem:[#allocation4 + $0x138] sm:$0xff]
    %v1714 = vld [vmem:[#allocation4 + $0x140] sm:$0xff]
    %v1715 = vld [vmem:[#allocation4 + $0x148] sm:$0xff]
    %v1716 = vld [vmem:[#allocation4 + $0x150] sm:$0xff]
    %v1717 = vld [vmem:[#allocation4 + $0x158] sm:$0xff]
    %v1718 = vld [vmem:[#allocation4 + $0x160] sm:$0xff]
    %v1719 = vld [vmem:[#allocation4 + $0x168] sm:$0xff]
    %v1720 = vld [vmem:[#allocation4 + $0x170] sm:$0xff]
    %v1721 = vld [vmem:[#allocation4 + $0x178] sm:$0xff]
    %v1722 = vld [vmem:[#allocation4 + $0x180] sm:$0xff]
    %v1723 = vld [vmem:[#allocation4 + $0x188] sm:$0xff]
    %v1724 = vld [vmem:[#allocation4 + $0x190] sm:$0xff]
    %v1725 = vld [vmem:[#allocation4 + $0x198] sm:$0xff]
    %v1726 = vld [vmem:[#allocation4 + $0x1a0] sm:$0xff]
    %v1727 = vld [vmem:[#allocation4 + $0x1a8] sm:$0xff]
    %v1728 = vld [vmem:[#allocation4 + $0x1b0] sm:$0xff]
    %v1729 = vld [vmem:[#allocation4 + $0x1b8] sm:$0xff]
    %v1730 = vld [vmem:[#allocation4 + $0x1c0] sm:$0xff]
    %v1731 = vld [vmem:[#allocation4 + $0x1c8] sm:$0xff]
    %v1732 = vld [vmem:[#allocation4 + $0x1d0] sm:$0xff]
    %v1733 = vld [vmem:[#allocation4 + $0x1d8] sm:$0xff]
    %v1734 = vld [vmem:[#allocation4 + $0x1e0] sm:$0xff]
    %v1735 = vld [vmem:[#allocation4 + $0x1e8] sm:$0xff]
    %v1736 = vld [vmem:[#allocation4 + $0x1f0] sm:$0xff]
    %v1737 = vld [vmem:[#allocation4 + $0x1f8] sm:$0xff]
    %v1738 = vld [vmem:[#allocation4 + $0x200] sm:$0xff]
    %v1739 = vld [vmem:[#allocation4 + $0x208] sm:$0xff]
    %v1740 = vld [vmem:[#allocation4 + $0x210] sm:$0xff]
    %v1741 = vld [vmem:[#allocation4 + $0x218] sm:$0xff]
    %v1742 = vld [vmem:[#allocation4 + $0x220] sm:$0xff]
    %v1743 = vld [vmem:[#allocation4 + $0x228] sm:$0xff]
    %v1744 = vld [vmem:[#allocation4 + $0x230] sm:$0xff]
    %v1745 = vld [vmem:[#allocation4 + $0x238] sm:$0xff]
    %v1746 = vld [vmem:[#allocation4 + $0x240] sm:$0xff]
    %v1747 = vld [vmem:[#allocation4 + $0x248] sm:$0xff]
    %v1748 = vld [vmem:[#allocation4 + $0x250] sm:$0xff]
    %v1749 = vld [vmem:[#allocation4 + $0x258] sm:$0xff]
    %v1750 = vld [vmem:[#allocation4 + $0x260] sm:$0xff]
    %v1751 = vld [vmem:[#allocation4 + $0x268] sm:$0xff]
    %v1752 = vld [vmem:[#allocation4 + $0x270] sm:$0xff]
    %v1753 = vld [vmem:[#allocation4 + $0x278] sm:$0xff]
    %v1754 = vld [vmem:[#allocation4 + $0x280] sm:$0xff]
    %v1755 = vld [vmem:[#allocation4 + $0x288] sm:$0xff]
    %v1756 = vld [vmem:[#allocation4 + $0x290] sm:$0xff]
    %v1757 = vld [vmem:[#allocation4 + $0x298] sm:$0xff]
    %v1758 = vld [vmem:[#allocation4 + $0x2a0] sm:$0xff]
    %v1759 = vld [vmem:[#allocation4 + $0x2a8] sm:$0xff]
    %v1760 = vld [vmem:[#allocation4 + $0x2b0] sm:$0xff]
    %v1761 = vld [vmem:[#allocation4 + $0x2b8] sm:$0xff]
    %v1762 = vld [vmem:[#allocation4 + $0x2c0] sm:$0xff]
    %v1763 = vld [vmem:[#allocation4 + $0x2c8] sm:$0xff]
    %v1764 = vld [vmem:[#allocation4 + $0x2d0] sm:$0xff]
    %v1765 = vld [vmem:[#allocation4 + $0x2d8] sm:$0xff]
    %v1766 = vld [vmem:[#allocation4 + $0x2e0] sm:$0xff]
    %v1767 = vld [vmem:[#allocation4 + $0x2e8] sm:$0xff]
    %v1768 = vld [vmem:[#allocation4 + $0x2f0] sm:$0xff]
    %v1769 = vld [vmem:[#allocation4 + $0x2f8] sm:$0xff]
    %v1770 = vld [vmem:[#allocation4 + $0x300] sm:$0xff]
    %v1771 = vld [vmem:[#allocation4 + $0x308] sm:$0xff]
    %v1772 = vld [vmem:[#allocation4 + $0x310] sm:$0xff]
    %v1773 = vld [vmem:[#allocation4 + $0x318] sm:$0xff]
    %v1774 = vld [vmem:[#allocation4 + $0x320] sm:$0xff]
    %v1775 = vld [vmem:[#allocation4 + $0x328] sm:$0xff]
    %v1776 = vld [vmem:[#allocation4 + $0x330] sm:$0xff]
    %v1777 = vld [vmem:[#allocation4 + $0x338] sm:$0xff]
    %v1778 = vld [vmem:[#allocation4 + $0x340] sm:$0xff]
    %v1779 = vld [vmem:[#allocation4 + $0x348] sm:$0xff]
    %v1780 = vld [vmem:[#allocation4 + $0x350] sm:$0xff]
    %v1781 = vld [vmem:[#allocation4 + $0x358] sm:$0xff]
    %v1782 = vld [vmem:[#allocation4 + $0x360] sm:$0xff]
    %v1783 = vld [vmem:[#allocation4 + $0x368] sm:$0xff]
    %v1784 = vld [vmem:[#allocation4 + $0x370] sm:$0xff]
    %v1785 = vld [vmem:[#allocation4 + $0x378] sm:$0xff]
    %v1786 = vld [vmem:[#allocation4 + $0x380] sm:$0xff]
    %v1787 = vld [vmem:[#allocation4 + $0x388] sm:$0xff]
    %v1788 = vld [vmem:[#allocation4 + $0x390] sm:$0xff]
    %v1789 = vld [vmem:[#allocation4 + $0x398] sm:$0xff]
    %v1790 = vld [vmem:[#allocation4 + $0x3a0] sm:$0xff]
    %v1791 = vld [vmem:[#allocation4 + $0x3a8] sm:$0xff]
    %v1792 = vld [vmem:[#allocation4 + $0x3b0] sm:$0xff]
    %v1793 = vld [vmem:[#allocation4 + $0x3b8] sm:$0xff]
    %v1794 = vld [vmem:[#allocation4 + $0x3c0] sm:$0xff]
    %v1795 = vld [vmem:[#allocation4 + $0x3c8] sm:$0xff]
    %v1796 = vld [vmem:[#allocation4 + $0x3d0] sm:$0xff]
    %v1797 = vld [vmem:[#allocation4 + $0x3d8] sm:$0xff]
    %v1798 = vld [vmem:[#allocation4 + $0x3e0] sm:$0xff]
    %v1799 = vld [vmem:[#allocation4 + $0x3e8] sm:$0xff]
    %v1800 = vld [vmem:[#allocation4 + $0x3f0] sm:$0xff]
    %v1801 = vld [vmem:[#allocation4 + $0x3f8] sm:$0xff]
    %v1802 = vld [vmem:[#allocation4 + $0x400] sm:$0xff]
    %v1803 = vld [vmem:[#allocation4 + $0x408] sm:$0xff]
    %v1804 = vld [vmem:[#allocation4 + $0x410] sm:$0xff]
    %v1805 = vld [vmem:[#allocation4 + $0x418] sm:$0xff]
    %v1806 = vld [vmem:[#allocation4 + $0x420] sm:$0xff]
    %v1807 = vld [vmem:[#allocation4 + $0x428] sm:$0xff]
    %v1808 = vld [vmem:[#allocation4 + $0x430] sm:$0xff]
    %v1809 = vld [vmem:[#allocation4 + $0x438] sm:$0xff]
    %v1810 = vld [vmem:[#allocation4 + $0x440] sm:$0xff]
    %v1811 = vld [vmem:[#allocation4 + $0x448] sm:$0xff]
    %v1812 = vld [vmem:[#allocation4 + $0x450] sm:$0xff]
    %v1813 = vld [vmem:[#allocation4 + $0x458] sm:$0xff]
    %v1814 = vld [vmem:[#allocation4 + $0x460] sm:$0xff]
    %v1815 = vld [vmem:[#allocation4 + $0x468] sm:$0xff]
    %v1816 = vld [vmem:[#allocation4 + $0x470] sm:$0xff]
    %v1817 = vld [vmem:[#allocation4 + $0x478] sm:$0xff]
    %v1818 = vld [vmem:[#allocation4 + $0x480] sm:$0xff]
    %v1819 = vld [vmem:[#allocation4 + $0x488] sm:$0xff]
    %v1820 = vld [vmem:[#allocation4 + $0x490] sm:$0xff]
    %v1821 = vld [vmem:[#allocation4 + $0x498] sm:$0xff]
    %v1822 = vld [vmem:[#allocation4 + $0x4a0] sm:$0xff]
    %v1823 = vld [vmem:[#allocation4 + $0x4a8] sm:$0xff]
    %v1824 = vld [vmem:[#allocation4 + $0x4b0] sm:$0xff]
    %v1825 = vld [vmem:[#allocation4 + $0x4b8] sm:$0xff]
    %v1826 = vld [vmem:[#allocation4 + $0x4c0] sm:$0xff]
    %v1827 = vld [vmem:[#allocation4 + $0x4c8] sm:$0xff]
    %v1828 = vld [vmem:[#allocation4 + $0x4d0] sm:$0xff]
    %v1829 = vld [vmem:[#allocation4 + $0x4d8] sm:$0xff]
    %v1830 = vld [vmem:[#allocation4 + $0x4e0] sm:$0xff]
    %v1831 = vld [vmem:[#allocation4 + $0x4e8] sm:$0xff]
    %v1832 = vld [vmem:[#allocation4 + $0x4f0] sm:$0xff]
    %v1833 = vld [vmem:[#allocation4 + $0x4f8] sm:$0xff]
    %v1834 = vld [vmem:[#allocation4 + $0x500] sm:$0xff]
    %v1835 = vld [vmem:[#allocation4 + $0x508] sm:$0xff]
    %v1836 = vld [vmem:[#allocation4 + $0x510] sm:$0xff]
    %v1837 = vld [vmem:[#allocation4 + $0x518] sm:$0xff]
    %v1838 = vld [vmem:[#allocation4 + $0x520] sm:$0xff]
    %v1839 = vld [vmem:[#allocation4 + $0x528] sm:$0xff]
    %v1840 = vld [vmem:[#allocation4 + $0x530] sm:$0xff]
    %v1841 = vld [vmem:[#allocation4 + $0x538] sm:$0xff]
    %v1842 = vld [vmem:[#allocation4 + $0x540] sm:$0xff]
    %v1843 = vld [vmem:[#allocation4 + $0x548] sm:$0xff]
    %v1844 = vld [vmem:[#allocation4 + $0x550] sm:$0xff]
    %v1845 = vld [vmem:[#allocation4 + $0x558] sm:$0xff]
    %v1846 = vld [vmem:[#allocation4 + $0x560] sm:$0xff]
    %v1847 = vld [vmem:[#allocation4 + $0x568] sm:$0xff]
    %v1848 = vld [vmem:[#allocation4 + $0x570] sm:$0xff]
    %v1849 = vld [vmem:[#allocation4 + $0x578] sm:$0xff]
    %v1850 = vld [vmem:[#allocation4 + $0x580] sm:$0xff]
    %v1851 = vld [vmem:[#allocation4 + $0x588] sm:$0xff]
    %v1852 = vld [vmem:[#allocation4 + $0x590] sm:$0xff]
    %v1853 = vld [vmem:[#allocation4 + $0x598] sm:$0xff]
    %v1854 = vld [vmem:[#allocation4 + $0x5a0] sm:$0xff]
    %v1855 = vld [vmem:[#allocation4 + $0x5a8] sm:$0xff]
    %v1856 = vld [vmem:[#allocation4 + $0x5b0] sm:$0xff]
    %v1857 = vld [vmem:[#allocation4 + $0x5b8] sm:$0xff]
    %v1858 = vld [vmem:[#allocation4 + $0x5c0] sm:$0xff]
    %v1859 = vld [vmem:[#allocation4 + $0x5c8] sm:$0xff]
    %v1860 = vld [vmem:[#allocation4 + $0x5d0] sm:$0xff]
    %v1861 = vld [vmem:[#allocation4 + $0x5d8] sm:$0xff]
    %v1862 = vld [vmem:[#allocation4 + $0x5e0] sm:$0xff]
    %v1863 = vld [vmem:[#allocation4 + $0x5e8] sm:$0xff]
    %v1864 = vld [vmem:[#allocation4 + $0x5f0] sm:$0xff]
    %v1865 = vld [vmem:[#allocation4 + $0x5f8] sm:$0xff]
    %v1866 = vld [vmem:[#allocation4 + $0x600] sm:$0xff]
    %v1867 = vld [vmem:[#allocation4 + $0x608] sm:$0xff]
    %v1868 = vld [vmem:[#allocation4 + $0x610] sm:$0xff]
    %v1869 = vld [vmem:[#allocation4 + $0x618] sm:$0xff]
    %v1870 = vld [vmem:[#allocation4 + $0x620] sm:$0xff]
    %v1871 = vld [vmem:[#allocation4 + $0x628] sm:$0xff]
    %v1872 = vld [vmem:[#allocation4 + $0x630] sm:$0xff]
    %v1873 = vld [vmem:[#allocation4 + $0x638] sm:$0xff]
    %v1874 = vld [vmem:[#allocation4 + $0x640] sm:$0xff]
    %v1875 = vld [vmem:[#allocation4 + $0x648] sm:$0xff]
    %v1876 = vld [vmem:[#allocation4 + $0x650] sm:$0xff]
    %v1877 = vld [vmem:[#allocation4 + $0x658] sm:$0xff]
    %v1878 = vld [vmem:[#allocation4 + $0x660] sm:$0xff]
    %v1879 = vld [vmem:[#allocation4 + $0x668] sm:$0xff]
    %v1880 = vld [vmem:[#allocation4 + $0x670] sm:$0xff]
    %v1881 = vld [vmem:[#allocation4 + $0x678] sm:$0xff]
    %v1882 = vld [vmem:[#allocation4 + $0x680] sm:$0xff]
    %v1883 = vld [vmem:[#allocation4 + $0x688] sm:$0xff]
    %v1884 = vld [vmem:[#allocation4 + $0x690] sm:$0xff]
    %v1885 = vld [vmem:[#allocation4 + $0x698] sm:$0xff]
    %v1886 = vld [vmem:[#allocation4 + $0x6a0] sm:$0xff]
    %v1887 = vld [vmem:[#allocation4 + $0x6a8] sm:$0xff]
    %v1888 = vld [vmem:[#allocation4 + $0x6b0] sm:$0xff]
    %v1889 = vld [vmem:[#allocation4 + $0x6b8] sm:$0xff]
    %v1890 = vld [vmem:[#allocation4 + $0x6c0] sm:$0xff]
    %v1891 = vld [vmem:[#allocation4 + $0x6c8] sm:$0xff]
    %v1892 = vld [vmem:[#allocation4 + $0x6d0] sm:$0xff]
    %v1893 = vld [vmem:[#allocation4 + $0x6d8] sm:$0xff]
    %v1894 = vld [vmem:[#allocation4 + $0x6e0] sm:$0xff]
    %v1895 = vld [vmem:[#allocation4 + $0x6e8] sm:$0xff]
    %v1896 = vld [vmem:[#allocation4 + $0x6f0] sm:$0xff]
    %v1897 = vld [vmem:[#allocation4 + $0x6f8] sm:$0xff]
    %v1898 = vld [vmem:[#allocation4 + $0x700] sm:$0xff]
    %v1899 = vld [vmem:[#allocation4 + $0x708] sm:$0xff]
    %v1900 = vld [vmem:[#allocation4 + $0x710] sm:$0xff]
    %v1901 = vld [vmem:[#allocation4 + $0x718] sm:$0xff]
    %v1902 = vld [vmem:[#allocation4 + $0x720] sm:$0xff]
    %v1903 = vld [vmem:[#allocation4 + $0x728] sm:$0xff]
    %v1904 = vld [vmem:[#allocation4 + $0x730] sm:$0xff]
    %v1905 = vld [vmem:[#allocation4 + $0x738] sm:$0xff]
    %v1906 = vld [vmem:[#allocation4 + $0x740] sm:$0xff]
    %v1907 = vld [vmem:[#allocation4 + $0x748] sm:$0xff]
    %v1908 = vld [vmem:[#allocation4 + $0x750] sm:$0xff]
    %v1909 = vld [vmem:[#allocation4 + $0x758] sm:$0xff]
    %v1910 = vld [vmem:[#allocation4 + $0x760] sm:$0xff]
    %v1911 = vld [vmem:[#allocation4 + $0x768] sm:$0xff]
    %v1912 = vld [vmem:[#allocation4 + $0x770] sm:$0xff]
    %v1913 = vld [vmem:[#allocation4 + $0x778] sm:$0xff]
    %v1914 = vld [vmem:[#allocation4 + $0x780] sm:$0xff]
    %v1915 = vld [vmem:[#allocation4 + $0x788] sm:$0xff]
    %v1916 = vld [vmem:[#allocation4 + $0x790] sm:$0xff]
    %v1917 = vld [vmem:[#allocation4 + $0x798] sm:$0xff]
    %v1918 = vld [vmem:[#allocation4 + $0x7a0] sm:$0xff]
    %v1919 = vld [vmem:[#allocation4 + $0x7a8] sm:$0xff]
    %v1920 = vld [vmem:[#allocation4 + $0x7b0] sm:$0xff]
    %v1921 = vld [vmem:[#allocation4 + $0x7b8] sm:$0xff]
    %v1922 = vld [vmem:[#allocation4 + $0x7c0] sm:$0xff]
    %v1923 = vld [vmem:[#allocation4 + $0x7c8] sm:$0xff]
    %v1924 = vld [vmem:[#allocation4 + $0x7d0] sm:$0xff]
    %v1925 = vld [vmem:[#allocation4 + $0x7d8] sm:$0xff]
    %v1926 = vld [vmem:[#allocation4 + $0x7e0] sm:$0xff]
    %v1927 = vld [vmem:[#allocation4 + $0x7e8] sm:$0xff]
    %v1928 = vld [vmem:[#allocation4 + $0x7f0] sm:$0xff]
    %v1929 = vld [vmem:[#allocation4 + $0x7f8] sm:$0xff]
    %v1930 = vunpack.c.l.s8.bf16 %v1674
    %v1931 = vunpack.c.l.s8.bf16 %v1675
    %v1932 = vunpack.c.l.s8.bf16 %v1676
    %v1933 = vunpack.c.l.s8.bf16 %v1677
    %v1934 = vunpack.c.l.s8.bf16 %v1678
    %v1935 = vunpack.c.l.s8.bf16 %v1679
    %v1936 = vunpack.c.l.s8.bf16 %v1680
    %v1937 = vunpack.c.l.s8.bf16 %v1681
    %v1938 = vunpack.c.l.s8.bf16 %v1682
    %v1939 = vunpack.c.l.s8.bf16 %v1683
    %v1940 = vunpack.c.l.s8.bf16 %v1684
    %v1941 = vunpack.c.l.s8.bf16 %v1685
    %v1942 = vunpack.c.l.s8.bf16 %v1686
    %v1943 = vunpack.c.l.s8.bf16 %v1687
    %v1944 = vunpack.c.l.s8.bf16 %v1688
    %v1945 = vunpack.c.l.s8.bf16 %v1689
    %v1946 = vunpack.c.h.s8.bf16 %v1674
    %v1947 = vunpack.c.h.s8.bf16 %v1675
    %v1948 = vunpack.c.h.s8.bf16 %v1676
    %v1949 = vunpack.c.h.s8.bf16 %v1677
    %v1950 = vunpack.c.h.s8.bf16 %v1678
    %v1951 = vunpack.c.h.s8.bf16 %v1679
    %v1952 = vunpack.c.h.s8.bf16 %v1680
    %v1953 = vunpack.c.h.s8.bf16 %v1681
    %v1954 = vunpack.c.h.s8.bf16 %v1682
    %v1955 = vunpack.c.h.s8.bf16 %v1683
    %v1956 = vunpack.c.h.s8.bf16 %v1684
    %v1957 = vunpack.c.h.s8.bf16 %v1685
    %v1958 = vunpack.c.h.s8.bf16 %v1686
    %v1959 = vunpack.c.h.s8.bf16 %v1687
    %v1960 = vunpack.c.h.s8.bf16 %v1688
    %v1961 = vunpack.c.h.s8.bf16 %v1689
    %v1962 = vunpack.c.l.s8.bf16 %v1690
    %v1963 = vunpack.c.l.s8.bf16 %v1691
    %v1964 = vunpack.c.l.s8.bf16 %v1692
    %v1965 = vunpack.c.l.s8.bf16 %v1693
    %v1966 = vunpack.c.l.s8.bf16 %v1694
    %v1967 = vunpack.c.l.s8.bf16 %v1695
    %v1968 = vunpack.c.l.s8.bf16 %v1696
    %v1969 = vunpack.c.l.s8.bf16 %v1697
    %v1970 = vunpack.c.l.s8.bf16 %v1698
    %v1971 = vunpack.c.l.s8.bf16 %v1699
    %v1972 = vunpack.c.l.s8.bf16 %v1700
    %v1973 = vunpack.c.l.s8.bf16 %v1701
    %v1974 = vunpack.c.l.s8.bf16 %v1702
    %v1975 = vunpack.c.l.s8.bf16 %v1703
    %v1976 = vunpack.c.l.s8.bf16 %v1704
    %v1977 = vunpack.c.l.s8.bf16 %v1705
    %v1978 = vunpack.c.h.s8.bf16 %v1690
    %v1979 = vunpack.c.h.s8.bf16 %v1691
    %v1980 = vunpack.c.h.s8.bf16 %v1692
    %v1981 = vunpack.c.h.s8.bf16 %v1693
    %v1982 = vunpack.c.h.s8.bf16 %v1694
    %v1983 = vunpack.c.h.s8.bf16 %v1695
    %v1984 = vunpack.c.h.s8.bf16 %v1696
    %v1985 = vunpack.c.h.s8.bf16 %v1697
    %v1986 = vunpack.c.h.s8.bf16 %v1698
    %v1987 = vunpack.c.h.s8.bf16 %v1699
    %v1988 = vunpack.c.h.s8.bf16 %v1700
    %v1989 = vunpack.c.h.s8.bf16 %v1701
    %v1990 = vunpack.c.h.s8.bf16 %v1702
    %v1991 = vunpack.c.h.s8.bf16 %v1703
    %v1992 = vunpack.c.h.s8.bf16 %v1704
    %v1993 = vunpack.c.h.s8.bf16 %v1705
    %v1994 = vunpack.c.l.s8.bf16 %v1706
    %v1995 = vunpack.c.l.s8.bf16 %v1707
    %v1996 = vunpack.c.l.s8.bf16 %v1708
    %v1997 = vunpack.c.l.s8.bf16 %v1709
    %v1998 = vunpack.c.l.s8.bf16 %v1710
    %v1999 = vunpack.c.l.s8.bf16 %v1711
    %v2000 = vunpack.c.l.s8.bf16 %v1712
    %v2001 = vunpack.c.l.s8.bf16 %v1713
    %v2002 = vunpack.c.l.s8.bf16 %v1714
    %v2003 = vunpack.c.l.s8.bf16 %v1715
    %v2004 = vunpack.c.l.s8.bf16 %v1716
    %v2005 = vunpack.c.l.s8.bf16 %v1717
    %v2006 = vunpack.c.l.s8.bf16 %v1718
    %v2007 = vunpack.c.l.s8.bf16 %v1719
    %v2008 = vunpack.c.l.s8.bf16 %v1720
    %v2009 = vunpack.c.l.s8.bf16 %v1721
    %v2010 = vunpack.c.h.s8.bf16 %v1706
    %v2011 = vunpack.c.h.s8.bf16 %v1707
    %v2012 = vunpack.c.h.s8.bf16 %v1708
    %v2013 = vunpack.c.h.s8.bf16 %v1709
    %v2014 = vunpack.c.h.s8.bf16 %v1710
    %v2015 = vunpack.c.h.s8.bf16 %v1711
    %v2016 = vunpack.c.h.s8.bf16 %v1712
    %v2017 = vunpack.c.h.s8.bf16 %v1713
    %v2018 = vunpack.c.h.s8.bf16 %v1714
    %v2019 = vunpack.c.h.s8.bf16 %v1715
    %v2020 = vunpack.c.h.s8.bf16 %v1716
    %v2021 = vunpack.c.h.s8.bf16 %v1717
    %v2022 = vunpack.c.h.s8.bf16 %v1718
    %v2023 = vunpack.c.h.s8.bf16 %v1719
    %v2024 = vunpack.c.h.s8.bf16 %v1720
    %v2025 = vunpack.c.h.s8.bf16 %v1721
    %v2026 = vunpack.c.l.s8.bf16 %v1722
    %v2027 = vunpack.c.l.s8.bf16 %v1723
    %v2028 = vunpack.c.l.s8.bf16 %v1724
    %v2029 = vunpack.c.l.s8.bf16 %v1725
    %v2030 = vunpack.c.l.s8.bf16 %v1726
    %v2031 = vunpack.c.l.s8.bf16 %v1727
    %v2032 = vunpack.c.l.s8.bf16 %v1728
    %v2033 = vunpack.c.l.s8.bf16 %v1729
    %v2034 = vunpack.c.l.s8.bf16 %v1730
    %v2035 = vunpack.c.l.s8.bf16 %v1731
    %v2036 = vunpack.c.l.s8.bf16 %v1732
    %v2037 = vunpack.c.l.s8.bf16 %v1733
    %v2038 = vunpack.c.l.s8.bf16 %v1734
    %v2039 = vunpack.c.l.s8.bf16 %v1735
    %v2040 = vunpack.c.l.s8.bf16 %v1736
    %v2041 = vunpack.c.l.s8.bf16 %v1737
    %v2042 = vunpack.c.h.s8.bf16 %v1722
    %v2043 = vunpack.c.h.s8.bf16 %v1723
    %v2044 = vunpack.c.h.s8.bf16 %v1724
    %v2045 = vunpack.c.h.s8.bf16 %v1725
    %v2046 = vunpack.c.h.s8.bf16 %v1726
    %v2047 = vunpack.c.h.s8.bf16 %v1727
    %v2048 = vunpack.c.h.s8.bf16 %v1728
    %v2049 = vunpack.c.h.s8.bf16 %v1729
    %v2050 = vunpack.c.h.s8.bf16 %v1730
    %v2051 = vunpack.c.h.s8.bf16 %v1731
    %v2052 = vunpack.c.h.s8.bf16 %v1732
    %v2053 = vunpack.c.h.s8.bf16 %v1733
    %v2054 = vunpack.c.h.s8.bf16 %v1734
    %v2055 = vunpack.c.h.s8.bf16 %v1735
    %v2056 = vunpack.c.h.s8.bf16 %v1736
    %v2057 = vunpack.c.h.s8.bf16 %v1737
    %v2058 = vunpack.c.l.s8.bf16 %v1738
    %v2059 = vunpack.c.l.s8.bf16 %v1739
    %v2060 = vunpack.c.l.s8.bf16 %v1740
    %v2061 = vunpack.c.l.s8.bf16 %v1741
    %v2062 = vunpack.c.l.s8.bf16 %v1742
    %v2063 = vunpack.c.l.s8.bf16 %v1743
    %v2064 = vunpack.c.l.s8.bf16 %v1744
    %v2065 = vunpack.c.l.s8.bf16 %v1745
    %v2066 = vunpack.c.l.s8.bf16 %v1746
    %v2067 = vunpack.c.l.s8.bf16 %v1747
    %v2068 = vunpack.c.l.s8.bf16 %v1748
    %v2069 = vunpack.c.l.s8.bf16 %v1749
    %v2070 = vunpack.c.l.s8.bf16 %v1750
    %v2071 = vunpack.c.l.s8.bf16 %v1751
    %v2072 = vunpack.c.l.s8.bf16 %v1752
    %v2073 = vunpack.c.l.s8.bf16 %v1753
    %v2074 = vunpack.c.h.s8.bf16 %v1738
    %v2075 = vunpack.c.h.s8.bf16 %v1739
    %v2076 = vunpack.c.h.s8.bf16 %v1740
    %v2077 = vunpack.c.h.s8.bf16 %v1741
    %v2078 = vunpack.c.h.s8.bf16 %v1742
    %v2079 = vunpack.c.h.s8.bf16 %v1743
    %v2080 = vunpack.c.h.s8.bf16 %v1744
    %v2081 = vunpack.c.h.s8.bf16 %v1745
    %v2082 = vunpack.c.h.s8.bf16 %v1746
    %v2083 = vunpack.c.h.s8.bf16 %v1747
    %v2084 = vunpack.c.h.s8.bf16 %v1748
    %v2085 = vunpack.c.h.s8.bf16 %v1749
    %v2086 = vunpack.c.h.s8.bf16 %v1750
    %v2087 = vunpack.c.h.s8.bf16 %v1751
    %v2088 = vunpack.c.h.s8.bf16 %v1752
    %v2089 = vunpack.c.h.s8.bf16 %v1753
    %v2090 = vunpack.c.l.s8.bf16 %v1754
    %v2091 = vunpack.c.l.s8.bf16 %v1755
    %v2092 = vunpack.c.l.s8.bf16 %v1756
    %v2093 = vunpack.c.l.s8.bf16 %v1757
    %v2094 = vunpack.c.l.s8.bf16 %v1758
    %v2095 = vunpack.c.l.s8.bf16 %v1759
    %v2096 = vunpack.c.l.s8.bf16 %v1760
    %v2097 = vunpack.c.l.s8.bf16 %v1761
    %v2098 = vunpack.c.l.s8.bf16 %v1762
    %v2099 = vunpack.c.l.s8.bf16 %v1763
    %v2100 = vunpack.c.l.s8.bf16 %v1764
    %v2101 = vunpack.c.l.s8.bf16 %v1765
    %v2102 = vunpack.c.l.s8.bf16 %v1766
    %v2103 = vunpack.c.l.s8.bf16 %v1767
    %v2104 = vunpack.c.l.s8.bf16 %v1768
    %v2105 = vunpack.c.l.s8.bf16 %v1769
    %v2106 = vunpack.c.h.s8.bf16 %v1754
    %v2107 = vunpack.c.h.s8.bf16 %v1755
    %v2108 = vunpack.c.h.s8.bf16 %v1756
    %v2109 = vunpack.c.h.s8.bf16 %v1757
    %v2110 = vunpack.c.h.s8.bf16 %v1758
    %v2111 = vunpack.c.h.s8.bf16 %v1759
    %v2112 = vunpack.c.h.s8.bf16 %v1760
    %v2113 = vunpack.c.h.s8.bf16 %v1761
    %v2114 = vunpack.c.h.s8.bf16 %v1762
    %v2115 = vunpack.c.h.s8.bf16 %v1763
    %v2116 = vunpack.c.h.s8.bf16 %v1764
    %v2117 = vunpack.c.h.s8.bf16 %v1765
    %v2118 = vunpack.c.h.s8.bf16 %v1766
    %v2119 = vunpack.c.h.s8.bf16 %v1767
    %v2120 = vunpack.c.h.s8.bf16 %v1768
    %v2121 = vunpack.c.h.s8.bf16 %v1769
    %v2122 = vunpack.c.l.s8.bf16 %v1770
    %v2123 = vunpack.c.l.s8.bf16 %v1771
    %v2124 = vunpack.c.l.s8.bf16 %v1772
    %v2125 = vunpack.c.l.s8.bf16 %v1773
    %v2126 = vunpack.c.l.s8.bf16 %v1774
    %v2127 = vunpack.c.l.s8.bf16 %v1775
    %v2128 = vunpack.c.l.s8.bf16 %v1776
    %v2129 = vunpack.c.l.s8.bf16 %v1777
    %v2130 = vunpack.c.l.s8.bf16 %v1778
    %v2131 = vunpack.c.l.s8.bf16 %v1779
    %v2132 = vunpack.c.l.s8.bf16 %v1780
    %v2133 = vunpack.c.l.s8.bf16 %v1781
    %v2134 = vunpack.c.l.s8.bf16 %v1782
    %v2135 = vunpack.c.l.s8.bf16 %v1783
    %v2136 = vunpack.c.l.s8.bf16 %v1784
    %v2137 = vunpack.c.l.s8.bf16 %v1785
    %v2138 = vunpack.c.h.s8.bf16 %v1770
    %v2139 = vunpack.c.h.s8.bf16 %v1771
    %v2140 = vunpack.c.h.s8.bf16 %v1772
    %v2141 = vunpack.c.h.s8.bf16 %v1773
    %v2142 = vunpack.c.h.s8.bf16 %v1774
    %v2143 = vunpack.c.h.s8.bf16 %v1775
    %v2144 = vunpack.c.h.s8.bf16 %v1776
    %v2145 = vunpack.c.h.s8.bf16 %v1777
    %v2146 = vunpack.c.h.s8.bf16 %v1778
    %v2147 = vunpack.c.h.s8.bf16 %v1779
    %v2148 = vunpack.c.h.s8.bf16 %v1780
    %v2149 = vunpack.c.h.s8.bf16 %v1781
    %v2150 = vunpack.c.h.s8.bf16 %v1782
    %v2151 = vunpack.c.h.s8.bf16 %v1783
    %v2152 = vunpack.c.h.s8.bf16 %v1784
    %v2153 = vunpack.c.h.s8.bf16 %v1785
    %v2154 = vunpack.c.l.s8.bf16 %v1786
    %v2155 = vunpack.c.l.s8.bf16 %v1787
    %v2156 = vunpack.c.l.s8.bf16 %v1788
    %v2157 = vunpack.c.l.s8.bf16 %v1789
    %v2158 = vunpack.c.l.s8.bf16 %v1790
    %v2159 = vunpack.c.l.s8.bf16 %v1791
    %v2160 = vunpack.c.l.s8.bf16 %v1792
    %v2161 = vunpack.c.l.s8.bf16 %v1793
    %v2162 = vunpack.c.l.s8.bf16 %v1794
    %v2163 = vunpack.c.l.s8.bf16 %v1795
    %v2164 = vunpack.c.l.s8.bf16 %v1796
    %v2165 = vunpack.c.l.s8.bf16 %v1797
    %v2166 = vunpack.c.l.s8.bf16 %v1798
    %v2167 = vunpack.c.l.s8.bf16 %v1799
    %v2168 = vunpack.c.l.s8.bf16 %v1800
    %v2169 = vunpack.c.l.s8.bf16 %v1801
    %v2170 = vunpack.c.h.s8.bf16 %v1786
    %v2171 = vunpack.c.h.s8.bf16 %v1787
    %v2172 = vunpack.c.h.s8.bf16 %v1788
    %v2173 = vunpack.c.h.s8.bf16 %v1789
    %v2174 = vunpack.c.h.s8.bf16 %v1790
    %v2175 = vunpack.c.h.s8.bf16 %v1791
    %v2176 = vunpack.c.h.s8.bf16 %v1792
    %v2177 = vunpack.c.h.s8.bf16 %v1793
    %v2178 = vunpack.c.h.s8.bf16 %v1794
    %v2179 = vunpack.c.h.s8.bf16 %v1795
    %v2180 = vunpack.c.h.s8.bf16 %v1796
    %v2181 = vunpack.c.h.s8.bf16 %v1797
    %v2182 = vunpack.c.h.s8.bf16 %v1798
    %v2183 = vunpack.c.h.s8.bf16 %v1799
    %v2184 = vunpack.c.h.s8.bf16 %v1800
    %v2185 = vunpack.c.h.s8.bf16 %v1801
    %v2186 = vunpack.c.l.s8.bf16 %v1802
    %v2187 = vunpack.c.l.s8.bf16 %v1803
    %v2188 = vunpack.c.l.s8.bf16 %v1804
    %v2189 = vunpack.c.l.s8.bf16 %v1805
    %v2190 = vunpack.c.l.s8.bf16 %v1806
    %v2191 = vunpack.c.l.s8.bf16 %v1807
    %v2192 = vunpack.c.l.s8.bf16 %v1808
    %v2193 = vunpack.c.l.s8.bf16 %v1809
    %v2194 = vunpack.c.l.s8.bf16 %v1810
    %v2195 = vunpack.c.l.s8.bf16 %v1811
    %v2196 = vunpack.c.l.s8.bf16 %v1812
    %v2197 = vunpack.c.l.s8.bf16 %v1813
    %v2198 = vunpack.c.l.s8.bf16 %v1814
    %v2199 = vunpack.c.l.s8.bf16 %v1815
    %v2200 = vunpack.c.l.s8.bf16 %v1816
    %v2201 = vunpack.c.l.s8.bf16 %v1817
    %v2202 = vunpack.c.h.s8.bf16 %v1802
    %v2203 = vunpack.c.h.s8.bf16 %v1803
    %v2204 = vunpack.c.h.s8.bf16 %v1804
    %v2205 = vunpack.c.h.s8.bf16 %v1805
    %v2206 = vunpack.c.h.s8.bf16 %v1806
    %v2207 = vunpack.c.h.s8.bf16 %v1807
    %v2208 = vunpack.c.h.s8.bf16 %v1808
    %v2209 = vunpack.c.h.s8.bf16 %v1809
    %v2210 = vunpack.c.h.s8.bf16 %v1810
    %v2211 = vunpack.c.h.s8.bf16 %v1811
    %v2212 = vunpack.c.h.s8.bf16 %v1812
    %v2213 = vunpack.c.h.s8.bf16 %v1813
    %v2214 = vunpack.c.h.s8.bf16 %v1814
    %v2215 = vunpack.c.h.s8.bf16 %v1815
    %v2216 = vunpack.c.h.s8.bf16 %v1816
    %v2217 = vunpack.c.h.s8.bf16 %v1817
    %v2218 = vunpack.c.l.s8.bf16 %v1818
    %v2219 = vunpack.c.l.s8.bf16 %v1819
    %v2220 = vunpack.c.l.s8.bf16 %v1820
    %v2221 = vunpack.c.l.s8.bf16 %v1821
    %v2222 = vunpack.c.l.s8.bf16 %v1822
    %v2223 = vunpack.c.l.s8.bf16 %v1823
    %v2224 = vunpack.c.l.s8.bf16 %v1824
    %v2225 = vunpack.c.l.s8.bf16 %v1825
    %v2226 = vunpack.c.l.s8.bf16 %v1826
    %v2227 = vunpack.c.l.s8.bf16 %v1827
    %v2228 = vunpack.c.l.s8.bf16 %v1828
    %v2229 = vunpack.c.l.s8.bf16 %v1829
    %v2230 = vunpack.c.l.s8.bf16 %v1830
    %v2231 = vunpack.c.l.s8.bf16 %v1831
    %v2232 = vunpack.c.l.s8.bf16 %v1832
    %v2233 = vunpack.c.l.s8.bf16 %v1833
    %v2234 = vunpack.c.h.s8.bf16 %v1818
    %v2235 = vunpack.c.h.s8.bf16 %v1819
    %v2236 = vunpack.c.h.s8.bf16 %v1820
    %v2237 = vunpack.c.h.s8.bf16 %v1821
    %v2238 = vunpack.c.h.s8.bf16 %v1822
    %v2239 = vunpack.c.h.s8.bf16 %v1823
    %v2240 = vunpack.c.h.s8.bf16 %v1824
    %v2241 = vunpack.c.h.s8.bf16 %v1825
    %v2242 = vunpack.c.h.s8.bf16 %v1826
    %v2243 = vunpack.c.h.s8.bf16 %v1827
    %v2244 = vunpack.c.h.s8.bf16 %v1828
    %v2245 = vunpack.c.h.s8.bf16 %v1829
    %v2246 = vunpack.c.h.s8.bf16 %v1830
    %v2247 = vunpack.c.h.s8.bf16 %v1831
    %v2248 = vunpack.c.h.s8.bf16 %v1832
    %v2249 = vunpack.c.h.s8.bf16 %v1833
    %v2250 = vunpack.c.l.s8.bf16 %v1834
    %v2251 = vunpack.c.l.s8.bf16 %v1835
    %v2252 = vunpack.c.l.s8.bf16 %v1836
    %v2253 = vunpack.c.l.s8.bf16 %v1837
    %v2254 = vunpack.c.l.s8.bf16 %v1838
    %v2255 = vunpack.c.l.s8.bf16 %v1839
    %v2256 = vunpack.c.l.s8.bf16 %v1840
    %v2257 = vunpack.c.l.s8.bf16 %v1841
    %v2258 = vunpack.c.l.s8.bf16 %v1842
    %v2259 = vunpack.c.l.s8.bf16 %v1843
    %v2260 = vunpack.c.l.s8.bf16 %v1844
    %v2261 = vunpack.c.l.s8.bf16 %v1845
    %v2262 = vunpack.c.l.s8.bf16 %v1846
    %v2263 = vunpack.c.l.s8.bf16 %v1847
    %v2264 = vunpack.c.l.s8.bf16 %v1848
    %v2265 = vunpack.c.l.s8.bf16 %v1849
    %v2266 = vunpack.c.h.s8.bf16 %v1834
    %v2267 = vunpack.c.h.s8.bf16 %v1835
    %v2268 = vunpack.c.h.s8.bf16 %v1836
    %v2269 = vunpack.c.h.s8.bf16 %v1837
    %v2270 = vunpack.c.h.s8.bf16 %v1838
    %v2271 = vunpack.c.h.s8.bf16 %v1839
    %v2272 = vunpack.c.h.s8.bf16 %v1840
    %v2273 = vunpack.c.h.s8.bf16 %v1841
    %v2274 = vunpack.c.h.s8.bf16 %v1842
    %v2275 = vunpack.c.h.s8.bf16 %v1843
    %v2276 = vunpack.c.h.s8.bf16 %v1844
    %v2277 = vunpack.c.h.s8.bf16 %v1845
    %v2278 = vunpack.c.h.s8.bf16 %v1846
    %v2279 = vunpack.c.h.s8.bf16 %v1847
    %v2280 = vunpack.c.h.s8.bf16 %v1848
    %v2281 = vunpack.c.h.s8.bf16 %v1849
    %v2282 = vunpack.c.l.s8.bf16 %v1850
    %v2283 = vunpack.c.l.s8.bf16 %v1851
    %v2284 = vunpack.c.l.s8.bf16 %v1852
    %v2285 = vunpack.c.l.s8.bf16 %v1853
    %v2286 = vunpack.c.l.s8.bf16 %v1854
    %v2287 = vunpack.c.l.s8.bf16 %v1855
    %v2288 = vunpack.c.l.s8.bf16 %v1856
    %v2289 = vunpack.c.l.s8.bf16 %v1857
    %v2290 = vunpack.c.l.s8.bf16 %v1858
    %v2291 = vunpack.c.l.s8.bf16 %v1859
    %v2292 = vunpack.c.l.s8.bf16 %v1860
    %v2293 = vunpack.c.l.s8.bf16 %v1861
    %v2294 = vunpack.c.l.s8.bf16 %v1862
    %v2295 = vunpack.c.l.s8.bf16 %v1863
    %v2296 = vunpack.c.l.s8.bf16 %v1864
    %v2297 = vunpack.c.l.s8.bf16 %v1865
    %v2298 = vunpack.c.h.s8.bf16 %v1850
    %v2299 = vunpack.c.h.s8.bf16 %v1851
    %v2300 = vunpack.c.h.s8.bf16 %v1852
    %v2301 = vunpack.c.h.s8.bf16 %v1853
    %v2302 = vunpack.c.h.s8.bf16 %v1854
    %v2303 = vunpack.c.h.s8.bf16 %v1855
    %v2304 = vunpack.c.h.s8.bf16 %v1856
    %v2305 = vunpack.c.h.s8.bf16 %v1857
    %v2306 = vunpack.c.h.s8.bf16 %v1858
    %v2307 = vunpack.c.h.s8.bf16 %v1859
    %v2308 = vunpack.c.h.s8.bf16 %v1860
    %v2309 = vunpack.c.h.s8.bf16 %v1861
    %v2310 = vunpack.c.h.s8.bf16 %v1862
    %v2311 = vunpack.c.h.s8.bf16 %v1863
    %v2312 = vunpack.c.h.s8.bf16 %v1864
    %v2313 = vunpack.c.h.s8.bf16 %v1865
    %v2314 = vunpack.c.l.s8.bf16 %v1866
    %v2315 = vunpack.c.l.s8.bf16 %v1867
    %v2316 = vunpack.c.l.s8.bf16 %v1868
    %v2317 = vunpack.c.l.s8.bf16 %v1869
    %v2318 = vunpack.c.l.s8.bf16 %v1870
    %v2319 = vunpack.c.l.s8.bf16 %v1871
    %v2320 = vunpack.c.l.s8.bf16 %v1872
    %v2321 = vunpack.c.l.s8.bf16 %v1873
    %v2322 = vunpack.c.l.s8.bf16 %v1874
    %v2323 = vunpack.c.l.s8.bf16 %v1875
    %v2324 = vunpack.c.l.s8.bf16 %v1876
    %v2325 = vunpack.c.l.s8.bf16 %v1877
    %v2326 = vunpack.c.l.s8.bf16 %v1878
    %v2327 = vunpack.c.l.s8.bf16 %v1879
    %v2328 = vunpack.c.l.s8.bf16 %v1880
    %v2329 = vunpack.c.l.s8.bf16 %v1881
    %v2330 = vunpack.c.h.s8.bf16 %v1866
    %v2331 = vunpack.c.h.s8.bf16 %v1867
    %v2332 = vunpack.c.h.s8.bf16 %v1868
    %v2333 = vunpack.c.h.s8.bf16 %v1869
    %v2334 = vunpack.c.h.s8.bf16 %v1870
    %v2335 = vunpack.c.h.s8.bf16 %v1871
    %v2336 = vunpack.c.h.s8.bf16 %v1872
    %v2337 = vunpack.c.h.s8.bf16 %v1873
    %v2338 = vunpack.c.h.s8.bf16 %v1874
    %v2339 = vunpack.c.h.s8.bf16 %v1875
    %v2340 = vunpack.c.h.s8.bf16 %v1876
    %v2341 = vunpack.c.h.s8.bf16 %v1877
    %v2342 = vunpack.c.h.s8.bf16 %v1878
    %v2343 = vunpack.c.h.s8.bf16 %v1879
    %v2344 = vunpack.c.h.s8.bf16 %v1880
    %v2345 = vunpack.c.h.s8.bf16 %v1881
    %v2346 = vunpack.c.l.s8.bf16 %v1882
    %v2347 = vunpack.c.l.s8.bf16 %v1883
    %v2348 = vunpack.c.l.s8.bf16 %v1884
    %v2349 = vunpack.c.l.s8.bf16 %v1885
    %v2350 = vunpack.c.l.s8.bf16 %v1886
    %v2351 = vunpack.c.l.s8.bf16 %v1887
    %v2352 = vunpack.c.l.s8.bf16 %v1888
    %v2353 = vunpack.c.l.s8.bf16 %v1889
    %v2354 = vunpack.c.l.s8.bf16 %v1890
    %v2355 = vunpack.c.l.s8.bf16 %v1891
    %v2356 = vunpack.c.l.s8.bf16 %v1892
    %v2357 = vunpack.c.l.s8.bf16 %v1893
    %v2358 = vunpack.c.l.s8.bf16 %v1894
    %v2359 = vunpack.c.l.s8.bf16 %v1895
    %v2360 = vunpack.c.l.s8.bf16 %v1896
    %v2361 = vunpack.c.l.s8.bf16 %v1897
    %v2362 = vunpack.c.h.s8.bf16 %v1882
    %v2363 = vunpack.c.h.s8.bf16 %v1883
    %v2364 = vunpack.c.h.s8.bf16 %v1884
    %v2365 = vunpack.c.h.s8.bf16 %v1885
    %v2366 = vunpack.c.h.s8.bf16 %v1886
    %v2367 = vunpack.c.h.s8.bf16 %v1887
    %v2368 = vunpack.c.h.s8.bf16 %v1888
    %v2369 = vunpack.c.h.s8.bf16 %v1889
    %v2370 = vunpack.c.h.s8.bf16 %v1890
    %v2371 = vunpack.c.h.s8.bf16 %v1891
    %v2372 = vunpack.c.h.s8.bf16 %v1892
    %v2373 = vunpack.c.h.s8.bf16 %v1893
    %v2374 = vunpack.c.h.s8.bf16 %v1894
    %v2375 = vunpack.c.h.s8.bf16 %v1895
    %v2376 = vunpack.c.h.s8.bf16 %v1896
    %v2377 = vunpack.c.h.s8.bf16 %v1897
    %v2378 = vunpack.c.l.s8.bf16 %v1898
    %v2379 = vunpack.c.l.s8.bf16 %v1899
    %v2380 = vunpack.c.l.s8.bf16 %v1900
    %v2381 = vunpack.c.l.s8.bf16 %v1901
    %v2382 = vunpack.c.l.s8.bf16 %v1902
    %v2383 = vunpack.c.l.s8.bf16 %v1903
    %v2384 = vunpack.c.l.s8.bf16 %v1904
    %v2385 = vunpack.c.l.s8.bf16 %v1905
    %v2386 = vunpack.c.l.s8.bf16 %v1906
    %v2387 = vunpack.c.l.s8.bf16 %v1907
    %v2388 = vunpack.c.l.s8.bf16 %v1908
    %v2389 = vunpack.c.l.s8.bf16 %v1909
    %v2390 = vunpack.c.l.s8.bf16 %v1910
    %v2391 = vunpack.c.l.s8.bf16 %v1911
    %v2392 = vunpack.c.l.s8.bf16 %v1912
    %v2393 = vunpack.c.l.s8.bf16 %v1913
    %v2394 = vunpack.c.h.s8.bf16 %v1898
    %v2395 = vunpack.c.h.s8.bf16 %v1899
    %v2396 = vunpack.c.h.s8.bf16 %v1900
    %v2397 = vunpack.c.h.s8.bf16 %v1901
    %v2398 = vunpack.c.h.s8.bf16 %v1902
    %v2399 = vunpack.c.h.s8.bf16 %v1903
    %v2400 = vunpack.c.h.s8.bf16 %v1904
    %v2401 = vunpack.c.h.s8.bf16 %v1905
    %v2402 = vunpack.c.h.s8.bf16 %v1906
    %v2403 = vunpack.c.h.s8.bf16 %v1907
    %v2404 = vunpack.c.h.s8.bf16 %v1908
    %v2405 = vunpack.c.h.s8.bf16 %v1909
    %v2406 = vunpack.c.h.s8.bf16 %v1910
    %v2407 = vunpack.c.h.s8.bf16 %v1911
    %v2408 = vunpack.c.h.s8.bf16 %v1912
    %v2409 = vunpack.c.h.s8.bf16 %v1913
    %v2410 = vunpack.c.l.s8.bf16 %v1914
    %v2411 = vunpack.c.l.s8.bf16 %v1915
    %v2412 = vunpack.c.l.s8.bf16 %v1916
    %v2413 = vunpack.c.l.s8.bf16 %v1917
    %v2414 = vunpack.c.l.s8.bf16 %v1918
    %v2415 = vunpack.c.l.s8.bf16 %v1919
    %v2416 = vunpack.c.l.s8.bf16 %v1920
    %v2417 = vunpack.c.l.s8.bf16 %v1921
    %v2418 = vunpack.c.l.s8.bf16 %v1922
    %v2419 = vunpack.c.l.s8.bf16 %v1923
    %v2420 = vunpack.c.l.s8.bf16 %v1924
    %v2421 = vunpack.c.l.s8.bf16 %v1925
    %v2422 = vunpack.c.l.s8.bf16 %v1926
    %v2423 = vunpack.c.l.s8.bf16 %v1927
    %v2424 = vunpack.c.l.s8.bf16 %v1928
    %v2425 = vunpack.c.l.s8.bf16 %v1929
    %v2426 = vunpack.c.h.s8.bf16 %v1914
    %v2427 = vunpack.c.h.s8.bf16 %v1915
    %v2428 = vunpack.c.h.s8.bf16 %v1916
    %v2429 = vunpack.c.h.s8.bf16 %v1917
    %v2430 = vunpack.c.h.s8.bf16 %v1918
    %v2431 = vunpack.c.h.s8.bf16 %v1919
    %v2432 = vunpack.c.h.s8.bf16 %v1920
    %v2433 = vunpack.c.h.s8.bf16 %v1921
    %v2434 = vunpack.c.h.s8.bf16 %v1922
    %v2435 = vunpack.c.h.s8.bf16 %v1923
    %v2436 = vunpack.c.h.s8.bf16 %v1924
    %v2437 = vunpack.c.h.s8.bf16 %v1925
    %v2438 = vunpack.c.h.s8.bf16 %v1926
    %v2439 = vunpack.c.h.s8.bf16 %v1927
    %v2440 = vunpack.c.h.s8.bf16 %v1928
    %v2441 = vunpack.c.h.s8.bf16 %v1929
    %v2442 = vpack.c.bf16 %v1670, %v1666
    %v2443 = vpack.c.bf16 %v1671, %v1667
    %v2444 = vpack.c.bf16 %v1672, %v1668
    %v2445 = vpack.c.bf16 %v1673, %v1669
    %2446 = vmatprep.subr.bf16.mxu0 %v1931
    %2447 = vmatpush1.bf16.msra.mxu0 %v1930
    %2448 = vmatprep.subr.bf16.mxu0 %v1947
    %2449 = vmatpush1.bf16.msra.mxu0 %v1946
    %2450 = vmatprep.subr.bf16.mxu0 %v1963
    %2451 = vmatpush1.bf16.msra.mxu0 %v1962
    %2452 = vmatprep.subr.bf16.mxu0 %v1979
    %2453 = vmatpush1.bf16.msra.mxu0 %v1978
    %2454 = vmatprep.subr.bf16.mxu0 %v1995
    %2455 = vmatpush1.bf16.msra.mxu0 %v1994
    %2456 = vmatprep.subr.bf16.mxu0 %v2011
    %2457 = vmatpush1.bf16.msra.mxu0 %v2010
    %2458 = vmatprep.subr.bf16.mxu0 %v2027
    %2459 = vmatpush1.bf16.msra.mxu0 %v2026
    %2460 = vmatprep.subr.bf16.mxu0 %v2043
    %2461 = vmatpush1.bf16.msra.mxu0 %v2042
    %2462 = vmatprep.subr.bf16.mxu0 %v2059
    %2463 = vmatpush1.bf16.msra.mxu0 %v2058
    %2464 = vmatprep.subr.bf16.mxu0 %v2075
    %2465 = vmatpush1.bf16.msra.mxu0 %v2074
    %2466 = vmatprep.subr.bf16.mxu0 %v2091
    %2467 = vmatpush1.bf16.msra.mxu0 %v2090
    %2468 = vmatprep.subr.bf16.mxu0 %v2107
    %2469 = vmatpush1.bf16.msra.mxu0 %v2106
    %2470 = vmatprep.subr.bf16.mxu0 %v2123
    %2471 = vmatpush1.bf16.msra.mxu0 %v2122
    %2472 = vmatprep.subr.bf16.mxu0 %v2139
    %2473 = vmatpush1.bf16.msra.mxu0 %v2138
    %2474 = vmatprep.subr.bf16.mxu0 %v2155
    %2475 = vmatpush1.bf16.msra.mxu0 %v2154
    %2476 = vmatprep.subr.bf16.mxu0 %v2171
    %2477 = vmatpush1.bf16.msra.mxu0 %v2170
    %2478 = vmatprep.mubr.bf16.mxu0 %v2443
    %2479 = vmatmul.mubr.bf16.gmra.mrb[0].mxu0 %v2442
    %v2480 = vpop.f32.mrb[0].mxu0
    %v2481 = vadd.f32 0.0, %v2480
    %v2482 = vpop.f32.mrb[0].mxu0
    %v2483 = vadd.f32 0.0, %v2482
    %v2484 = vpop.f32.mrb[0].mxu0
    %v2485 = vadd.f32 0.0, %v2484
    %v2486 = vpop.f32.mrb[0].mxu0
    %v2487 = vadd.f32 0.0, %v2486
    %2488 = vdwg.mxu0
    %2489 = vmatprep.subr.bf16.mxu0 %v2187
    %2490 = vmatpush1.bf16.msra.mxu0 %v2186
    %2491 = vmatprep.subr.bf16.mxu0 %v2203
    %2492 = vmatpush1.bf16.msra.mxu0 %v2202
    %2493 = vmatprep.subr.bf16.mxu0 %v2219
    %2494 = vmatpush1.bf16.msra.mxu0 %v2218
    %2495 = vmatprep.subr.bf16.mxu0 %v2235
    %2496 = vmatpush1.bf16.msra.mxu0 %v2234
    %2497 = vmatprep.subr.bf16.mxu0 %v2251
    %2498 = vmatpush1.bf16.msra.mxu0 %v2250
    %2499 = vmatprep.subr.bf16.mxu0 %v2267
    %2500 = vmatpush1.bf16.msra.mxu0 %v2266
    %2501 = vmatprep.subr.bf16.mxu0 %v2283
    %2502 = vmatpush1.bf16.msra.mxu0 %v2282
    %2503 = vmatprep.subr.bf16.mxu0 %v2299
    %2504 = vmatpush1.bf16.msra.mxu0 %v2298
    %2505 = vmatprep.subr.bf16.mxu0 %v2315
    %2506 = vmatpush1.bf16.msra.mxu0 %v2314
    %2507 = vmatprep.subr.bf16.mxu0 %v2331
    %2508 = vmatpush1.bf16.msra.mxu0 %v2330
    %2509 = vmatprep.subr.bf16.mxu0 %v2347
    %2510 = vmatpush1.bf16.msra.mxu0 %v2346
    %2511 = vmatprep.subr.bf16.mxu0 %v2363
    %2512 = vmatpush1.bf16.msra.mxu0 %v2362
    %2513 = vmatprep.subr.bf16.mxu0 %v2379
    %2514 = vmatpush1.bf16.msra.mxu0 %v2378
    %2515 = vmatprep.subr.bf16.mxu0 %v2395
    %2516 = vmatpush1.bf16.msra.mxu0 %v2394
    %2517 = vmatprep.subr.bf16.mxu0 %v2411
    %2518 = vmatpush1.bf16.msra.mxu0 %v2410
    %2519 = vmatprep.subr.bf16.mxu0 %v2427
    %2520 = vmatpush1.bf16.msra.mxu0 %v2426
    %2521 = vmatprep.mubr.bf16.mxu0 %v2445
    %2522 = vmatmul.mubr.bf16.gmra.mrb[0].mxu0 %v2444
    %v2523 = vpop.f32.mrb[0].mxu0
    %v2524 = vadd.f32 %v2481, %v2523
    %v2525 = vpop.f32.mrb[0].mxu0
    %v2526 = vadd.f32 %v2483, %v2525
    %v2527 = vpop.f32.mrb[0].mxu0
    %v2528 = vadd.f32 %v2485, %v2527
    %v2529 = vpop.f32.mrb[0].mxu0
    %v2530 = vadd.f32 %v2487, %v2529
    %2531 = vdwg.mxu0
    %2532 = vmatprep.subr.bf16.mxu0 %v1933
    %2533 = vmatpush1.bf16.msra.mxu0 %v1932
    %2534 = vmatprep.subr.bf16.mxu0 %v1949
    %2535 = vmatpush1.bf16.msra.mxu0 %v1948
    %2536 = vmatprep.subr.bf16.mxu0 %v1965
    %2537 = vmatpush1.bf16.msra.mxu0 %v1964
    %2538 = vmatprep.subr.bf16.mxu0 %v1981
    %2539 = vmatpush1.bf16.msra.mxu0 %v1980
    %2540 = vmatprep.subr.bf16.mxu0 %v1997
    %2541 = vmatpush1.bf16.msra.mxu0 %v1996
    %2542 = vmatprep.subr.bf16.mxu0 %v2013
    %2543 = vmatpush1.bf16.msra.mxu0 %v2012
    %2544 = vmatprep.subr.bf16.mxu0 %v2029
    %2545 = vmatpush1.bf16.msra.mxu0 %v2028
    %2546 = vmatprep.subr.bf16.mxu0 %v2045
    %2547 = vmatpush1.bf16.msra.mxu0 %v2044
    %2548 = vmatprep.subr.bf16.mxu0 %v2061
    %2549 = vmatpush1.bf16.msra.mxu0 %v2060
    %2550 = vmatprep.subr.bf16.mxu0 %v2077
    %2551 = vmatpush1.bf16.msra.mxu0 %v2076
    %2552 = vmatprep.subr.bf16.mxu0 %v2093
    %2553 = vmatpush1.bf16.msra.mxu0 %v2092
    %2554 = vmatprep.subr.bf16.mxu0 %v2109
    %2555 = vmatpush1.bf16.msra.mxu0 %v2108
    %2556 = vmatprep.subr.bf16.mxu0 %v2125
    %2557 = vmatpush1.bf16.msra.mxu0 %v2124
    %2558 = vmatprep.subr.bf16.mxu0 %v2141
    %2559 = vmatpush1.bf16.msra.mxu0 %v2140
    %2560 = vmatprep.subr.bf16.mxu0 %v2157
    %2561 = vmatpush1.bf16.msra.mxu0 %v2156
    %2562 = vmatprep.subr.bf16.mxu0 %v2173
    %2563 = vmatpush1.bf16.msra.mxu0 %v2172
    %2564 = vmatprep.mubr.bf16.mxu0 %v2443
    %2565 = vmatmul.mubr.bf16.gmra.mrb[0].mxu0 %v2442
    %v2566 = vpop.f32.mrb[0].mxu0
    %v2567 = vadd.f32 0.0, %v2566
    %v2568 = vpop.f32.mrb[0].mxu0
    %v2569 = vadd.f32 0.0, %v2568
    %v2570 = vpop.f32.mrb[0].mxu0
    %v2571 = vadd.f32 0.0, %v2570
    %v2572 = vpop.f32.mrb[0].mxu0
    %v2573 = vadd.f32 0.0, %v2572
    %2574 = vdwg.mxu0
    %2575 = vmatprep.subr.bf16.mxu0 %v2189
    %2576 = vmatpush1.bf16.msra.mxu0 %v2188
    %2577 = vmatprep.subr.bf16.mxu0 %v2205
    %2578 = vmatpush1.bf16.msra.mxu0 %v2204
    %2579 = vmatprep.subr.bf16.mxu0 %v2221
    %2580 = vmatpush1.bf16.msra.mxu0 %v2220
    %2581 = vmatprep.subr.bf16.mxu0 %v2237
    %2582 = vmatpush1.bf16.msra.mxu0 %v2236
    %2583 = vmatprep.subr.bf16.mxu0 %v2253
    %2584 = vmatpush1.bf16.msra.mxu0 %v2252
    %2585 = vmatprep.subr.bf16.mxu0 %v2269
    %2586 = vmatpush1.bf16.msra.mxu0 %v2268
    %2587 = vmatprep.subr.bf16.mxu0 %v2285
    %2588 = vmatpush1.bf16.msra.mxu0 %v2284
    %2589 = vmatprep.subr.bf16.mxu0 %v2301
    %2590 = vmatpush1.bf16.msra.mxu0 %v2300
    %2591 = vmatprep.subr.bf16.mxu0 %v2317
    %2592 = vmatpush1.bf16.msra.mxu0 %v2316
    %2593 = vmatprep.subr.bf16.mxu0 %v2333
    %2594 = vmatpush1.bf16.msra.mxu0 %v2332
    %2595 = vmatprep.subr.bf16.mxu0 %v2349
    %2596 = vmatpush1.bf16.msra.mxu0 %v2348
    %2597 = vmatprep.subr.bf16.mxu0 %v2365
    %2598 = vmatpush1.bf16.msra.mxu0 %v2364
    %2599 = vmatprep.subr.bf16.mxu0 %v2381
    %2600 = vmatpush1.bf16.msra.mxu0 %v2380
    %2601 = vmatprep.subr.bf16.mxu0 %v2397
    %2602 = vmatpush1.bf16.msra.mxu0 %v2396
    %2603 = vmatprep.subr.bf16.mxu0 %v2413
    %2604 = vmatpush1.bf16.msra.mxu0 %v2412
    %2605 = vmatprep.subr.bf16.mxu0 %v2429
    %2606 = vmatpush1.bf16.msra.mxu0 %v2428
    %2607 = vmatprep.mubr.bf16.mxu0 %v2445
    %2608 = vmatmul.mubr.bf16.gmra.mrb[0].mxu0 %v2444
    %v2609 = vpop.f32.mrb[0].mxu0
    %v2610 = vadd.f32 %v2567, %v2609
    %v2611 = vpop.f32.mrb[0].mxu0
    %v2612 = vadd.f32 %v2569, %v2611
    %v2613 = vpop.f32.mrb[0].mxu0
    %v2614 = vadd.f32 %v2571, %v2613
    %v2615 = vpop.f32.mrb[0].mxu0
    %v2616 = vadd.f32 %v2573, %v2615
    %2617 = vdwg.mxu0
    %2618 = vmatprep.subr.bf16.mxu0 %v1935
    %2619 = vmatpush1.bf16.msra.mxu0 %v1934
    %2620 = vmatprep.subr.bf16.mxu0 %v1951
    %2621 = vmatpush1.bf16.msra.mxu0 %v1950
    %2622 = vmatprep.subr.bf16.mxu0 %v1967
    %2623 = vmatpush1.bf16.msra.mxu0 %v1966
    %2624 = vmatprep.subr.bf16.mxu0 %v1983
    %2625 = vmatpush1.bf16.msra.mxu0 %v1982
    %2626 = vmatprep.subr.bf16.mxu0 %v1999
    %2627 = vmatpush1.bf16.msra.mxu0 %v1998
    %2628 = vmatprep.subr.bf16.mxu0 %v2015
    %2629 = vmatpush1.bf16.msra.mxu0 %v2014
    %2630 = vmatprep.subr.bf16.mxu0 %v2031
    %2631 = vmatpush1.bf16.msra.mxu0 %v2030
    %2632 = vmatprep.subr.bf16.mxu0 %v2047
    %2633 = vmatpush1.bf16.msra.mxu0 %v2046
    %2634 = vmatprep.subr.bf16.mxu0 %v2063
    %2635 = vmatpush1.bf16.msra.mxu0 %v2062
    %2636 = vmatprep.subr.bf16.mxu0 %v2079
    %2637 = vmatpush1.bf16.msra.mxu0 %v2078
    %2638 = vmatprep.subr.bf16.mxu0 %v2095
    %2639 = vmatpush1.bf16.msra.mxu0 %v2094
    %2640 = vmatprep.subr.bf16.mxu0 %v2111
    %2641 = vmatpush1.bf16.msra.mxu0 %v2110
    %2642 = vmatprep.subr.bf16.mxu0 %v2127
    %2643 = vmatpush1.bf16.msra.mxu0 %v2126
    %2644 = vmatprep.subr.bf16.mxu0 %v2143
    %2645 = vmatpush1.bf16.msra.mxu0 %v2142
    %2646 = vmatprep.subr.bf16.mxu0 %v2159
    %2647 = vmatpush1.bf16.msra.mxu0 %v2158
    %2648 = vmatprep.subr.bf16.mxu0 %v2175
    %2649 = vmatpush1.bf16.msra.mxu0 %v2174
    %2650 = vmatprep.mubr.bf16.mxu0 %v2443
    %2651 = vmatmul.mubr.bf16.gmra.mrb[0].mxu0 %v2442
    %v2652 = vpop.f32.mrb[0].mxu0
    %v2653 = vadd.f32 0.0, %v2652
    %v2654 = vpop.f32.mrb[0].mxu0
    %v2655 = vadd.f32 0.0, %v2654
    %v2656 = vpop.f32.mrb[0].mxu0
    %v2657 = vadd.f32 0.0, %v2656
    %v2658 = vpop.f32.mrb[0].mxu0
    %v2659 = vadd.f32 0.0, %v2658
    %2660 = vdwg.mxu0
    %2661 = vmatprep.subr.bf16.mxu0 %v2191
    %2662 = vmatpush1.bf16.msra.mxu0 %v2190
    %2663 = vmatprep.subr.bf16.mxu0 %v2207
    %2664 = vmatpush1.bf16.msra.mxu0 %v2206
    %2665 = vmatprep.subr.bf16.mxu0 %v2223
    %2666 = vmatpush1.bf16.msra.mxu0 %v2222
    %2667 = vmatprep.subr.bf16.mxu0 %v2239
    %2668 = vmatpush1.bf16.msra.mxu0 %v2238
    %2669 = vmatprep.subr.bf16.mxu0 %v2255
    %2670 = vmatpush1.bf16.msra.mxu0 %v2254
    %2671 = vmatprep.subr.bf16.mxu0 %v2271
    %2672 = vmatpush1.bf16.msra.mxu0 %v2270
    %2673 = vmatprep.subr.bf16.mxu0 %v2287
    %2674 = vmatpush1.bf16.msra.mxu0 %v2286
    %2675 = vmatprep.subr.bf16.mxu0 %v2303
    %2676 = vmatpush1.bf16.msra.mxu0 %v2302
    %2677 = vmatprep.subr.bf16.mxu0 %v2319
    %2678 = vmatpush1.bf16.msra.mxu0 %v2318
    %2679 = vmatprep.subr.bf16.mxu0 %v2335
    %2680 = vmatpush1.bf16.msra.mxu0 %v2334
    %2681 = vmatprep.subr.bf16.mxu0 %v2351
    %2682 = vmatpush1.bf16.msra.mxu0 %v2350
    %2683 = vmatprep.subr.bf16.mxu0 %v2367
    %2684 = vmatpush1.bf16.msra.mxu0 %v2366
    %2685 = vmatprep.subr.bf16.mxu0 %v2383
    %2686 = vmatpush1.bf16.msra.mxu0 %v2382
    %2687 = vmatprep.subr.bf16.mxu0 %v2399
    %2688 = vmatpush1.bf16.msra.mxu0 %v2398
    %2689 = vmatprep.subr.bf16.mxu0 %v2415
    %2690 = vmatpush1.bf16.msra.mxu0 %v2414
    %2691 = vmatprep.subr.bf16.mxu0 %v2431
    %2692 = vmatpush1.bf16.msra.mxu0 %v2430
    %2693 = vmatprep.mubr.bf16.mxu0 %v2445
    %2694 = vmatmul.mubr.bf16.gmra.mrb[0].mxu0 %v2444
    %v2695 = vpop.f32.mrb[0].mxu0
    %v2696 = vadd.f32 %v2653, %v2695
    %v2697 = vpop.f32.mrb[0].mxu0
    %v2698 = vadd.f32 %v2655, %v2697
    %v2699 = vpop.f32.mrb[0].mxu0
    %v2700 = vadd.f32 %v2657, %v2699
    %v2701 = vpop.f32.mrb[0].mxu0
    %v2702 = vadd.f32 %v2659, %v2701
    %2703 = vdwg.mxu0
    %2704 = vmatprep.subr.bf16.mxu0 %v1937
    %2705 = vmatpush1.bf16.msra.mxu0 %v1936
    %2706 = vmatprep.subr.bf16.mxu0 %v1953
    %2707 = vmatpush1.bf16.msra.mxu0 %v1952
    %2708 = vmatprep.subr.bf16.mxu0 %v1969
    %2709 = vmatpush1.bf16.msra.mxu0 %v1968
    %2710 = vmatprep.subr.bf16.mxu0 %v1985
    %2711 = vmatpush1.bf16.msra.mxu0 %v1984
    %2712 = vmatprep.subr.bf16.mxu0 %v2001
    %2713 = vmatpush1.bf16.msra.mxu0 %v2000
    %2714 = vmatprep.subr.bf16.mxu0 %v2017
    %2715 = vmatpush1.bf16.msra.mxu0 %v2016
    %2716 = vmatprep.subr.bf16.mxu0 %v2033
    %2717 = vmatpush1.bf16.msra.mxu0 %v2032
    %2718 = vmatprep.subr.bf16.mxu0 %v2049
    %2719 = vmatpush1.bf16.msra.mxu0 %v2048
    %2720 = vmatprep.subr.bf16.mxu0 %v2065
    %2721 = vmatpush1.bf16.msra.mxu0 %v2064
    %2722 = vmatprep.subr.bf16.mxu0 %v2081
    %2723 = vmatpush1.bf16.msra.mxu0 %v2080
    %2724 = vmatprep.subr.bf16.mxu0 %v2097
    %2725 = vmatpush1.bf16.msra.mxu0 %v2096
    %2726 = vmatprep.subr.bf16.mxu0 %v2113
    %2727 = vmatpush1.bf16.msra.mxu0 %v2112
    %2728 = vmatprep.subr.bf16.mxu0 %v2129
    %2729 = vmatpush1.bf16.msra.mxu0 %v2128
    %2730 = vmatprep.subr.bf16.mxu0 %v2145
    %2731 = vmatpush1.bf16.msra.mxu0 %v2144
    %2732 = vmatprep.subr.bf16.mxu0 %v2161
    %2733 = vmatpush1.bf16.msra.mxu0 %v2160
    %2734 = vmatprep.subr.bf16.mxu0 %v2177
    %2735 = vmatpush1.bf16.msra.mxu0 %v2176
    %2736 = vmatprep.mubr.bf16.mxu0 %v2443
    %2737 = vmatmul.mubr.bf16.gmra.mrb[0].mxu0 %v2442
    %v2738 = vpop.f32.mrb[0].mxu0
    %v2739 = vadd.f32 0.0, %v2738
    %v2740 = vpop.f32.mrb[0].mxu0
    %v2741 = vadd.f32 0.0, %v2740
    %v2742 = vpop.f32.mrb[0].mxu0
    %v2743 = vadd.f32 0.0, %v2742
    %v2744 = vpop.f32.mrb[0].mxu0
    %v2745 = vadd.f32 0.0, %v2744
    %2746 = vdwg.mxu0
    %2747 = vmatprep.subr.bf16.mxu0 %v2193
    %2748 = vmatpush1.bf16.msra.mxu0 %v2192
    %2749 = vmatprep.subr.bf16.mxu0 %v2209
    %2750 = vmatpush1.bf16.msra.mxu0 %v2208
    %2751 = vmatprep.subr.bf16.mxu0 %v2225
    %2752 = vmatpush1.bf16.msra.mxu0 %v2224
    %2753 = vmatprep.subr.bf16.mxu0 %v2241
    %2754 = vmatpush1.bf16.msra.mxu0 %v2240
    %2755 = vmatprep.subr.bf16.mxu0 %v2257
    %2756 = vmatpush1.bf16.msra.mxu0 %v2256
    %2757 = vmatprep.subr.bf16.mxu0 %v2273
    %2758 = vmatpush1.bf16.msra.mxu0 %v2272
    %2759 = vmatprep.subr.bf16.mxu0 %v2289
    %2760 = vmatpush1.bf16.msra.mxu0 %v2288
    %2761 = vmatprep.subr.bf16.mxu0 %v2305
    %2762 = vmatpush1.bf16.msra.mxu0 %v2304
    %2763 = vmatprep.subr.bf16.mxu0 %v2321
    %2764 = vmatpush1.bf16.msra.mxu0 %v2320
    %2765 = vmatprep.subr.bf16.mxu0 %v2337
    %2766 = vmatpush1.bf16.msra.mxu0 %v2336
    %2767 = vmatprep.subr.bf16.mxu0 %v2353
    %2768 = vmatpush1.bf16.msra.mxu0 %v2352
    %2769 = vmatprep.subr.bf16.mxu0 %v2369
    %2770 = vmatpush1.bf16.msra.mxu0 %v2368
    %2771 = vmatprep.subr.bf16.mxu0 %v2385
    %2772 = vmatpush1.bf16.msra.mxu0 %v2384
    %2773 = vmatprep.subr.bf16.mxu0 %v2401
    %2774 = vmatpush1.bf16.msra.mxu0 %v2400
    %2775 = vmatprep.subr.bf16.mxu0 %v2417
    %2776 = vmatpush1.bf16.msra.mxu0 %v2416
    %2777 = vmatprep.subr.bf16.mxu0 %v2433
    %2778 = vmatpush1.bf16.msra.mxu0 %v2432
    %2779 = vmatprep.mubr.bf16.mxu0 %v2445
    %2780 = vmatmul.mubr.bf16.gmra.mrb[0].mxu0 %v2444
    %v2781 = vpop.f32.mrb[0].mxu0
    %v2782 = vadd.f32 %v2739, %v2781
    %v2783 = vpop.f32.mrb[0].mxu0
    %v2784 = vadd.f32 %v2741, %v2783
    %v2785 = vpop.f32.mrb[0].mxu0
    %v2786 = vadd.f32 %v2743, %v2785
    %v2787 = vpop.f32.mrb[0].mxu0
    %v2788 = vadd.f32 %v2745, %v2787
    %2789 = vdwg.mxu0
    %2790 = vmatprep.subr.bf16.mxu0 %v1939
    %2791 = vmatpush1.bf16.msra.mxu0 %v1938
    %2792 = vmatprep.subr.bf16.mxu0 %v1955
    %2793 = vmatpush1.bf16.msra.mxu0 %v1954
    %2794 = vmatprep.subr.bf16.mxu0 %v1971
    %2795 = vmatpush1.bf16.msra.mxu0 %v1970
    %2796 = vmatprep.subr.bf16.mxu0 %v1987
    %2797 = vmatpush1.bf16.msra.mxu0 %v1986
    %2798 = vmatprep.subr.bf16.mxu0 %v2003
    %2799 = vmatpush1.bf16.msra.mxu0 %v2002
    %2800 = vmatprep.subr.bf16.mxu0 %v2019
    %2801 = vmatpush1.bf16.msra.mxu0 %v2018
    %2802 = vmatprep.subr.bf16.mxu0 %v2035
    %2803 = vmatpush1.bf16.msra.mxu0 %v2034
    %2804 = vmatprep.subr.bf16.mxu0 %v2051
    %2805 = vmatpush1.bf16.msra.mxu0 %v2050
    %2806 = vmatprep.subr.bf16.mxu0 %v2067
    %2807 = vmatpush1.bf16.msra.mxu0 %v2066
    %2808 = vmatprep.subr.bf16.mxu0 %v2083
    %2809 = vmatpush1.bf16.msra.mxu0 %v2082
    %2810 = vmatprep.subr.bf16.mxu0 %v2099
    %2811 = vmatpush1.bf16.msra.mxu0 %v2098
    %2812 = vmatprep.subr.bf16.mxu0 %v2115
    %2813 = vmatpush1.bf16.msra.mxu0 %v2114
    %2814 = vmatprep.subr.bf16.mxu0 %v2131
    %2815 = vmatpush1.bf16.msra.mxu0 %v2130
    %2816 = vmatprep.subr.bf16.mxu0 %v2147
    %2817 = vmatpush1.bf16.msra.mxu0 %v2146
    %2818 = vmatprep.subr.bf16.mxu0 %v2163
    %2819 = vmatpush1.bf16.msra.mxu0 %v2162
    %2820 = vmatprep.subr.bf16.mxu0 %v2179
    %2821 = vmatpush1.bf16.msra.mxu0 %v2178
    %2822 = vmatprep.mubr.bf16.mxu0 %v2443
    %2823 = vmatmul.mubr.bf16.gmra.mrb[0].mxu0 %v2442
    %v2824 = vpop.f32.mrb[0].mxu0
    %v2825 = vadd.f32 0.0, %v2824
    %v2826 = vpop.f32.mrb[0].mxu0
    %v2827 = vadd.f32 0.0, %v2826
    %v2828 = vpop.f32.mrb[0].mxu0
    %v2829 = vadd.f32 0.0, %v2828
    %v2830 = vpop.f32.mrb[0].mxu0
    %v2831 = vadd.f32 0.0, %v2830
    %2832 = vdwg.mxu0
    %2833 = vmatprep.subr.bf16.mxu0 %v2195
    %2834 = vmatpush1.bf16.msra.mxu0 %v2194
    %2835 = vmatprep.subr.bf16.mxu0 %v2211
    %2836 = vmatpush1.bf16.msra.mxu0 %v2210
    %2837 = vmatprep.subr.bf16.mxu0 %v2227
    %2838 = vmatpush1.bf16.msra.mxu0 %v2226
    %2839 = vmatprep.subr.bf16.mxu0 %v2243
    %2840 = vmatpush1.bf16.msra.mxu0 %v2242
    %2841 = vmatprep.subr.bf16.mxu0 %v2259
    %2842 = vmatpush1.bf16.msra.mxu0 %v2258
    %2843 = vmatprep.subr.bf16.mxu0 %v2275
    %2844 = vmatpush1.bf16.msra.mxu0 %v2274
    %2845 = vmatprep.subr.bf16.mxu0 %v2291
    %2846 = vmatpush1.bf16.msra.mxu0 %v2290
    %2847 = vmatprep.subr.bf16.mxu0 %v2307
    %2848 = vmatpush1.bf16.msra.mxu0 %v2306
    %2849 = vmatprep.subr.bf16.mxu0 %v2323
    %2850 = vmatpush1.bf16.msra.mxu0 %v2322
    %2851 = vmatprep.subr.bf16.mxu0 %v2339
    %2852 = vmatpush1.bf16.msra.mxu0 %v2338
    %2853 = vmatprep.subr.bf16.mxu0 %v2355
    %2854 = vmatpush1.bf16.msra.mxu0 %v2354
    %2855 = vmatprep.subr.bf16.mxu0 %v2371
    %2856 = vmatpush1.bf16.msra.mxu0 %v2370
    %2857 = vmatprep.subr.bf16.mxu0 %v2387
    %2858 = vmatpush1.bf16.msra.mxu0 %v2386
    %2859 = vmatprep.subr.bf16.mxu0 %v2403
    %2860 = vmatpush1.bf16.msra.mxu0 %v2402
    %2861 = vmatprep.subr.bf16.mxu0 %v2419
    %2862 = vmatpush1.bf16.msra.mxu0 %v2418
    %2863 = vmatprep.subr.bf16.mxu0 %v2435
    %2864 = vmatpush1.bf16.msra.mxu0 %v2434
    %2865 = vmatprep.mubr.bf16.mxu0 %v2445
    %2866 = vmatmul.mubr.bf16.gmra.mrb[0].mxu0 %v2444
    %v2867 = vpop.f32.mrb[0].mxu0
    %v2868 = vadd.f32 %v2825, %v2867
    %v2869 = vpop.f32.mrb[0].mxu0
    %v2870 = vadd.f32 %v2827, %v2869
    %v2871 = vpop.f32.mrb[0].mxu0
    %v2872 = vadd.f32 %v2829, %v2871
    %v2873 = vpop.f32.mrb[0].mxu0
    %v2874 = vadd.f32 %v2831, %v2873
    %2875 = vdwg.mxu0
    %2876 = vmatprep.subr.bf16.mxu0 %v1941
    %2877 = vmatpush1.bf16.msra.mxu0 %v1940
    %2878 = vmatprep.subr.bf16.mxu0 %v1957
    %2879 = vmatpush1.bf16.msra.mxu0 %v1956
    %2880 = vmatprep.subr.bf16.mxu0 %v1973
    %2881 = vmatpush1.bf16.msra.mxu0 %v1972
    %2882 = vmatprep.subr.bf16.mxu0 %v1989
    %2883 = vmatpush1.bf16.msra.mxu0 %v1988
    %2884 = vmatprep.subr.bf16.mxu0 %v2005
    %2885 = vmatpush1.bf16.msra.mxu0 %v2004
    %2886 = vmatprep.subr.bf16.mxu0 %v2021
    %2887 = vmatpush1.bf16.msra.mxu0 %v2020
    %2888 = vmatprep.subr.bf16.mxu0 %v2037
    %2889 = vmatpush1.bf16.msra.mxu0 %v2036
    %2890 = vmatprep.subr.bf16.mxu0 %v2053
    %2891 = vmatpush1.bf16.msra.mxu0 %v2052
    %2892 = vmatprep.subr.bf16.mxu0 %v2069
    %2893 = vmatpush1.bf16.msra.mxu0 %v2068
    %2894 = vmatprep.subr.bf16.mxu0 %v2085
    %2895 = vmatpush1.bf16.msra.mxu0 %v2084
    %2896 = vmatprep.subr.bf16.mxu0 %v2101
    %2897 = vmatpush1.bf16.msra.mxu0 %v2100
    %2898 = vmatprep.subr.bf16.mxu0 %v2117
    %2899 = vmatpush1.bf16.msra.mxu0 %v2116
    %2900 = vmatprep.subr.bf16.mxu0 %v2133
    %2901 = vmatpush1.bf16.msra.mxu0 %v2132
    %2902 = vmatprep.subr.bf16.mxu0 %v2149
    %2903 = vmatpush1.bf16.msra.mxu0 %v2148
    %2904 = vmatprep.subr.bf16.mxu0 %v2165
    %2905 = vmatpush1.bf16.msra.mxu0 %v2164
    %2906 = vmatprep.subr.bf16.mxu0 %v2181
    %2907 = vmatpush1.bf16.msra.mxu0 %v2180
    %2908 = vmatprep.mubr.bf16.mxu0 %v2443
    %2909 = vmatmul.mubr.bf16.gmra.mrb[0].mxu0 %v2442
    %v2910 = vpop.f32.mrb[0].mxu0
    %v2911 = vadd.f32 0.0, %v2910
    %v2912 = vpop.f32.mrb[0].mxu0
    %v2913 = vadd.f32 0.0, %v2912
    %v2914 = vpop.f32.mrb[0].mxu0
    %v2915 = vadd.f32 0.0, %v2914
    %v2916 = vpop.f32.mrb[0].mxu0
    %v2917 = vadd.f32 0.0, %v2916
    %2918 = vdwg.mxu0
    %2919 = vmatprep.subr.bf16.mxu0 %v2197
    %2920 = vmatpush1.bf16.msra.mxu0 %v2196
    %2921 = vmatprep.subr.bf16.mxu0 %v2213
    %2922 = vmatpush1.bf16.msra.mxu0 %v2212
    %2923 = vmatprep.subr.bf16.mxu0 %v2229
    %2924 = vmatpush1.bf16.msra.mxu0 %v2228
    %2925 = vmatprep.subr.bf16.mxu0 %v2245
    %2926 = vmatpush1.bf16.msra.mxu0 %v2244
    %2927 = vmatprep.subr.bf16.mxu0 %v2261
    %2928 = vmatpush1.bf16.msra.mxu0 %v2260
    %2929 = vmatprep.subr.bf16.mxu0 %v2277
    %2930 = vmatpush1.bf16.msra.mxu0 %v2276
    %2931 = vmatprep.subr.bf16.mxu0 %v2293
    %2932 = vmatpush1.bf16.msra.mxu0 %v2292
    %2933 = vmatprep.subr.bf16.mxu0 %v2309
    %2934 = vmatpush1.bf16.msra.mxu0 %v2308
    %2935 = vmatprep.subr.bf16.mxu0 %v2325
    %2936 = vmatpush1.bf16.msra.mxu0 %v2324
    %2937 = vmatprep.subr.bf16.mxu0 %v2341
    %2938 = vmatpush1.bf16.msra.mxu0 %v2340
    %2939 = vmatprep.subr.bf16.mxu0 %v2357
    %2940 = vmatpush1.bf16.msra.mxu0 %v2356
    %2941 = vmatprep.subr.bf16.mxu0 %v2373
    %2942 = vmatpush1.bf16.msra.mxu0 %v2372
    %2943 = vmatprep.subr.bf16.mxu0 %v2389
    %2944 = vmatpush1.bf16.msra.mxu0 %v2388
    %2945 = vmatprep.subr.bf16.mxu0 %v2405
    %2946 = vmatpush1.bf16.msra.mxu0 %v2404
    %2947 = vmatprep.subr.bf16.mxu0 %v2421
    %2948 = vmatpush1.bf16.msra.mxu0 %v2420
    %2949 = vmatprep.subr.bf16.mxu0 %v2437
    %2950 = vmatpush1.bf16.msra.mxu0 %v2436
    %2951 = vmatprep.mubr.bf16.mxu0 %v2445
    %2952 = vmatmul.mubr.bf16.gmra.mrb[0].mxu0 %v2444
    %v2953 = vpop.f32.mrb[0].mxu0
    %v2954 = vadd.f32 %v2911, %v2953
    %v2955 = vpop.f32.mrb[0].mxu0
    %v2956 = vadd.f32 %v2913, %v2955
    %v2957 = vpop.f32.mrb[0].mxu0
    %v2958 = vadd.f32 %v2915, %v2957
    %v2959 = vpop.f32.mrb[0].mxu0
    %v2960 = vadd.f32 %v2917, %v2959
    %2961 = vdwg.mxu0
    %2962 = vmatprep.subr.bf16.mxu0 %v1943
    %2963 = vmatpush1.bf16.msra.mxu0 %v1942
    %2964 = vmatprep.subr.bf16.mxu0 %v1959
    %2965 = vmatpush1.bf16.msra.mxu0 %v1958
    %2966 = vmatprep.subr.bf16.mxu0 %v1975
    %2967 = vmatpush1.bf16.msra.mxu0 %v1974
    %2968 = vmatprep.subr.bf16.mxu0 %v1991
    %2969 = vmatpush1.bf16.msra.mxu0 %v1990
    %2970 = vmatprep.subr.bf16.mxu0 %v2007
    %2971 = vmatpush1.bf16.msra.mxu0 %v2006
    %2972 = vmatprep.subr.bf16.mxu0 %v2023
    %2973 = vmatpush1.bf16.msra.mxu0 %v2022
    %2974 = vmatprep.subr.bf16.mxu0 %v2039
    %2975 = vmatpush1.bf16.msra.mxu0 %v2038
    %2976 = vmatprep.subr.bf16.mxu0 %v2055
    %2977 = vmatpush1.bf16.msra.mxu0 %v2054
    %2978 = vmatprep.subr.bf16.mxu0 %v2071
    %2979 = vmatpush1.bf16.msra.mxu0 %v2070
    %2980 = vmatprep.subr.bf16.mxu0 %v2087
    %2981 = vmatpush1.bf16.msra.mxu0 %v2086
    %2982 = vmatprep.subr.bf16.mxu0 %v2103
    %2983 = vmatpush1.bf16.msra.mxu0 %v2102
    %2984 = vmatprep.subr.bf16.mxu0 %v2119
    %2985 = vmatpush1.bf16.msra.mxu0 %v2118
    %2986 = vmatprep.subr.bf16.mxu0 %v2135
    %2987 = vmatpush1.bf16.msra.mxu0 %v2134
    %2988 = vmatprep.subr.bf16.mxu0 %v2151
    %2989 = vmatpush1.bf16.msra.mxu0 %v2150
    %2990 = vmatprep.subr.bf16.mxu0 %v2167
    %2991 = vmatpush1.bf16.msra.mxu0 %v2166
    %2992 = vmatprep.subr.bf16.mxu0 %v2183
    %2993 = vmatpush1.bf16.msra.mxu0 %v2182
    %2994 = vmatprep.mubr.bf16.mxu0 %v2443
    %2995 = vmatmul.mubr.bf16.gmra.mrb[0].mxu0 %v2442
    %v2996 = vpop.f32.mrb[0].mxu0
    %v2997 = vadd.f32 0.0, %v2996
    %v2998 = vpop.f32.mrb[0].mxu0
    %v2999 = vadd.f32 0.0, %v2998
    %v3000 = vpop.f32.mrb[0].mxu0
    %v3001 = vadd.f32 0.0, %v3000
    %v3002 = vpop.f32.mrb[0].mxu0
    %v3003 = vadd.f32 0.0, %v3002
    %3004 = vdwg.mxu0
    %3005 = vmatprep.subr.bf16.mxu0 %v2199
    %3006 = vmatpush1.bf16.msra.mxu0 %v2198
    %3007 = vmatprep.subr.bf16.mxu0 %v2215
    %3008 = vmatpush1.bf16.msra.mxu0 %v2214
    %3009 = vmatprep.subr.bf16.mxu0 %v2231
    %3010 = vmatpush1.bf16.msra.mxu0 %v2230
    %3011 = vmatprep.subr.bf16.mxu0 %v2247
    %3012 = vmatpush1.bf16.msra.mxu0 %v2246
    %3013 = vmatprep.subr.bf16.mxu0 %v2263
    %3014 = vmatpush1.bf16.msra.mxu0 %v2262
    %3015 = vmatprep.subr.bf16.mxu0 %v2279
    %3016 = vmatpush1.bf16.msra.mxu0 %v2278
    %3017 = vmatprep.subr.bf16.mxu0 %v2295
    %3018 = vmatpush1.bf16.msra.mxu0 %v2294
    %3019 = vmatprep.subr.bf16.mxu0 %v2311
    %3020 = vmatpush1.bf16.msra.mxu0 %v2310
    %3021 = vmatprep.subr.bf16.mxu0 %v2327
    %3022 = vmatpush1.bf16.msra.mxu0 %v2326
    %3023 = vmatprep.subr.bf16.mxu0 %v2343
    %3024 = vmatpush1.bf16.msra.mxu0 %v2342
    %3025 = vmatprep.subr.bf16.mxu0 %v2359
    %3026 = vmatpush1.bf16.msra.mxu0 %v2358
    %3027 = vmatprep.subr.bf16.mxu0 %v2375
    %3028 = vmatpush1.bf16.msra.mxu0 %v2374
    %3029 = vmatprep.subr.bf16.mxu0 %v2391
    %3030 = vmatpush1.bf16.msra.mxu0 %v2390
    %3031 = vmatprep.subr.bf16.mxu0 %v2407
    %3032 = vmatpush1.bf16.msra.mxu0 %v2406
    %3033 = vmatprep.subr.bf16.mxu0 %v2423
    %3034 = vmatpush1.bf16.msra.mxu0 %v2422
    %3035 = vmatprep.subr.bf16.mxu0 %v2439
    %3036 = vmatpush1.bf16.msra.mxu0 %v2438
    %3037 = vmatprep.mubr.bf16.mxu0 %v2445
    %3038 = vmatmul.mubr.bf16.gmra.mrb[0].mxu0 %v2444
    %v3039 = vpop.f32.mrb[0].mxu0
    %v3040 = vadd.f32 %v2997, %v3039
    %v3041 = vpop.f32.mrb[0].mxu0
    %v3042 = vadd.f32 %v2999, %v3041
    %v3043 = vpop.f32.mrb[0].mxu0
    %v3044 = vadd.f32 %v3001, %v3043
    %v3045 = vpop.f32.mrb[0].mxu0
    %v3046 = vadd.f32 %v3003, %v3045
    %3047 = vdwg.mxu0
    %3048 = vmatprep.subr.bf16.mxu0 %v1945
    %3049 = vmatpush1.bf16.msra.mxu0 %v1944
    %3050 = vmatprep.subr.bf16.mxu0 %v1961
    %3051 = vmatpush1.bf16.msra.mxu0 %v1960
    %3052 = vmatprep.subr.bf16.mxu0 %v1977
    %3053 = vmatpush1.bf16.msra.mxu0 %v1976
    %3054 = vmatprep.subr.bf16.mxu0 %v1993
    %3055 = vmatpush1.bf16.msra.mxu0 %v1992
    %3056 = vmatprep.subr.bf16.mxu0 %v2009
    %3057 = vmatpush1.bf16.msra.mxu0 %v2008
    %3058 = vmatprep.subr.bf16.mxu0 %v2025
    %3059 = vmatpush1.bf16.msra.mxu0 %v2024
    %3060 = vmatprep.subr.bf16.mxu0 %v2041
    %3061 = vmatpush1.bf16.msra.mxu0 %v2040
    %3062 = vmatprep.subr.bf16.mxu0 %v2057
    %3063 = vmatpush1.bf16.msra.mxu0 %v2056
    %3064 = vmatprep.subr.bf16.mxu0 %v2073
    %3065 = vmatpush1.bf16.msra.mxu0 %v2072
    %3066 = vmatprep.subr.bf16.mxu0 %v2089
    %3067 = vmatpush1.bf16.msra.mxu0 %v2088
    %3068 = vmatprep.subr.bf16.mxu0 %v2105
    %3069 = vmatpush1.bf16.msra.mxu0 %v2104
    %3070 = vmatprep.subr.bf16.mxu0 %v2121
    %3071 = vmatpush1.bf16.msra.mxu0 %v2120
    %3072 = vmatprep.subr.bf16.mxu0 %v2137
    %3073 = vmatpush1.bf16.msra.mxu0 %v2136
    %3074 = vmatprep.subr.bf16.mxu0 %v2153
    %3075 = vmatpush1.bf16.msra.mxu0 %v2152
    %3076 = vmatprep.subr.bf16.mxu0 %v2169
    %3077 = vmatpush1.bf16.msra.mxu0 %v2168
    %3078 = vmatprep.subr.bf16.mxu0 %v2185
    %3079 = vmatpush1.bf16.msra.mxu0 %v2184
    %3080 = vmatprep.mubr.bf16.mxu0 %v2443
    %3081 = vmatmul.mubr.bf16.gmra.mrb[0].mxu0 %v2442
    %v3082 = vpop.f32.mrb[0].mxu0
    %v3083 = vadd.f32 0.0, %v3082
    %v3084 = vpop.f32.mrb[0].mxu0
    %v3085 = vadd.f32 0.0, %v3084
    %v3086 = vpop.f32.mrb[0].mxu0
    %v3087 = vadd.f32 0.0, %v3086
    %v3088 = vpop.f32.mrb[0].mxu0
    %v3089 = vadd.f32 0.0, %v3088
    %3090 = vdwg.mxu0
    %3091 = vmatprep.subr.bf16.mxu0 %v2201
    %3092 = vmatpush1.bf16.msra.mxu0 %v2200
    %3093 = vmatprep.subr.bf16.mxu0 %v2217
    %3094 = vmatpush1.bf16.msra.mxu0 %v2216
    %3095 = vmatprep.subr.bf16.mxu0 %v2233
    %3096 = vmatpush1.bf16.msra.mxu0 %v2232
    %3097 = vmatprep.subr.bf16.mxu0 %v2249
    %3098 = vmatpush1.bf16.msra.mxu0 %v2248
    %3099 = vmatprep.subr.bf16.mxu0 %v2265
    %3100 = vmatpush1.bf16.msra.mxu0 %v2264
    %3101 = vmatprep.subr.bf16.mxu0 %v2281
    %3102 = vmatpush1.bf16.msra.mxu0 %v2280
    %3103 = vmatprep.subr.bf16.mxu0 %v2297
    %3104 = vmatpush1.bf16.msra.mxu0 %v2296
    %3105 = vmatprep.subr.bf16.mxu0 %v2313
    %3106 = vmatpush1.bf16.msra.mxu0 %v2312
    %3107 = vmatprep.subr.bf16.mxu0 %v2329
    %3108 = vmatpush1.bf16.msra.mxu0 %v2328
    %3109 = vmatprep.subr.bf16.mxu0 %v2345
    %3110 = vmatpush1.bf16.msra.mxu0 %v2344
    %3111 = vmatprep.subr.bf16.mxu0 %v2361
    %3112 = vmatpush1.bf16.msra.mxu0 %v2360
    %3113 = vmatprep.subr.bf16.mxu0 %v2377
    %3114 = vmatpush1.bf16.msra.mxu0 %v2376
    %3115 = vmatprep.subr.bf16.mxu0 %v2393
    %3116 = vmatpush1.bf16.msra.mxu0 %v2392
    %3117 = vmatprep.subr.bf16.mxu0 %v2409
    %3118 = vmatpush1.bf16.msra.mxu0 %v2408
    %3119 = vmatprep.subr.bf16.mxu0 %v2425
    %3120 = vmatpush1.bf16.msra.mxu0 %v2424
    %3121 = vmatprep.subr.bf16.mxu0 %v2441
    %3122 = vmatpush1.bf16.msra.mxu0 %v2440
    %3123 = vmatprep.mubr.bf16.mxu0 %v2445
    %3124 = vmatmul.mubr.bf16.gmra.mrb[0].mxu0 %v2444
    %v3125 = vpop.f32.mrb[0].mxu0
    %v3126 = vadd.f32 %v3083, %v3125
    %v3127 = vpop.f32.mrb[0].mxu0
    %v3128 = vadd.f32 %v3085, %v3127
    %v3129 = vpop.f32.mrb[0].mxu0
    %v3130 = vadd.f32 %v3087, %v3129
    %v3131 = vpop.f32.mrb[0].mxu0
    %v3132 = vadd.f32 %v3089, %v3131
    %3133 = vdwg.mxu0
    %v3134 = vld [vmem:[%s5] sm:$0xff]
    %v3135 = vld [vmem:[%s5 + $0x8] sm:$0xff]
    %v3138 = vlaneseq
    %v3139 = vshrl.u32 %v3138, 7
    %v3140 = vsub.s32 0, %v3139
    %v3141 = vrot.slane %v3134, %v3140
    %v3142 = vlaneseq
    %v3143 = vshrl.u32 %v3142, 7
    %v3144 = vsub.s32 1, %v3143
    %v3145 = vrot.slane %v3134, %v3144
    %v3146 = vlaneseq
    %v3147 = vshrl.u32 %v3146, 7
    %v3148 = vsub.s32 2, %v3147
    %v3149 = vrot.slane %v3134, %v3148
    %v3150 = vlaneseq
    %v3151 = vshrl.u32 %v3150, 7
    %v3152 = vsub.s32 3, %v3151
    %v3153 = vrot.slane %v3134, %v3152
    %v3154 = vlaneseq
    %v3155 = vshrl.u32 %v3154, 7
    %v3156 = vsub.s32 4, %v3155
    %v3157 = vrot.slane %v3134, %v3156
    %v3158 = vlaneseq
    %v3159 = vshrl.u32 %v3158, 7
    %v3160 = vsub.s32 5, %v3159
    %v3161 = vrot.slane %v3134, %v3160
    %v3162 = vlaneseq
    %v3163 = vshrl.u32 %v3162, 7
    %v3164 = vsub.s32 6, %v3163
    %v3165 = vrot.slane %v3134, %v3164
    %v3166 = vlaneseq
    %v3167 = vshrl.u32 %v3166, 7
    %v3168 = vsub.s32 7, %v3167
    %v3169 = vrot.slane %v3134, %v3168
    %v3170 = vlaneseq
    %v3171 = vshrl.u32 %v3170, 7
    %v3172 = vsub.s32 0, %v3171
    %v3173 = vrot.slane %v3135, %v3172
    %v3174 = vlaneseq
    %v3175 = vshrl.u32 %v3174, 7
    %v3176 = vsub.s32 1, %v3175
    %v3177 = vrot.slane %v3135, %v3176
    %v3178 = vlaneseq
    %v3179 = vshrl.u32 %v3178, 7
    %v3180 = vsub.s32 2, %v3179
    %v3181 = vrot.slane %v3135, %v3180
    %v3182 = vlaneseq
    %v3183 = vshrl.u32 %v3182, 7
    %v3184 = vsub.s32 3, %v3183
    %v3185 = vrot.slane %v3135, %v3184
    %v3186 = vlaneseq
    %v3187 = vshrl.u32 %v3186, 7
    %v3188 = vsub.s32 4, %v3187
    %v3189 = vrot.slane %v3135, %v3188
    %v3190 = vlaneseq
    %v3191 = vshrl.u32 %v3190, 7
    %v3192 = vsub.s32 5, %v3191
    %v3193 = vrot.slane %v3135, %v3192
    %v3194 = vlaneseq
    %v3195 = vshrl.u32 %v3194, 7
    %v3196 = vsub.s32 6, %v3195
    %v3197 = vrot.slane %v3135, %v3196
    %v3198 = vlaneseq
    %v3199 = vshrl.u32 %v3198, 7
    %v3200 = vsub.s32 7, %v3199
    %v3201 = vrot.slane %v3135, %v3200
    %v3218 = vmul.f32 %v2524, %v3141
    %v3219 = vmul.f32 %v2526, %v3145
    %v3220 = vmul.f32 %v2610, %v3149
    %v3221 = vmul.f32 %v2612, %v3153
    %v3222 = vmul.f32 %v2696, %v3157
    %v3223 = vmul.f32 %v2698, %v3161
    %v3224 = vmul.f32 %v2782, %v3165
    %v3225 = vmul.f32 %v2784, %v3169
    %v3226 = vmul.f32 %v2868, %v3173
    %v3227 = vmul.f32 %v2870, %v3177
    %v3228 = vmul.f32 %v2954, %v3181
    %v3229 = vmul.f32 %v2956, %v3185
    %v3230 = vmul.f32 %v3040, %v3189
    %v3231 = vmul.f32 %v3042, %v3193
    %v3232 = vmul.f32 %v3126, %v3197
    %v3233 = vmul.f32 %v3128, %v3201
    %v3234 = vmul.f32 %v2528, %v3141
    %v3235 = vmul.f32 %v2530, %v3145
    %v3236 = vmul.f32 %v2614, %v3149
    %v3237 = vmul.f32 %v2616, %v3153
    %v3238 = vmul.f32 %v2700, %v3157
    %v3239 = vmul.f32 %v2702, %v3161
    %v3240 = vmul.f32 %v2786, %v3165
    %v3241 = vmul.f32 %v2788, %v3169
    %v3242 = vmul.f32 %v2872, %v3173
    %v3243 = vmul.f32 %v2874, %v3177
    %v3244 = vmul.f32 %v2958, %v3181
    %v3245 = vmul.f32 %v2960, %v3185
    %v3246 = vmul.f32 %v3044, %v3189
    %v3247 = vmul.f32 %v3046, %v3193
    %v3248 = vmul.f32 %v3130, %v3197
    %v3249 = vmul.f32 %v3132, %v3201
    %v3250 = vld [vmem:[%s6] sm:$0xff]
    %v3251 = vld [vmem:[%s6 + $0x8] sm:$0xff]
    %v3254 = vlaneseq
    %v3255 = vshrl.u32 %v3254, 7
    %v3256 = vsub.s32 0, %v3255
    %v3257 = vrot.slane %v3250, %v3256
    %v3258 = vlaneseq
    %v3259 = vshrl.u32 %v3258, 7
    %v3260 = vsub.s32 1, %v3259
    %v3261 = vrot.slane %v3250, %v3260
    %v3262 = vlaneseq
    %v3263 = vshrl.u32 %v3262, 7
    %v3264 = vsub.s32 2, %v3263
    %v3265 = vrot.slane %v3250, %v3264
    %v3266 = vlaneseq
    %v3267 = vshrl.u32 %v3266, 7
    %v3268 = vsub.s32 3, %v3267
    %v3269 = vrot.slane %v3250, %v3268
    %v3270 = vlaneseq
    %v3271 = vshrl.u32 %v3270, 7
    %v3272 = vsub.s32 4, %v3271
    %v3273 = vrot.slane %v3250, %v3272
    %v3274 = vlaneseq
    %v3275 = vshrl.u32 %v3274, 7
    %v3276 = vsub.s32 5, %v3275
    %v3277 = vrot.slane %v3250, %v3276
    %v3278 = vlaneseq
    %v3279 = vshrl.u32 %v3278, 7
    %v3280 = vsub.s32 6, %v3279
    %v3281 = vrot.slane %v3250, %v3280
    %v3282 = vlaneseq
    %v3283 = vshrl.u32 %v3282, 7
    %v3284 = vsub.s32 7, %v3283
    %v3285 = vrot.slane %v3250, %v3284
    %v3286 = vlaneseq
    %v3287 = vshrl.u32 %v3286, 7
    %v3288 = vsub.s32 0, %v3287
    %v3289 = vrot.slane %v3251, %v3288
    %v3290 = vlaneseq
    %v3291 = vshrl.u32 %v3290, 7
    %v3292 = vsub.s32 1, %v3291
    %v3293 = vrot.slane %v3251, %v3292
    %v3294 = vlaneseq
    %v3295 = vshrl.u32 %v3294, 7
    %v3296 = vsub.s32 2, %v3295
    %v3297 = vrot.slane %v3251, %v3296
    %v3298 = vlaneseq
    %v3299 = vshrl.u32 %v3298, 7
    %v3300 = vsub.s32 3, %v3299
    %v3301 = vrot.slane %v3251, %v3300
    %v3302 = vlaneseq
    %v3303 = vshrl.u32 %v3302, 7
    %v3304 = vsub.s32 4, %v3303
    %v3305 = vrot.slane %v3251, %v3304
    %v3306 = vlaneseq
    %v3307 = vshrl.u32 %v3306, 7
    %v3308 = vsub.s32 5, %v3307
    %v3309 = vrot.slane %v3251, %v3308
    %v3310 = vlaneseq
    %v3311 = vshrl.u32 %v3310, 7
    %v3312 = vsub.s32 6, %v3311
    %v3313 = vrot.slane %v3251, %v3312
    %v3314 = vlaneseq
    %v3315 = vshrl.u32 %v3314, 7
    %v3316 = vsub.s32 7, %v3315
    %v3317 = vrot.slane %v3251, %v3316
    %v3334 = vadd.f32 %v3218, %v3257
    %v3335 = vadd.f32 %v3219, %v3261
    %v3336 = vadd.f32 %v3220, %v3265
    %v3337 = vadd.f32 %v3221, %v3269
    %v3338 = vadd.f32 %v3222, %v3273
    %v3339 = vadd.f32 %v3223, %v3277
    %v3340 = vadd.f32 %v3224, %v3281
    %v3341 = vadd.f32 %v3225, %v3285
    %v3342 = vadd.f32 %v3226, %v3289
    %v3343 = vadd.f32 %v3227, %v3293
    %v3344 = vadd.f32 %v3228, %v3297
    %v3345 = vadd.f32 %v3229, %v3301
    %v3346 = vadd.f32 %v3230, %v3305
    %v3347 = vadd.f32 %v3231, %v3309
    %v3348 = vadd.f32 %v3232, %v3313
    %v3349 = vadd.f32 %v3233, %v3317
    %v3350 = vadd.f32 %v3234, %v3257
    %v3351 = vadd.f32 %v3235, %v3261
    %v3352 = vadd.f32 %v3236, %v3265
    %v3353 = vadd.f32 %v3237, %v3269
    %v3354 = vadd.f32 %v3238, %v3273
    %v3355 = vadd.f32 %v3239, %v3277
    %v3356 = vadd.f32 %v3240, %v3281
    %v3357 = vadd.f32 %v3241, %v3285
    %v3358 = vadd.f32 %v3242, %v3289
    %v3359 = vadd.f32 %v3243, %v3293
    %v3360 = vadd.f32 %v3244, %v3297
    %v3361 = vadd.f32 %v3245, %v3301
    %v3362 = vadd.f32 %v3246, %v3305
    %v3363 = vadd.f32 %v3247, %v3309
    %v3364 = vadd.f32 %v3248, %v3313
    %v3365 = vadd.f32 %v3249, %v3317
    %3366 = vst [vmem:[%s7] sm:$0xff] %v3334
    %3367 = vst [vmem:[%s7 + $0x8] sm:$0xff] %v3335
    %3368 = vst [vmem:[%s7 + $0x10] sm:$0xff] %v3336
    %3369 = vst [vmem:[%s7 + $0x18] sm:$0xff] %v3337
    %3370 = vst [vmem:[%s7 + $0x20] sm:$0xff] %v3338
    %3371 = vst [vmem:[%s7 + $0x28] sm:$0xff] %v3339
    %3372 = vst [vmem:[%s7 + $0x30] sm:$0xff] %v3340
    %3373 = vst [vmem:[%s7 + $0x38] sm:$0xff] %v3341
    %3374 = vst [vmem:[%s7 + $0x40] sm:$0xff] %v3342
    %3375 = vst [vmem:[%s7 + $0x48] sm:$0xff] %v3343
    %3376 = vst [vmem:[%s7 + $0x50] sm:$0xff] %v3344
    %3377 = vst [vmem:[%s7 + $0x58] sm:$0xff] %v3345
    %3378 = vst [vmem:[%s7 + $0x60] sm:$0xff] %v3346
    %3379 = vst [vmem:[%s7 + $0x68] sm:$0xff] %v3347
    %3380 = vst [vmem:[%s7 + $0x70] sm:$0xff] %v3348
    %3381 = vst [vmem:[%s7 + $0x78] sm:$0xff] %v3349
    %3382 = vst [vmem:[%s7 + $0x80] sm:$0xff] %v3350
    %3383 = vst [vmem:[%s7 + $0x88] sm:$0xff] %v3351
    %3384 = vst [vmem:[%s7 + $0x90] sm:$0xff] %v3352
    %3385 = vst [vmem:[%s7 + $0x98] sm:$0xff] %v3353
    %3386 = vst [vmem:[%s7 + $0xa0] sm:$0xff] %v3354
    %3387 = vst [vmem:[%s7 + $0xa8] sm:$0xff] %v3355
    %3388 = vst [vmem:[%s7 + $0xb0] sm:$0xff] %v3356
    %3389 = vst [vmem:[%s7 + $0xb8] sm:$0xff] %v3357
    %3390 = vst [vmem:[%s7 + $0xc0] sm:$0xff] %v3358
    %3391 = vst [vmem:[%s7 + $0xc8] sm:$0xff] %v3359
    %3392 = vst [vmem:[%s7 + $0xd0] sm:$0xff] %v3360
    %3393 = vst [vmem:[%s7 + $0xd8] sm:$0xff] %v3361
    %3394 = vst [vmem:[%s7 + $0xe0] sm:$0xff] %v3362
    %3395 = vst [vmem:[%s7 + $0xe8] sm:$0xff] %v3363
    %3396 = vst [vmem:[%s7 + $0xf0] sm:$0xff] %v3364
    %3397 = vst [vmem:[%s7 + $0xf8] sm:$0xff] %v3365
    // Predicated region
    $region38: #{_forward_impl.1} parent=1 // pred_check
      _
    $region39: #{_forward_impl.1} parent=1 // pred_check_branch
      %3399 = sbr.rel (0) target = $region41
    $region40: #{_forward_impl.1} parent=1 // pred_region
      _
    $region41: #{_forward_impl.1} parent=1 // pred_fallthru
      _
    // Predicated region
    $region42: #{_forward_impl.1} parent=1 // pred_check
      _
    $region43: #{_forward_impl.1} parent=1 // pred_check_branch
      %3401 = sbr.rel (0) target = $region45
    $region44: #{_forward_impl.1} parent=1 // pred_region
      _
    $region45: #{_forward_impl.1} parent=1 // pred_fallthru
      _
    %3402 = vsyncpa [#allocation3], 1
    %3403 = vsyncpa [#allocation5], 1

</llo_original>
